<compile_context>
chip_gen: v5e
topology: v5e:2x2
jax: 0.10.0
libtpu: 0.0.40
codegen_flags: <defaults>
</compile_context>

<pallas_src>
import jax
import jax.numpy as jnp
from jax.experimental import pallas as pl
from jax.experimental.pallas import tpu as pltpu

K_IN = 784     # flattened input width (28*28)
H = 1024       # hidden width
N_OUT = 10     # logits
N_PAD = 128    # fc3 output lane-padded to a full vreg width


def _mlp_kernel(x_ref, w1_ref, b1_ref, w2_ref, b2_ref, w3_ref, b3_ref, o_ref):
    # x arrives as f32 straight from the caller; cast on-chip so both MXU
    # operands are bf16 (accumulation stays f32 via preferred_element_type).
    x = x_ref[...].astype(jnp.bfloat16)
    # fc1 + ReLU
    h1 = jnp.dot(x, w1_ref[...], preferred_element_type=jnp.float32)
    h1 = jnp.maximum(h1 + b1_ref[...], 0.0).astype(jnp.bfloat16)
    # fc2 + ReLU
    h2 = jnp.dot(h1, w2_ref[...], preferred_element_type=jnp.float32)
    h2 = jnp.maximum(h2 + b2_ref[...], 0.0).astype(jnp.bfloat16)
    # fc3 (N lane-padded to 128; pad columns of w3/b3 are zero)
    out = jnp.dot(h2, w3_ref[...], preferred_element_type=jnp.float32)
    o_ref[...] = (out + b3_ref[...]).astype(o_ref.dtype)


def _round_up(n, m):
    return ((n + m - 1) // m) * m


def _tiling(B):
    """Pick (batch_tile, padded_batch)."""
    if B >= 1024:
        tb = 512                                    # halve step count / overhead
    elif B >= 16:
        # >= 2 grid steps so the "parallel" axis shards over v7x's 2 TCs.
        tb = min(256, _round_up(pl.cdiv(B, 2), 8))
    else:
        tb = _round_up(max(B, 1), 8)                # single small step
    return tb, _round_up(B, tb)


def prepare_params(w1, b1, w2, b2, w3, b3):
    """One-time weight prep: cast to bf16, lane-pad fc3 to 128 output columns.

    Hoisted out of the per-call forward so the pad/cast traffic is paid once.
    Weights are stored (in, out) so the kernel computes x @ W + b directly.
    """
    w1_p = w1.astype(jnp.bfloat16)                                   # (784, 1024)
    w2_p = w2.astype(jnp.bfloat16)                                   # (1024, 1024)
    w3_p = jnp.zeros((H, N_PAD), jnp.bfloat16).at[:, :N_OUT].set(
        w3.astype(jnp.bfloat16))                                     # (1024, 128)
    b1_p = b1.reshape(1, H).astype(jnp.float32)
    b2_p = b2.reshape(1, H).astype(jnp.float32)
    b3_p = jnp.zeros((1, N_PAD), jnp.float32).at[:, :N_OUT].set(
        b3.astype(jnp.float32))
    return w1_p, b1_p, w2_p, b2_p, w3_p, b3_p


@jax.jit
def simple_fcn_forward(x, w1_p, b1_p, w2_p, b2_p, w3_p, b3_p):
    """x: [B, 1, 28, 28] (anything flattening to 784). Returns [B, 10] f32.

    Weight/bias args must come from prepare_params().
    """
    B = x.shape[0]
    x2d = x.reshape(B, -1)                           # x.view(B, -1)
    assert x2d.shape[1] == K_IN

    TB, B_pad = _tiling(B)
    if B_pad != B:                                   # rare: only if B % TB != 0
        x2d = jnp.pad(x2d, ((0, B_pad - B), (0, 0)))
    grid = (B_pad // TB,)

    flops = 2 * B_pad * (K_IN * H + H * H + H * N_PAD)
    bytes_accessed = (
        B_pad * K_IN * 4                                     # x (f32)
        + (w1_p.size + w2_p.size + w3_p.size) * 2            # bf16 weights
        + (b1_p.size + b2_p.size + b3_p.size) * 4            # f32 biases
        + B_pad * N_PAD * 4)                                 # logits out

    out = pl.pallas_call(
        _mlp_kernel,
        out_shape=jax.ShapeDtypeStruct((B_pad, N_PAD), jnp.float32),
        grid=grid,
        in_specs=[
            # x: streamed per batch tile.  K=784 equals the full array dim, so
            # the (TB, 784) block is legal; Mosaic lane-pads the contraction.
            pl.BlockSpec((TB, K_IN), lambda i: (i, 0)),
            # Weights/biases: constant index_map -> fetched once, VMEM-resident.
            pl.BlockSpec((K_IN, H),  lambda i: (0, 0)),      # w1
            pl.BlockSpec((1, H),     lambda i: (0, 0)),      # b1
            pl.BlockSpec((H, H),     lambda i: (0, 0)),      # w2
            pl.BlockSpec((1, H),     lambda i: (0, 0)),      # b2
            pl.BlockSpec((H, N_PAD), lambda i: (0, 0)),      # w3 (lane-padded)
            pl.BlockSpec((1, N_PAD), lambda i: (0, 0)),      # b3 (lane-padded)
        ],
        out_specs=pl.BlockSpec((TB, N_PAD), lambda i: (i, 0)),
        compiler_params=pltpu.CompilerParams(
            dimension_semantics=("parallel",),
            vmem_limit_bytes=24 << 20),
        cost_estimate=pl.CostEstimate(
            flops=flops, transcendentals=0, bytes_accessed=bytes_accessed),
    )(x2d, w1_p, b1_p, w2_p, b2_p, w3_p, b3_p)

    # Strip batch padding and the lane padding of the logits.
    return out[:B, :N_OUT]


def init_params(key):
    """Deterministic init mirroring the PyTorch module's scheme.

    PyTorch stores Linear weights as (out, in); we store the transpose
    (in, out) so the kernel computes x @ W + b directly.
    kaiming_normal_(fan_in): std = gain / sqrt(fan_in); gain=sqrt(2) for relu,
    1 for linear.  Biases follow nn.Linear's default U(+/- 1/sqrt(fan_in)).
    """
    ks = jax.random.split(key, 6)

    def kaiming(k, fan_in, fan_out, gain):
        std = gain / jnp.sqrt(jnp.float32(fan_in))
        return jax.random.normal(k, (fan_in, fan_out), jnp.float32) * std

    def bias(k, fan_in, fan_out):
        bound = 1.0 / jnp.sqrt(jnp.float32(fan_in))
        return jax.random.uniform(k, (fan_out,), jnp.float32, -bound, bound)

    relu_gain = jnp.sqrt(2.0)
    w1 = kaiming(ks[0], 784, 1024, relu_gain)
    b1 = bias(ks[1], 784, 1024)
    w2 = kaiming(ks[2], 1024, 1024, relu_gain)
    b2 = bias(ks[3], 1024, 1024)
    w3 = kaiming(ks[4], 1024, 10, 1.0)
    b3 = bias(ks[5], 1024, 10)
    return w1, b1, w2, b2, w3, b3


if __name__ == "__main__":
    key = jax.random.PRNGKey(0)
    k_x, k_p = jax.random.split(key)

    # Small MNIST-like batch: [B=8, C=1, H=28, W=28] -> flattens to 784.
    x = jax.random.normal(k_x, (8, 1, 28, 28), jnp.float32)
    params = init_params(k_p)

    # One-time weight prep (hoisted out of the forward), then run the kernel.
    prepped = prepare_params(*params)
    out = simple_fcn_forward(x, *prepped)
    jax.block_until_ready(out)

    # Reference in plain JAX following the same bf16-weights / f32-accumulate
    # path (the kernel intentionally runs the matmuls in bf16; see notes).
    w1, b1, w2, b2, w3, b3 = params
    x2d = x.reshape(x.shape[0], -1)
    h = jnp.maximum(
        jnp.dot(x2d.astype(jnp.bfloat16), w1.astype(jnp.bfloat16),
                preferred_element_type=jnp.float32) + b1, 0.0)
    h = jnp.maximum(
        jnp.dot(h.astype(jnp.bfloat16), w2.astype(jnp.bfloat16),
                preferred_element_type=jnp.float32) + b2, 0.0)
    ref = jnp.dot(h.astype(jnp.bfloat16), w3.astype(jnp.bfloat16),
                  preferred_element_type=jnp.float32) + b3

    assert out.shape == (8, 10)
    assert jnp.allclose(out, ref, atol=2e-2, rtol=2e-2)

    print("KERNEL_OK")
</pallas_src>

<mosaic_0001>
module attributes {stable_mosaic.version = 11 : i64} {
  func.func @_mlp_kernel(%arg0: i32, %arg1: memref<8x784xf32, #tpu.memory_space<vmem>>, %arg2: memref<784x1024xbf16, #tpu.memory_space<vmem>>, %arg3: memref<1x1024xf32, #tpu.memory_space<vmem>>, %arg4: memref<1024x1024xbf16, #tpu.memory_space<vmem>>, %arg5: memref<1x1024xf32, #tpu.memory_space<vmem>>, %arg6: memref<1024x128xbf16, #tpu.memory_space<vmem>>, %arg7: memref<1x128xf32, #tpu.memory_space<vmem>>, %arg8: memref<8x128xf32, #tpu.memory_space<vmem>>) attributes {dimension_semantics = [#tpu.dimension_semantics<parallel>], iteration_bounds = array<i64: 1>, scalar_prefetch = 0 : i64, scratch_operands = 0 : i64, tpu.core_type = #tpu.core_type<tc>, window_params = [{transform_indices = @transform_0, window_bounds = array<i64: 8, 784>}, {pipeline_mode = #tpu.pipeline_mode<synchronous>, transform_indices = @transform_1, window_bounds = array<i64: 784, 1024>}, {pipeline_mode = #tpu.pipeline_mode<synchronous>, transform_indices = @transform_2, window_bounds = array<i64: 1, 1024>}, {pipeline_mode = #tpu.pipeline_mode<synchronous>, transform_indices = @transform_3, window_bounds = array<i64: 1024, 1024>}, {pipeline_mode = #tpu.pipeline_mode<synchronous>, transform_indices = @transform_4, window_bounds = array<i64: 1, 1024>}, {pipeline_mode = #tpu.pipeline_mode<synchronous>, transform_indices = @transform_5, window_bounds = array<i64: 1024, 128>}, {pipeline_mode = #tpu.pipeline_mode<synchronous>, transform_indices = @transform_6, window_bounds = array<i64: 1, 128>}, {transform_indices = @transform_7, window_bounds = array<i64: 8, 128>}]} {
    %c0 = arith.constant 0 : index
    %c0_0 = arith.constant 0 : index
    %0 = vector.load %arg1[%c0, %c0_0] : memref<8x784xf32, #tpu.memory_space<vmem>>, vector<8x784xf32>
    %1 = arith.truncf %0 : vector<8x784xf32> to vector<8x784xbf16>
    %c0_1 = arith.constant 0 : index
    %c0_2 = arith.constant 0 : index
    %2 = vector.load %arg2[%c0_1, %c0_2] : memref<784x1024xbf16, #tpu.memory_space<vmem>>, vector<784x1024xbf16>
    %cst = arith.constant dense<0.000000e+00> : vector<8x1024xf32>
    %3 = tpu.matmul %1, %2, %cst {dimension_numbers = #tpu.dot_dimension_numbers<[1], [0], [0], [1], [0, 0, 1, 1], [], []>} : vector<8x784xbf16>, vector<784x1024xbf16>, vector<8x1024xf32> -> vector<8x1024xf32>
    %c0_3 = arith.constant 0 : index
    %c0_4 = arith.constant 0 : index
    %4 = vector.load %arg3[%c0_3, %c0_4] : memref<1x1024xf32, #tpu.memory_space<vmem>>, vector<1x1024xf32>
    %5 = vector.broadcast %4 : vector<1x1024xf32> to vector<8x1024xf32>
    %6 = arith.addf %3, %5 : vector<8x1024xf32>
    %cst_5 = arith.constant 0.000000e+00 : f32
    %7 = vector.broadcast %cst_5 : f32 to vector<8x1024xf32>
    %8 = arith.maximumf %6, %7 : vector<8x1024xf32>
    %9 = arith.truncf %8 : vector<8x1024xf32> to vector<8x1024xbf16>
    %c0_6 = arith.constant 0 : index
    %c0_7 = arith.constant 0 : index
    %10 = vector.load %arg4[%c0_6, %c0_7] : memref<1024x1024xbf16, #tpu.memory_space<vmem>>, vector<1024x1024xbf16>
    %cst_8 = arith.constant dense<0.000000e+00> : vector<8x1024xf32>
    %11 = tpu.matmul %9, %10, %cst_8 {dimension_numbers = #tpu.dot_dimension_numbers<[1], [0], [0], [1], [0, 0, 1, 1], [], []>} : vector<8x1024xbf16>, vector<1024x1024xbf16>, vector<8x1024xf32> -> vector<8x1024xf32>
    %c0_9 = arith.constant 0 : index
    %c0_10 = arith.constant 0 : index
    %12 = vector.load %arg5[%c0_9, %c0_10] : memref<1x1024xf32, #tpu.memory_space<vmem>>, vector<1x1024xf32>
    %13 = vector.broadcast %12 : vector<1x1024xf32> to vector<8x1024xf32>
    %14 = arith.addf %11, %13 : vector<8x1024xf32>
    %cst_11 = arith.constant 0.000000e+00 : f32
    %15 = vector.broadcast %cst_11 : f32 to vector<8x1024xf32>
    %16 = arith.maximumf %14, %15 : vector<8x1024xf32>
    %17 = arith.truncf %16 : vector<8x1024xf32> to vector<8x1024xbf16>
    %c0_12 = arith.constant 0 : index
    %c0_13 = arith.constant 0 : index
    %18 = vector.load %arg6[%c0_12, %c0_13] : memref<1024x128xbf16, #tpu.memory_space<vmem>>, vector<1024x128xbf16>
    %cst_14 = arith.constant dense<0.000000e+00> : vector<8x128xf32>
    %19 = tpu.matmul %17, %18, %cst_14 {dimension_numbers = #tpu.dot_dimension_numbers<[1], [0], [0], [1], [0, 0, 1, 1], [], []>} : vector<8x1024xbf16>, vector<1024x128xbf16>, vector<8x128xf32> -> vector<8x128xf32>
    %c0_15 = arith.constant 0 : index
    %c0_16 = arith.constant 0 : index
    %20 = vector.load %arg7[%c0_15, %c0_16] : memref<1x128xf32, #tpu.memory_space<vmem>>, vector<1x128xf32>
    %21 = vector.broadcast %20 : vector<1x128xf32> to vector<8x128xf32>
    %22 = arith.addf %19, %21 : vector<8x128xf32>
    %c0_17 = arith.constant 0 : index
    %c0_18 = arith.constant 0 : index
    %23 = vector.load %arg8[%c0_17, %c0_18] : memref<8x128xf32, #tpu.memory_space<vmem>>, vector<8x128xf32>
    tpu.vector_store %arg8[%c0_17, %c0_18], %22 {strides = array<i32>} : memref<8x128xf32, #tpu.memory_space<vmem>>, vector<8x128xf32>,
    return
  }
  func.func @transform_0(%arg0: i32) -> (i32, i32) {
    %c0_i32 = arith.constant 0 : i32
    %c0_i32_0 = arith.constant 0 : i32
    return %arg0, %c0_i32 : i32, i32
  }
  func.func @transform_1(%arg0: i32) -> (i32, i32) {
    %c0_i32 = arith.constant 0 : i32
    %c0_i32_0 = arith.constant 0 : i32
    %c0_i32_1 = arith.constant 0 : i32
    return %c0_i32, %c0_i32_0 : i32, i32
  }
  func.func @transform_2(%arg0: i32) -> (i32, i32) {
    %c0_i32 = arith.constant 0 : i32
    %c0_i32_0 = arith.constant 0 : i32
    %c0_i32_1 = arith.constant 0 : i32
    return %c0_i32, %c0_i32_0 : i32, i32
  }
  func.func @transform_3(%arg0: i32) -> (i32, i32) {
    %c0_i32 = arith.constant 0 : i32
    %c0_i32_0 = arith.constant 0 : i32
    %c0_i32_1 = arith.constant 0 : i32
    return %c0_i32, %c0_i32_0 : i32, i32
  }
  func.func @transform_4(%arg0: i32) -> (i32, i32) {
    %c0_i32 = arith.constant 0 : i32
    %c0_i32_0 = arith.constant 0 : i32
    %c0_i32_1 = arith.constant 0 : i32
    return %c0_i32, %c0_i32_0 : i32, i32
  }
  func.func @transform_5(%arg0: i32) -> (i32, i32) {
    %c0_i32 = arith.constant 0 : i32
    %c0_i32_0 = arith.constant 0 : i32
    %c0_i32_1 = arith.constant 0 : i32
    return %c0_i32, %c0_i32_0 : i32, i32
  }
  func.func @transform_6(%arg0: i32) -> (i32, i32) {
    %c0_i32 = arith.constant 0 : i32
    %c0_i32_0 = arith.constant 0 : i32
    %c0_i32_1 = arith.constant 0 : i32
    return %c0_i32, %c0_i32_0 : i32, i32
  }
  func.func @transform_7(%arg0: i32) -> (i32, i32) {
    %c0_i32 = arith.constant 0 : i32
    %c0_i32_0 = arith.constant 0 : i32
    return %arg0, %c0_i32 : i32, i32
  }
}

</mosaic_0001>

<llo_original>
// kernel: simple_fcn_forward.1
$region0: #{simple_fcn_forward.1}
  #allocation0 [shape = 'u32[]', space=smem, size = 0x4, offset = 0x4, fixed_abs, tag = 'smem constant byte address 0x4 - core index']
  #allocation1 [shape = 'u32[72,128]{1,0:T(1,128)}', space=vmem, size = 0x9000, scoped, tag = 'internal scratch']
  %s0 = inlined_call_operand.vmem [shape: f32[8,784], index: 0, kind: input, shape index: {}]
  %s1 = inlined_call_operand.hbm [shape: bf16[784,1024], index: 1, kind: input, shape index: {}]
  %s2 = inlined_call_operand.hbm [shape: f32[1,1024], index: 2, kind: input, shape index: {}]
  %s3 = inlined_call_operand.hbm [shape: bf16[1024,1024], index: 3, kind: input, shape index: {}]
  %s4 = inlined_call_operand.hbm [shape: f32[1,1024], index: 4, kind: input, shape index: {}]
  %s5 = inlined_call_operand.hbm [shape: bf16[1024,128], index: 5, kind: input, shape index: {}]
  %s6 = inlined_call_operand.hbm [shape: f32[1,128], index: 6, kind: input, shape index: {}]
  %s7 = inlined_call_operand.hbm [shape: f32[8,128], index: 7, kind: output, shape index: {}]
  %s8 = sld [smem:[#allocation0]]
  $region62: #{simple_fcn_forward.1} parent=0
    _
  %s10 = ssub.s32 1, %s8
  %s11 = scalar_select 0, %s10, %s8
  $region1: #{simple_fcn_forward.1} parent=0
    #allocation2 [shape = 'u8[1605632]{0}', space=vmem, size = 0x188000, scoped, tag = 'input window, operand 1, single buffered']
    #allocation3 [shape = 's32[1]{0}', space=sflag, size = 0x4, scoped, tag = 'scoped memory for simple_fcn_forward.1']
    #allocation4 [shape = 's32[1]{0}', space=sflag, size = 0x4, scoped, tag = 'scoped memory for simple_fcn_forward.1']
    #allocation5 [shape = 'u8[4096]{0}', space=vmem, size = 0x1000, scoped, tag = 'input window, operand 2, single buffered']
    #allocation6 [shape = 's32[1]{0}', space=sflag, size = 0x4, scoped, tag = 'scoped memory for simple_fcn_forward.1']
    #allocation7 [shape = 'u8[2097152]{0}', space=vmem, size = 0x200000, scoped, tag = 'input window, operand 3, single buffered']
    #allocation8 [shape = 'u8[4096]{0}', space=vmem, size = 0x1000, scoped, tag = 'input window, operand 4, single buffered']
    #allocation9 [shape = 's32[1]{0}', space=sflag, size = 0x4, scoped, tag = 'scoped memory for simple_fcn_forward.1']
    #allocation10 [shape = 'u8[262144]{0}', space=vmem, size = 0x40000, scoped, tag = 'input window, operand 5, single buffered']
    #allocation11 [shape = 'u8[512]{0}', space=vmem, size = 0x400, scoped, tag = 'input window, operand 6, single buffered']
    #allocation12 [shape = 's32[1]{0}', space=sflag, size = 0x4, scoped, tag = 'scoped memory for simple_fcn_forward.1']
    #allocation13 [shape = 'u8[4096]{0}', space=vmem, size = 0x1000, scoped, tag = 'output window, operand 0, single buffered']
    %12 = vsyncpa [#allocation3], 0
    %13 = vsyncpa [#allocation6], 0
    %14 = vsyncpa [#allocation9], 0
    %15 = vsyncpa [#allocation12], 0
    %16 = vsyncpa [#allocation4], 0
    // Predicated region
    $region2: #{simple_fcn_forward.1} parent=1 // pred_check
      _
    $region3: #{simple_fcn_forward.1} parent=1 // pred_check_branch
      %18 = sbr.rel (0) target = $region5
    $region4: #{simple_fcn_forward.1} parent=1 // pred_region
      _
    $region5: #{simple_fcn_forward.1} parent=1 // pred_fallthru
      _
    // Predicated region
    $region6: #{simple_fcn_forward.1} parent=1 // pred_check
      _
    $region7: #{simple_fcn_forward.1} parent=1 // pred_check_branch
      %20 = sbr.rel (0) target = $region9
    $region8: #{simple_fcn_forward.1} parent=1 // pred_region
      %22 = vsyncadd [#allocation3], 0
      %s23 = sshll.u32 %s1, 4
      %s24 = int_to_ptr.hbm [resolvable:$true] %s23
      %s25 = sshll.u32 [#allocation2], 4
      %s26 = int_to_ptr.vmem [resolvable:$true] %s25
      %31 = dma.hbm_to_vmem [thread:$0]  %s24, 50176, %s26, [#allocation3], 512, 512, 32
    $region9: #{simple_fcn_forward.1} parent=1 // pred_fallthru
      _
    // Predicated region
    $region10: #{simple_fcn_forward.1} parent=1 // pred_check
      _
    $region11: #{simple_fcn_forward.1} parent=1 // pred_check_branch
      %33 = sbr.rel (0) target = $region13
    $region12: #{simple_fcn_forward.1} parent=1 // pred_region
      %35 = vsyncadd [#allocation6], 0
      %s37 = sshll.u32 %s2, 4
      %s38 = int_to_ptr.hbm [resolvable:$true] %s37
      %s39 = sshll.u32 [#allocation5], 4
      %s40 = int_to_ptr.vmem [resolvable:$true] %s39
      %42 = dma.hbm_to_vmem [thread:$0]  %s38, 128, %s40, [#allocation6]
    $region13: #{simple_fcn_forward.1} parent=1 // pred_fallthru
      _
    // Predicated region
    $region14: #{simple_fcn_forward.1} parent=1 // pred_check
      _
    $region15: #{simple_fcn_forward.1} parent=1 // pred_check_branch
      %44 = sbr.rel (0) target = $region17
    $region16: #{simple_fcn_forward.1} parent=1 // pred_region
      %46 = vsyncadd [#allocation6], 0
      %s47 = sshll.u32 %s3, 4
      %s48 = int_to_ptr.hbm [resolvable:$true] %s47
      %s49 = sshll.u32 [#allocation7], 4
      %s50 = int_to_ptr.vmem [resolvable:$true] %s49
      %55 = dma.hbm_to_vmem [thread:$0]  %s48, 65536, %s50, [#allocation6], 512, 512, 32
    $region17: #{simple_fcn_forward.1} parent=1 // pred_fallthru
      _
    // Predicated region
    $region18: #{simple_fcn_forward.1} parent=1 // pred_check
      _
    $region19: #{simple_fcn_forward.1} parent=1 // pred_check_branch
      %57 = sbr.rel (0) target = $region21
    $region20: #{simple_fcn_forward.1} parent=1 // pred_region
      %59 = vsyncadd [#allocation9], 0
      %s61 = sshll.u32 %s4, 4
      %s62 = int_to_ptr.hbm [resolvable:$true] %s61
      %s63 = sshll.u32 [#allocation8], 4
      %s64 = int_to_ptr.vmem [resolvable:$true] %s63
      %66 = dma.hbm_to_vmem [thread:$0]  %s62, 128, %s64, [#allocation9]
    $region21: #{simple_fcn_forward.1} parent=1 // pred_fallthru
      _
    // Predicated region
    $region22: #{simple_fcn_forward.1} parent=1 // pred_check
      _
    $region23: #{simple_fcn_forward.1} parent=1 // pred_check_branch
      %68 = sbr.rel (0) target = $region25
    $region24: #{simple_fcn_forward.1} parent=1 // pred_region
      %70 = vsyncadd [#allocation9], 0
      %s71 = sshll.u32 %s5, 4
      %s72 = int_to_ptr.hbm [resolvable:$true] %s71
      %s73 = sshll.u32 [#allocation10], 4
      %s74 = int_to_ptr.vmem [resolvable:$true] %s73
      %79 = dma.hbm_to_vmem [thread:$0]  %s72, 8192, %s74, [#allocation9], 64, 64, 4
    $region25: #{simple_fcn_forward.1} parent=1 // pred_fallthru
      _
    // Predicated region
    $region26: #{simple_fcn_forward.1} parent=1 // pred_check
      _
    $region27: #{simple_fcn_forward.1} parent=1 // pred_check_branch
      %81 = sbr.rel (0) target = $region29
    $region28: #{simple_fcn_forward.1} parent=1 // pred_region
      %83 = vsyncadd [#allocation12], 0
      %s85 = sshll.u32 %s6, 4
      %s86 = int_to_ptr.hbm [resolvable:$true] %s85
      %s87 = sshll.u32 [#allocation11], 4
      %s88 = int_to_ptr.vmem [resolvable:$true] %s87
      %90 = dma.hbm_to_vmem [thread:$0]  %s86, 16, %s88, [#allocation12]
    $region29: #{simple_fcn_forward.1} parent=1 // pred_fallthru
      _
    // Predicated region
    $region30: #{simple_fcn_forward.1} parent=1 // pred_check
      _
    $region31: #{simple_fcn_forward.1} parent=1 // pred_check_branch
      %92 = sbr.rel (0) target = $region33
    $region32: #{simple_fcn_forward.1} parent=1 // pred_region
      %94 = dma.done [#allocation3], 50176
    $region33: #{simple_fcn_forward.1} parent=1 // pred_fallthru
      _
    // Predicated region
    $region34: #{simple_fcn_forward.1} parent=1 // pred_check
      _
    $region35: #{simple_fcn_forward.1} parent=1 // pred_check_branch
      %96 = sbr.rel (0) target = $region37
    $region36: #{simple_fcn_forward.1} parent=1 // pred_region
      %98 = dma.done [#allocation6], 128
    $region37: #{simple_fcn_forward.1} parent=1 // pred_fallthru
      _
    // Predicated region
    $region38: #{simple_fcn_forward.1} parent=1 // pred_check
      _
    $region39: #{simple_fcn_forward.1} parent=1 // pred_check_branch
      %100 = sbr.rel (0) target = $region41
    $region40: #{simple_fcn_forward.1} parent=1 // pred_region
      %102 = dma.done [#allocation6], 65536
    $region41: #{simple_fcn_forward.1} parent=1 // pred_fallthru
      _
    // Predicated region
    $region42: #{simple_fcn_forward.1} parent=1 // pred_check
      _
    $region43: #{simple_fcn_forward.1} parent=1 // pred_check_branch
      %104 = sbr.rel (0) target = $region45
    $region44: #{simple_fcn_forward.1} parent=1 // pred_region
      %106 = dma.done [#allocation9], 128
    $region45: #{simple_fcn_forward.1} parent=1 // pred_fallthru
      _
    // Predicated region
    $region46: #{simple_fcn_forward.1} parent=1 // pred_check
      _
    $region47: #{simple_fcn_forward.1} parent=1 // pred_check_branch
      %108 = sbr.rel (0) target = $region49
    $region48: #{simple_fcn_forward.1} parent=1 // pred_region
      %110 = dma.done [#allocation9], 8192
    $region49: #{simple_fcn_forward.1} parent=1 // pred_fallthru
      _
    // Predicated region
    $region50: #{simple_fcn_forward.1} parent=1 // pred_check
      _
    $region51: #{simple_fcn_forward.1} parent=1 // pred_check_branch
      %112 = sbr.rel (0) target = $region53
    $region52: #{simple_fcn_forward.1} parent=1 // pred_region
      %114 = dma.done [#allocation12], 16
    $region53: #{simple_fcn_forward.1} parent=1 // pred_fallthru
      _
    %v116 = vld [vmem:[%s0] sm:$0xff]
    %v117 = vld [vmem:[%s0 + $0x8] sm:$0xff]
    %v118 = vld [vmem:[%s0 + $0x10] sm:$0xff]
    %v119 = vld [vmem:[%s0 + $0x18] sm:$0xff]
    %v120 = vld [vmem:[%s0 + $0x20] sm:$0xff]
    %v121 = vld [vmem:[%s0 + $0x28] sm:$0xff]
    %v122 = vld [vmem:[%s0 + $0x30] sm:$0xff]
    %v123 = vpack.c.bf16 %v116, %v116
    %v124 = vpack.c.bf16 %v117, %v117
    %v125 = vpack.c.bf16 %v118, %v118
    %v126 = vpack.c.bf16 %v119, %v119
    %v127 = vpack.c.bf16 %v120, %v120
    %v128 = vpack.c.bf16 %v121, %v121
    %v129 = vpack.c.bf16 %v122, %v122
    %v130 = vld [vmem:[#allocation2] sm:$0xff]
    %v131 = vld [vmem:[#allocation2 + $0x8] sm:$0xff]
    %v132 = vld [vmem:[#allocation2 + $0x10] sm:$0xff]
    %v133 = vld [vmem:[#allocation2 + $0x18] sm:$0xff]
    %v134 = vld [vmem:[#allocation2 + $0x20] sm:$0xff]
    %v135 = vld [vmem:[#allocation2 + $0x28] sm:$0xff]
    %v136 = vld [vmem:[#allocation2 + $0x30] sm:$0xff]
    %v137 = vld [vmem:[#allocation2 + $0x38] sm:$0xff]
    %v138 = vld [vmem:[#allocation2 + $0x40] sm:$0xff]
    %v139 = vld [vmem:[#allocation2 + $0x48] sm:$0xff]
    %v140 = vld [vmem:[#allocation2 + $0x50] sm:$0xff]
    %v141 = vld [vmem:[#allocation2 + $0x58] sm:$0xff]
    %v142 = vld [vmem:[#allocation2 + $0x60] sm:$0xff]
    %v143 = vld [vmem:[#allocation2 + $0x68] sm:$0xff]
    %v144 = vld [vmem:[#allocation2 + $0x70] sm:$0xff]
    %v145 = vld [vmem:[#allocation2 + $0x78] sm:$0xff]
    %v146 = vld [vmem:[#allocation2 + $0x80] sm:$0xff]
    %v147 = vld [vmem:[#allocation2 + $0x88] sm:$0xff]
    %v148 = vld [vmem:[#allocation2 + $0x90] sm:$0xff]
    %v149 = vld [vmem:[#allocation2 + $0x98] sm:$0xff]
    %v150 = vld [vmem:[#allocation2 + $0xa0] sm:$0xff]
    %v151 = vld [vmem:[#allocation2 + $0xa8] sm:$0xff]
    %v152 = vld [vmem:[#allocation2 + $0xb0] sm:$0xff]
    %v153 = vld [vmem:[#allocation2 + $0xb8] sm:$0xff]
    %v154 = vld [vmem:[#allocation2 + $0xc0] sm:$0xff]
    %v155 = vld [vmem:[#allocation2 + $0xc8] sm:$0xff]
    %v156 = vld [vmem:[#allocation2 + $0xd0] sm:$0xff]
    %v157 = vld [vmem:[#allocation2 + $0xd8] sm:$0xff]
    %v158 = vld [vmem:[#allocation2 + $0xe0] sm:$0xff]
    %v159 = vld [vmem:[#allocation2 + $0xe8] sm:$0xff]
    %v160 = vld [vmem:[#allocation2 + $0xf0] sm:$0xff]
    %v161 = vld [vmem:[#allocation2 + $0xf8] sm:$0xff]
    %v162 = vld [vmem:[#allocation2 + $0x100] sm:$0xff]
    %v163 = vld [vmem:[#allocation2 + $0x108] sm:$0xff]
    %v164 = vld [vmem:[#allocation2 + $0x110] sm:$0xff]
    %v165 = vld [vmem:[#allocation2 + $0x118] sm:$0xff]
    %v166 = vld [vmem:[#allocation2 + $0x120] sm:$0xff]
    %v167 = vld [vmem:[#allocation2 + $0x128] sm:$0xff]
    %v168 = vld [vmem:[#allocation2 + $0x130] sm:$0xff]
    %v169 = vld [vmem:[#allocation2 + $0x138] sm:$0xff]
    %v170 = vld [vmem:[#allocation2 + $0x140] sm:$0xff]
    %v171 = vld [vmem:[#allocation2 + $0x148] sm:$0xff]
    %v172 = vld [vmem:[#allocation2 + $0x150] sm:$0xff]
    %v173 = vld [vmem:[#allocation2 + $0x158] sm:$0xff]
    %v174 = vld [vmem:[#allocation2 + $0x160] sm:$0xff]
    %v175 = vld [vmem:[#allocation2 + $0x168] sm:$0xff]
    %v176 = vld [vmem:[#allocation2 + $0x170] sm:$0xff]
    %v177 = vld [vmem:[#allocation2 + $0x178] sm:$0xff]
    %v178 = vld [vmem:[#allocation2 + $0x180] sm:$0xff]
    %v179 = vld [vmem:[#allocation2 + $0x188] sm:$0xff]
    %v180 = vld [vmem:[#allocation2 + $0x190] sm:$0xff]
    %v181 = vld [vmem:[#allocation2 + $0x198] sm:$0xff]
    %v182 = vld [vmem:[#allocation2 + $0x1a0] sm:$0xff]
    %v183 = vld [vmem:[#allocation2 + $0x1a8] sm:$0xff]
    %v184 = vld [vmem:[#allocation2 + $0x1b0] sm:$0xff]
    %v185 = vld [vmem:[#allocation2 + $0x1b8] sm:$0xff]
    %v186 = vld [vmem:[#allocation2 + $0x1c0] sm:$0xff]
    %v187 = vld [vmem:[#allocation2 + $0x1c8] sm:$0xff]
    %v188 = vld [vmem:[#allocation2 + $0x1d0] sm:$0xff]
    %v189 = vld [vmem:[#allocation2 + $0x1d8] sm:$0xff]
    %v190 = vld [vmem:[#allocation2 + $0x1e0] sm:$0xff]
    %v191 = vld [vmem:[#allocation2 + $0x1e8] sm:$0xff]
    %v192 = vld [vmem:[#allocation2 + $0x1f0] sm:$0xff]
    %v193 = vld [vmem:[#allocation2 + $0x1f8] sm:$0xff]
    %v194 = vld [vmem:[#allocation2 + $0x200] sm:$0xff]
    %v195 = vld [vmem:[#allocation2 + $0x208] sm:$0xff]
    %v196 = vld [vmem:[#allocation2 + $0x210] sm:$0xff]
    %v197 = vld [vmem:[#allocation2 + $0x218] sm:$0xff]
    %v198 = vld [vmem:[#allocation2 + $0x220] sm:$0xff]
    %v199 = vld [vmem:[#allocation2 + $0x228] sm:$0xff]
    %v200 = vld [vmem:[#allocation2 + $0x230] sm:$0xff]
    %v201 = vld [vmem:[#allocation2 + $0x238] sm:$0xff]
    %v202 = vld [vmem:[#allocation2 + $0x240] sm:$0xff]
    %v203 = vld [vmem:[#allocation2 + $0x248] sm:$0xff]
    %v204 = vld [vmem:[#allocation2 + $0x250] sm:$0xff]
    %v205 = vld [vmem:[#allocation2 + $0x258] sm:$0xff]
    %v206 = vld [vmem:[#allocation2 + $0x260] sm:$0xff]
    %v207 = vld [vmem:[#allocation2 + $0x268] sm:$0xff]
    %v208 = vld [vmem:[#allocation2 + $0x270] sm:$0xff]
    %v209 = vld [vmem:[#allocation2 + $0x278] sm:$0xff]
    %v210 = vld [vmem:[#allocation2 + $0x280] sm:$0xff]
    %v211 = vld [vmem:[#allocation2 + $0x288] sm:$0xff]
    %v212 = vld [vmem:[#allocation2 + $0x290] sm:$0xff]
    %v213 = vld [vmem:[#allocation2 + $0x298] sm:$0xff]
    %v214 = vld [vmem:[#allocation2 + $0x2a0] sm:$0xff]
    %v215 = vld [vmem:[#allocation2 + $0x2a8] sm:$0xff]
    %v216 = vld [vmem:[#allocation2 + $0x2b0] sm:$0xff]
    %v217 = vld [vmem:[#allocation2 + $0x2b8] sm:$0xff]
    %v218 = vld [vmem:[#allocation2 + $0x2c0] sm:$0xff]
    %v219 = vld [vmem:[#allocation2 + $0x2c8] sm:$0xff]
    %v220 = vld [vmem:[#allocation2 + $0x2d0] sm:$0xff]
    %v221 = vld [vmem:[#allocation2 + $0x2d8] sm:$0xff]
    %v222 = vld [vmem:[#allocation2 + $0x2e0] sm:$0xff]
    %v223 = vld [vmem:[#allocation2 + $0x2e8] sm:$0xff]
    %v224 = vld [vmem:[#allocation2 + $0x2f0] sm:$0xff]
    %v225 = vld [vmem:[#allocation2 + $0x2f8] sm:$0xff]
    %v226 = vld [vmem:[#allocation2 + $0x300] sm:$0xff]
    %v227 = vld [vmem:[#allocation2 + $0x308] sm:$0xff]
    %v228 = vld [vmem:[#allocation2 + $0x310] sm:$0xff]
    %v229 = vld [vmem:[#allocation2 + $0x318] sm:$0xff]
    %v230 = vld [vmem:[#allocation2 + $0x320] sm:$0xff]
    %v231 = vld [vmem:[#allocation2 + $0x328] sm:$0xff]
    %v232 = vld [vmem:[#allocation2 + $0x330] sm:$0xff]
    %v233 = vld [vmem:[#allocation2 + $0x338] sm:$0xff]
    %v234 = vld [vmem:[#allocation2 + $0x340] sm:$0xff]
    %v235 = vld [vmem:[#allocation2 + $0x348] sm:$0xff]
    %v236 = vld [vmem:[#allocation2 + $0x350] sm:$0xff]
    %v237 = vld [vmem:[#allocation2 + $0x358] sm:$0xff]
    %v238 = vld [vmem:[#allocation2 + $0x360] sm:$0xff]
    %v239 = vld [vmem:[#allocation2 + $0x368] sm:$0xff]
    %v240 = vld [vmem:[#allocation2 + $0x370] sm:$0xff]
    %v241 = vld [vmem:[#allocation2 + $0x378] sm:$0xff]
    %v242 = vld [vmem:[#allocation2 + $0x380] sm:$0xff]
    %v243 = vld [vmem:[#allocation2 + $0x388] sm:$0xff]
    %v244 = vld [vmem:[#allocation2 + $0x390] sm:$0xff]
    %v245 = vld [vmem:[#allocation2 + $0x398] sm:$0xff]
    %v246 = vld [vmem:[#allocation2 + $0x3a0] sm:$0xff]
    %v247 = vld [vmem:[#allocation2 + $0x3a8] sm:$0xff]
    %v248 = vld [vmem:[#allocation2 + $0x3b0] sm:$0xff]
    %v249 = vld [vmem:[#allocation2 + $0x3b8] sm:$0xff]
    %v250 = vld [vmem:[#allocation2 + $0x3c0] sm:$0xff]
    %v251 = vld [vmem:[#allocation2 + $0x3c8] sm:$0xff]
    %v252 = vld [vmem:[#allocation2 + $0x3d0] sm:$0xff]
    %v253 = vld [vmem:[#allocation2 + $0x3d8] sm:$0xff]
    %v254 = vld [vmem:[#allocation2 + $0x3e0] sm:$0xff]
    %v255 = vld [vmem:[#allocation2 + $0x3e8] sm:$0xff]
    %v256 = vld [vmem:[#allocation2 + $0x3f0] sm:$0xff]
    %v257 = vld [vmem:[#allocation2 + $0x3f8] sm:$0xff]
    %v258 = vld [vmem:[#allocation2 + $0x400] sm:$0xff]
    %v259 = vld [vmem:[#allocation2 + $0x408] sm:$0xff]
    %v260 = vld [vmem:[#allocation2 + $0x410] sm:$0xff]
    %v261 = vld [vmem:[#allocation2 + $0x418] sm:$0xff]
    %v262 = vld [vmem:[#allocation2 + $0x420] sm:$0xff]
    %v263 = vld [vmem:[#allocation2 + $0x428] sm:$0xff]
    %v264 = vld [vmem:[#allocation2 + $0x430] sm:$0xff]
    %v265 = vld [vmem:[#allocation2 + $0x438] sm:$0xff]
    %v266 = vld [vmem:[#allocation2 + $0x440] sm:$0xff]
    %v267 = vld [vmem:[#allocation2 + $0x448] sm:$0xff]
    %v268 = vld [vmem:[#allocation2 + $0x450] sm:$0xff]
    %v269 = vld [vmem:[#allocation2 + $0x458] sm:$0xff]
    %v270 = vld [vmem:[#allocation2 + $0x460] sm:$0xff]
    %v271 = vld [vmem:[#allocation2 + $0x468] sm:$0xff]
    %v272 = vld [vmem:[#allocation2 + $0x470] sm:$0xff]
    %v273 = vld [vmem:[#allocation2 + $0x478] sm:$0xff]
    %v274 = vld [vmem:[#allocation2 + $0x480] sm:$0xff]
    %v275 = vld [vmem:[#allocation2 + $0x488] sm:$0xff]
    %v276 = vld [vmem:[#allocation2 + $0x490] sm:$0xff]
    %v277 = vld [vmem:[#allocation2 + $0x498] sm:$0xff]
    %v278 = vld [vmem:[#allocation2 + $0x4a0] sm:$0xff]
    %v279 = vld [vmem:[#allocation2 + $0x4a8] sm:$0xff]
    %v280 = vld [vmem:[#allocation2 + $0x4b0] sm:$0xff]
    %v281 = vld [vmem:[#allocation2 + $0x4b8] sm:$0xff]
    %v282 = vld [vmem:[#allocation2 + $0x4c0] sm:$0xff]
    %v283 = vld [vmem:[#allocation2 + $0x4c8] sm:$0xff]
    %v284 = vld [vmem:[#allocation2 + $0x4d0] sm:$0xff]
    %v285 = vld [vmem:[#allocation2 + $0x4d8] sm:$0xff]
    %v286 = vld [vmem:[#allocation2 + $0x4e0] sm:$0xff]
    %v287 = vld [vmem:[#allocation2 + $0x4e8] sm:$0xff]
    %v288 = vld [vmem:[#allocation2 + $0x4f0] sm:$0xff]
    %v289 = vld [vmem:[#allocation2 + $0x4f8] sm:$0xff]
    %v290 = vld [vmem:[#allocation2 + $0x500] sm:$0xff]
    %v291 = vld [vmem:[#allocation2 + $0x508] sm:$0xff]
    %v292 = vld [vmem:[#allocation2 + $0x510] sm:$0xff]
    %v293 = vld [vmem:[#allocation2 + $0x518] sm:$0xff]
    %v294 = vld [vmem:[#allocation2 + $0x520] sm:$0xff]
    %v295 = vld [vmem:[#allocation2 + $0x528] sm:$0xff]
    %v296 = vld [vmem:[#allocation2 + $0x530] sm:$0xff]
    %v297 = vld [vmem:[#allocation2 + $0x538] sm:$0xff]
    %v298 = vld [vmem:[#allocation2 + $0x540] sm:$0xff]
    %v299 = vld [vmem:[#allocation2 + $0x548] sm:$0xff]
    %v300 = vld [vmem:[#allocation2 + $0x550] sm:$0xff]
    %v301 = vld [vmem:[#allocation2 + $0x558] sm:$0xff]
    %v302 = vld [vmem:[#allocation2 + $0x560] sm:$0xff]
    %v303 = vld [vmem:[#allocation2 + $0x568] sm:$0xff]
    %v304 = vld [vmem:[#allocation2 + $0x570] sm:$0xff]
    %v305 = vld [vmem:[#allocation2 + $0x578] sm:$0xff]
    %v306 = vld [vmem:[#allocation2 + $0x580] sm:$0xff]
    %v307 = vld [vmem:[#allocation2 + $0x588] sm:$0xff]
    %v308 = vld [vmem:[#allocation2 + $0x590] sm:$0xff]
    %v309 = vld [vmem:[#allocation2 + $0x598] sm:$0xff]
    %v310 = vld [vmem:[#allocation2 + $0x5a0] sm:$0xff]
    %v311 = vld [vmem:[#allocation2 + $0x5a8] sm:$0xff]
    %v312 = vld [vmem:[#allocation2 + $0x5b0] sm:$0xff]
    %v313 = vld [vmem:[#allocation2 + $0x5b8] sm:$0xff]
    %v314 = vld [vmem:[#allocation2 + $0x5c0] sm:$0xff]
    %v315 = vld [vmem:[#allocation2 + $0x5c8] sm:$0xff]
    %v316 = vld [vmem:[#allocation2 + $0x5d0] sm:$0xff]
    %v317 = vld [vmem:[#allocation2 + $0x5d8] sm:$0xff]
    %v318 = vld [vmem:[#allocation2 + $0x5e0] sm:$0xff]
    %v319 = vld [vmem:[#allocation2 + $0x5e8] sm:$0xff]
    %v320 = vld [vmem:[#allocation2 + $0x5f0] sm:$0xff]
    %v321 = vld [vmem:[#allocation2 + $0x5f8] sm:$0xff]
    %v322 = vld [vmem:[#allocation2 + $0x600] sm:$0xff]
    %v323 = vld [vmem:[#allocation2 + $0x608] sm:$0xff]
    %v324 = vld [vmem:[#allocation2 + $0x610] sm:$0xff]
    %v325 = vld [vmem:[#allocation2 + $0x618] sm:$0xff]
    %v326 = vld [vmem:[#allocation2 + $0x620] sm:$0xff]
    %v327 = vld [vmem:[#allocation2 + $0x628] sm:$0xff]
    %v328 = vld [vmem:[#allocation2 + $0x630] sm:$0xff]
    %v329 = vld [vmem:[#allocation2 + $0x638] sm:$0xff]
    %v330 = vld [vmem:[#allocation2 + $0x640] sm:$0xff]
    %v331 = vld [vmem:[#allocation2 + $0x648] sm:$0xff]
    %v332 = vld [vmem:[#allocation2 + $0x650] sm:$0xff]
    %v333 = vld [vmem:[#allocation2 + $0x658] sm:$0xff]
    %v334 = vld [vmem:[#allocation2 + $0x660] sm:$0xff]
    %v335 = vld [vmem:[#allocation2 + $0x668] sm:$0xff]
    %v336 = vld [vmem:[#allocation2 + $0x670] sm:$0xff]
    %v337 = vld [vmem:[#allocation2 + $0x678] sm:$0xff]
    %v338 = vld [vmem:[#allocation2 + $0x680] sm:$0xff]
    %v339 = vld [vmem:[#allocation2 + $0x688] sm:$0xff]
    %v340 = vld [vmem:[#allocation2 + $0x690] sm:$0xff]
    %v341 = vld [vmem:[#allocation2 + $0x698] sm:$0xff]
    %v342 = vld [vmem:[#allocation2 + $0x6a0] sm:$0xff]
    %v343 = vld [vmem:[#allocation2 + $0x6a8] sm:$0xff]
    %v344 = vld [vmem:[#allocation2 + $0x6b0] sm:$0xff]
    %v345 = vld [vmem:[#allocation2 + $0x6b8] sm:$0xff]
    %v346 = vld [vmem:[#allocation2 + $0x6c0] sm:$0xff]
    %v347 = vld [vmem:[#allocation2 + $0x6c8] sm:$0xff]
    %v348 = vld [vmem:[#allocation2 + $0x6d0] sm:$0xff]
    %v349 = vld [vmem:[#allocation2 + $0x6d8] sm:$0xff]
    %v350 = vld [vmem:[#allocation2 + $0x6e0] sm:$0xff]
    %v351 = vld [vmem:[#allocation2 + $0x6e8] sm:$0xff]
    %v352 = vld [vmem:[#allocation2 + $0x6f0] sm:$0xff]
    %v353 = vld [vmem:[#allocation2 + $0x6f8] sm:$0xff]
    %v354 = vld [vmem:[#allocation2 + $0x700] sm:$0xff]
    %v355 = vld [vmem:[#allocation2 + $0x708] sm:$0xff]
    %v356 = vld [vmem:[#allocation2 + $0x710] sm:$0xff]
    %v357 = vld [vmem:[#allocation2 + $0x718] sm:$0xff]
    %v358 = vld [vmem:[#allocation2 + $0x720] sm:$0xff]
    %v359 = vld [vmem:[#allocation2 + $0x728] sm:$0xff]
    %v360 = vld [vmem:[#allocation2 + $0x730] sm:$0xff]
    %v361 = vld [vmem:[#allocation2 + $0x738] sm:$0xff]
    %v362 = vld [vmem:[#allocation2 + $0x740] sm:$0xff]
    %v363 = vld [vmem:[#allocation2 + $0x748] sm:$0xff]
    %v364 = vld [vmem:[#allocation2 + $0x750] sm:$0xff]
    %v365 = vld [vmem:[#allocation2 + $0x758] sm:$0xff]
    %v366 = vld [vmem:[#allocation2 + $0x760] sm:$0xff]
    %v367 = vld [vmem:[#allocation2 + $0x768] sm:$0xff]
    %v368 = vld [vmem:[#allocation2 + $0x770] sm:$0xff]
    %v369 = vld [vmem:[#allocation2 + $0x778] sm:$0xff]
    %v370 = vld [vmem:[#allocation2 + $0x780] sm:$0xff]
    %v371 = vld [vmem:[#allocation2 + $0x788] sm:$0xff]
    %v372 = vld [vmem:[#allocation2 + $0x790] sm:$0xff]
    %v373 = vld [vmem:[#allocation2 + $0x798] sm:$0xff]
    %v374 = vld [vmem:[#allocation2 + $0x7a0] sm:$0xff]
    %v375 = vld [vmem:[#allocation2 + $0x7a8] sm:$0xff]
    %v376 = vld [vmem:[#allocation2 + $0x7b0] sm:$0xff]
    %v377 = vld [vmem:[#allocation2 + $0x7b8] sm:$0xff]
    %v378 = vld [vmem:[#allocation2 + $0x7c0] sm:$0xff]
    %v379 = vld [vmem:[#allocation2 + $0x7c8] sm:$0xff]
    %v380 = vld [vmem:[#allocation2 + $0x7d0] sm:$0xff]
    %v381 = vld [vmem:[#allocation2 + $0x7d8] sm:$0xff]
    %v382 = vld [vmem:[#allocation2 + $0x7e0] sm:$0xff]
    %v383 = vld [vmem:[#allocation2 + $0x7e8] sm:$0xff]
    %v384 = vld [vmem:[#allocation2 + $0x7f0] sm:$0xff]
    %v385 = vld [vmem:[#allocation2 + $0x7f8] sm:$0xff]
    %v386 = vld [vmem:[#allocation2 + $0x800] sm:$0xff]
    %v387 = vld [vmem:[#allocation2 + $0x808] sm:$0xff]
    %v388 = vld [vmem:[#allocation2 + $0x810] sm:$0xff]
    %v389 = vld [vmem:[#allocation2 + $0x818] sm:$0xff]
    %v390 = vld [vmem:[#allocation2 + $0x820] sm:$0xff]
    %v391 = vld [vmem:[#allocation2 + $0x828] sm:$0xff]
    %v392 = vld [vmem:[#allocation2 + $0x830] sm:$0xff]
    %v393 = vld [vmem:[#allocation2 + $0x838] sm:$0xff]
    %v394 = vld [vmem:[#allocation2 + $0x840] sm:$0xff]
    %v395 = vld [vmem:[#allocation2 + $0x848] sm:$0xff]
    %v396 = vld [vmem:[#allocation2 + $0x850] sm:$0xff]
    %v397 = vld [vmem:[#allocation2 + $0x858] sm:$0xff]
    %v398 = vld [vmem:[#allocation2 + $0x860] sm:$0xff]
    %v399 = vld [vmem:[#allocation2 + $0x868] sm:$0xff]
    %v400 = vld [vmem:[#allocation2 + $0x870] sm:$0xff]
    %v401 = vld [vmem:[#allocation2 + $0x878] sm:$0xff]
    %v402 = vld [vmem:[#allocation2 + $0x880] sm:$0xff]
    %v403 = vld [vmem:[#allocation2 + $0x888] sm:$0xff]
    %v404 = vld [vmem:[#allocation2 + $0x890] sm:$0xff]
    %v405 = vld [vmem:[#allocation2 + $0x898] sm:$0xff]
    %v406 = vld [vmem:[#allocation2 + $0x8a0] sm:$0xff]
    %v407 = vld [vmem:[#allocation2 + $0x8a8] sm:$0xff]
    %v408 = vld [vmem:[#allocation2 + $0x8b0] sm:$0xff]
    %v409 = vld [vmem:[#allocation2 + $0x8b8] sm:$0xff]
    %v410 = vld [vmem:[#allocation2 + $0x8c0] sm:$0xff]
    %v411 = vld [vmem:[#allocation2 + $0x8c8] sm:$0xff]
    %v412 = vld [vmem:[#allocation2 + $0x8d0] sm:$0xff]
    %v413 = vld [vmem:[#allocation2 + $0x8d8] sm:$0xff]
    %v414 = vld [vmem:[#allocation2 + $0x8e0] sm:$0xff]
    %v415 = vld [vmem:[#allocation2 + $0x8e8] sm:$0xff]
    %v416 = vld [vmem:[#allocation2 + $0x8f0] sm:$0xff]
    %v417 = vld [vmem:[#allocation2 + $0x8f8] sm:$0xff]
    %v418 = vld [vmem:[#allocation2 + $0x900] sm:$0xff]
    %v419 = vld [vmem:[#allocation2 + $0x908] sm:$0xff]
    %v420 = vld [vmem:[#allocation2 + $0x910] sm:$0xff]
    %v421 = vld [vmem:[#allocation2 + $0x918] sm:$0xff]
    %v422 = vld [vmem:[#allocation2 + $0x920] sm:$0xff]
    %v423 = vld [vmem:[#allocation2 + $0x928] sm:$0xff]
    %v424 = vld [vmem:[#allocation2 + $0x930] sm:$0xff]
    %v425 = vld [vmem:[#allocation2 + $0x938] sm:$0xff]
    %v426 = vld [vmem:[#allocation2 + $0x940] sm:$0xff]
    %v427 = vld [vmem:[#allocation2 + $0x948] sm:$0xff]
    %v428 = vld [vmem:[#allocation2 + $0x950] sm:$0xff]
    %v429 = vld [vmem:[#allocation2 + $0x958] sm:$0xff]
    %v430 = vld [vmem:[#allocation2 + $0x960] sm:$0xff]
    %v431 = vld [vmem:[#allocation2 + $0x968] sm:$0xff]
    %v432 = vld [vmem:[#allocation2 + $0x970] sm:$0xff]
    %v433 = vld [vmem:[#allocation2 + $0x978] sm:$0xff]
    %v434 = vld [vmem:[#allocation2 + $0x980] sm:$0xff]
    %v435 = vld [vmem:[#allocation2 + $0x988] sm:$0xff]
    %v436 = vld [vmem:[#allocation2 + $0x990] sm:$0xff]
    %v437 = vld [vmem:[#allocation2 + $0x998] sm:$0xff]
    %v438 = vld [vmem:[#allocation2 + $0x9a0] sm:$0xff]
    %v439 = vld [vmem:[#allocation2 + $0x9a8] sm:$0xff]
    %v440 = vld [vmem:[#allocation2 + $0x9b0] sm:$0xff]
    %v441 = vld [vmem:[#allocation2 + $0x9b8] sm:$0xff]
    %v442 = vld [vmem:[#allocation2 + $0x9c0] sm:$0xff]
    %v443 = vld [vmem:[#allocation2 + $0x9c8] sm:$0xff]
    %v444 = vld [vmem:[#allocation2 + $0x9d0] sm:$0xff]
    %v445 = vld [vmem:[#allocation2 + $0x9d8] sm:$0xff]
    %v446 = vld [vmem:[#allocation2 + $0x9e0] sm:$0xff]
    %v447 = vld [vmem:[#allocation2 + $0x9e8] sm:$0xff]
    %v448 = vld [vmem:[#allocation2 + $0x9f0] sm:$0xff]
    %v449 = vld [vmem:[#allocation2 + $0x9f8] sm:$0xff]
    %v450 = vld [vmem:[#allocation2 + $0xa00] sm:$0xff]
    %v451 = vld [vmem:[#allocation2 + $0xa08] sm:$0xff]
    %v452 = vld [vmem:[#allocation2 + $0xa10] sm:$0xff]
    %v453 = vld [vmem:[#allocation2 + $0xa18] sm:$0xff]
    %v454 = vld [vmem:[#allocation2 + $0xa20] sm:$0xff]
    %v455 = vld [vmem:[#allocation2 + $0xa28] sm:$0xff]
    %v456 = vld [vmem:[#allocation2 + $0xa30] sm:$0xff]
    %v457 = vld [vmem:[#allocation2 + $0xa38] sm:$0xff]
    %v458 = vld [vmem:[#allocation2 + $0xa40] sm:$0xff]
    %v459 = vld [vmem:[#allocation2 + $0xa48] sm:$0xff]
    %v460 = vld [vmem:[#allocation2 + $0xa50] sm:$0xff]
    %v461 = vld [vmem:[#allocation2 + $0xa58] sm:$0xff]
    %v462 = vld [vmem:[#allocation2 + $0xa60] sm:$0xff]
    %v463 = vld [vmem:[#allocation2 + $0xa68] sm:$0xff]
    %v464 = vld [vmem:[#allocation2 + $0xa70] sm:$0xff]
    %v465 = vld [vmem:[#allocation2 + $0xa78] sm:$0xff]
    %v466 = vld [vmem:[#allocation2 + $0xa80] sm:$0xff]
    %v467 = vld [vmem:[#allocation2 + $0xa88] sm:$0xff]
    %v468 = vld [vmem:[#allocation2 + $0xa90] sm:$0xff]
    %v469 = vld [vmem:[#allocation2 + $0xa98] sm:$0xff]
    %v470 = vld [vmem:[#allocation2 + $0xaa0] sm:$0xff]
    %v471 = vld [vmem:[#allocation2 + $0xaa8] sm:$0xff]
    %v472 = vld [vmem:[#allocation2 + $0xab0] sm:$0xff]
    %v473 = vld [vmem:[#allocation2 + $0xab8] sm:$0xff]
    %v474 = vld [vmem:[#allocation2 + $0xac0] sm:$0xff]
    %v475 = vld [vmem:[#allocation2 + $0xac8] sm:$0xff]
    %v476 = vld [vmem:[#allocation2 + $0xad0] sm:$0xff]
    %v477 = vld [vmem:[#allocation2 + $0xad8] sm:$0xff]
    %v478 = vld [vmem:[#allocation2 + $0xae0] sm:$0xff]
    %v479 = vld [vmem:[#allocation2 + $0xae8] sm:$0xff]
    %v480 = vld [vmem:[#allocation2 + $0xaf0] sm:$0xff]
    %v481 = vld [vmem:[#allocation2 + $0xaf8] sm:$0xff]
    %v482 = vld [vmem:[#allocation2 + $0xb00] sm:$0xff]
    %v483 = vld [vmem:[#allocation2 + $0xb08] sm:$0xff]
    %v484 = vld [vmem:[#allocation2 + $0xb10] sm:$0xff]
    %v485 = vld [vmem:[#allocation2 + $0xb18] sm:$0xff]
    %v486 = vld [vmem:[#allocation2 + $0xb20] sm:$0xff]
    %v487 = vld [vmem:[#allocation2 + $0xb28] sm:$0xff]
    %v488 = vld [vmem:[#allocation2 + $0xb30] sm:$0xff]
    %v489 = vld [vmem:[#allocation2 + $0xb38] sm:$0xff]
    %v490 = vld [vmem:[#allocation2 + $0xb40] sm:$0xff]
    %v491 = vld [vmem:[#allocation2 + $0xb48] sm:$0xff]
    %v492 = vld [vmem:[#allocation2 + $0xb50] sm:$0xff]
    %v493 = vld [vmem:[#allocation2 + $0xb58] sm:$0xff]
    %v494 = vld [vmem:[#allocation2 + $0xb60] sm:$0xff]
    %v495 = vld [vmem:[#allocation2 + $0xb68] sm:$0xff]
    %v496 = vld [vmem:[#allocation2 + $0xb70] sm:$0xff]
    %v497 = vld [vmem:[#allocation2 + $0xb78] sm:$0xff]
    %v498 = vld [vmem:[#allocation2 + $0xb80] sm:$0xff]
    %v499 = vld [vmem:[#allocation2 + $0xb88] sm:$0xff]
    %v500 = vld [vmem:[#allocation2 + $0xb90] sm:$0xff]
    %v501 = vld [vmem:[#allocation2 + $0xb98] sm:$0xff]
    %v502 = vld [vmem:[#allocation2 + $0xba0] sm:$0xff]
    %v503 = vld [vmem:[#allocation2 + $0xba8] sm:$0xff]
    %v504 = vld [vmem:[#allocation2 + $0xbb0] sm:$0xff]
    %v505 = vld [vmem:[#allocation2 + $0xbb8] sm:$0xff]
    %v506 = vld [vmem:[#allocation2 + $0xbc0] sm:$0xff]
    %v507 = vld [vmem:[#allocation2 + $0xbc8] sm:$0xff]
    %v508 = vld [vmem:[#allocation2 + $0xbd0] sm:$0xff]
    %v509 = vld [vmem:[#allocation2 + $0xbd8] sm:$0xff]
    %v510 = vld [vmem:[#allocation2 + $0xbe0] sm:$0xff]
    %v511 = vld [vmem:[#allocation2 + $0xbe8] sm:$0xff]
    %v512 = vld [vmem:[#allocation2 + $0xbf0] sm:$0xff]
    %v513 = vld [vmem:[#allocation2 + $0xbf8] sm:$0xff]
    %v514 = vld [vmem:[#allocation2 + $0xc00] sm:$0xff]
    %v515 = vld [vmem:[#allocation2 + $0xc08] sm:$0xff]
    %v516 = vld [vmem:[#allocation2 + $0xc10] sm:$0xff]
    %v517 = vld [vmem:[#allocation2 + $0xc18] sm:$0xff]
    %v518 = vld [vmem:[#allocation2 + $0xc20] sm:$0xff]
    %v519 = vld [vmem:[#allocation2 + $0xc28] sm:$0xff]
    %v520 = vld [vmem:[#allocation2 + $0xc30] sm:$0xff]
    %v521 = vld [vmem:[#allocation2 + $0xc38] sm:$0xff]
    %v522 = vld [vmem:[#allocation5] sm:$0xff]
    %v524 = vperm.slane %v522, 0
    %v525 = vperm.slane %v522, 1
    %v526 = vperm.slane %v522, 2
    %v527 = vperm.slane %v522, 3
    %v528 = vperm.slane %v522, 4
    %v529 = vperm.slane %v522, 5
    %v530 = vperm.slane %v522, 6
    %v531 = vperm.slane %v522, 7
    %v932 = vunpack.c.l.b16 %v130
    %v933 = vunpack.c.h.b16 %v130
    %v934 = vunpack.c.l.b16 %v131
    %v935 = vunpack.c.h.b16 %v131
    %v936 = vunpack.c.l.b16 %v132
    %v937 = vunpack.c.h.b16 %v132
    %v938 = vunpack.c.l.b16 %v133
    %v939 = vunpack.c.h.b16 %v133
    %v940 = vunpack.c.l.b16 %v134
    %v941 = vunpack.c.h.b16 %v134
    %v942 = vunpack.c.l.b16 %v135
    %v943 = vunpack.c.h.b16 %v135
    %v944 = vunpack.c.l.b16 %v136
    %v945 = vunpack.c.h.b16 %v136
    %v946 = vunpack.c.l.b16 %v137
    %v947 = vunpack.c.h.b16 %v137
    %v948 = vunpack.c.l.b16 %v138
    %v949 = vunpack.c.h.b16 %v138
    %v950 = vunpack.c.l.b16 %v139
    %v951 = vunpack.c.h.b16 %v139
    %v952 = vunpack.c.l.b16 %v140
    %v953 = vunpack.c.h.b16 %v140
    %v954 = vunpack.c.l.b16 %v141
    %v955 = vunpack.c.h.b16 %v141
    %v956 = vunpack.c.l.b16 %v142
    %v957 = vunpack.c.h.b16 %v142
    %v958 = vunpack.c.l.b16 %v143
    %v959 = vunpack.c.h.b16 %v143
    %v960 = vunpack.c.l.b16 %v144
    %v961 = vunpack.c.h.b16 %v144
    %v962 = vunpack.c.l.b16 %v145
    %v963 = vunpack.c.h.b16 %v145
    %v964 = vunpack.c.l.b16 %v146
    %v965 = vunpack.c.h.b16 %v146
    %v966 = vunpack.c.l.b16 %v147
    %v967 = vunpack.c.h.b16 %v147
    %v968 = vunpack.c.l.b16 %v148
    %v969 = vunpack.c.h.b16 %v148
    %v970 = vunpack.c.l.b16 %v149
    %v971 = vunpack.c.h.b16 %v149
    %v972 = vunpack.c.l.b16 %v150
    %v973 = vunpack.c.h.b16 %v150
    %v974 = vunpack.c.l.b16 %v151
    %v975 = vunpack.c.h.b16 %v151
    %v976 = vunpack.c.l.b16 %v152
    %v977 = vunpack.c.h.b16 %v152
    %v978 = vunpack.c.l.b16 %v153
    %v979 = vunpack.c.h.b16 %v153
    %v980 = vunpack.c.l.b16 %v154
    %v981 = vunpack.c.h.b16 %v154
    %v982 = vunpack.c.l.b16 %v155
    %v983 = vunpack.c.h.b16 %v155
    %v984 = vunpack.c.l.b16 %v156
    %v985 = vunpack.c.h.b16 %v156
    %v986 = vunpack.c.l.b16 %v157
    %v987 = vunpack.c.h.b16 %v157
    %v988 = vunpack.c.l.b16 %v158
    %v989 = vunpack.c.h.b16 %v158
    %v990 = vunpack.c.l.b16 %v159
    %v991 = vunpack.c.h.b16 %v159
    %v992 = vunpack.c.l.b16 %v160
    %v993 = vunpack.c.h.b16 %v160
    %v994 = vunpack.c.l.b16 %v161
    %v995 = vunpack.c.h.b16 %v161
    %v996 = vunpack.c.l.b16 %v162
    %v997 = vunpack.c.h.b16 %v162
    %v998 = vunpack.c.l.b16 %v163
    %v999 = vunpack.c.h.b16 %v163
    %v1000 = vunpack.c.l.b16 %v164
    %v1001 = vunpack.c.h.b16 %v164
    %v1002 = vunpack.c.l.b16 %v165
    %v1003 = vunpack.c.h.b16 %v165
    %v1004 = vunpack.c.l.b16 %v166
    %v1005 = vunpack.c.h.b16 %v166
    %v1006 = vunpack.c.l.b16 %v167
    %v1007 = vunpack.c.h.b16 %v167
    %v1008 = vunpack.c.l.b16 %v168
    %v1009 = vunpack.c.h.b16 %v168
    %v1010 = vunpack.c.l.b16 %v169
    %v1011 = vunpack.c.h.b16 %v169
    %v1012 = vunpack.c.l.b16 %v170
    %v1013 = vunpack.c.h.b16 %v170
    %v1014 = vunpack.c.l.b16 %v171
    %v1015 = vunpack.c.h.b16 %v171
    %v1016 = vunpack.c.l.b16 %v172
    %v1017 = vunpack.c.h.b16 %v172
    %v1018 = vunpack.c.l.b16 %v173
    %v1019 = vunpack.c.h.b16 %v173
    %v1020 = vunpack.c.l.b16 %v174
    %v1021 = vunpack.c.h.b16 %v174
    %v1022 = vunpack.c.l.b16 %v175
    %v1023 = vunpack.c.h.b16 %v175
    %v1024 = vunpack.c.l.b16 %v176
    %v1025 = vunpack.c.h.b16 %v176
    %v1026 = vunpack.c.l.b16 %v177
    %v1027 = vunpack.c.h.b16 %v177
    %v1028 = vunpack.c.l.b16 %v178
    %v1029 = vunpack.c.h.b16 %v178
    %v1030 = vunpack.c.l.b16 %v179
    %v1031 = vunpack.c.h.b16 %v179
    %v1032 = vunpack.c.l.b16 %v180
    %v1033 = vunpack.c.h.b16 %v180
    %v1034 = vunpack.c.l.b16 %v181
    %v1035 = vunpack.c.h.b16 %v181
    %v1036 = vunpack.c.l.b16 %v182
    %v1037 = vunpack.c.h.b16 %v182
    %v1038 = vunpack.c.l.b16 %v183
    %v1039 = vunpack.c.h.b16 %v183
    %v1040 = vunpack.c.l.b16 %v184
    %v1041 = vunpack.c.h.b16 %v184
    %v1042 = vunpack.c.l.b16 %v185
    %v1043 = vunpack.c.h.b16 %v185
    %v1044 = vunpack.c.l.b16 %v186
    %v1045 = vunpack.c.h.b16 %v186
    %v1046 = vunpack.c.l.b16 %v187
    %v1047 = vunpack.c.h.b16 %v187
    %v1048 = vunpack.c.l.b16 %v188
    %v1049 = vunpack.c.h.b16 %v188
    %v1050 = vunpack.c.l.b16 %v189
    %v1051 = vunpack.c.h.b16 %v189
    %v1052 = vunpack.c.l.b16 %v190
    %v1053 = vunpack.c.h.b16 %v190
    %v1054 = vunpack.c.l.b16 %v191
    %v1055 = vunpack.c.h.b16 %v191
    %v1056 = vunpack.c.l.b16 %v192
    %v1057 = vunpack.c.h.b16 %v192
    %v1058 = vunpack.c.l.b16 %v193
    %v1059 = vunpack.c.h.b16 %v193
    %v1060 = vunpack.c.l.b16 %v194
    %v1061 = vunpack.c.h.b16 %v194
    %v1062 = vunpack.c.l.b16 %v195
    %v1063 = vunpack.c.h.b16 %v195
    %v1064 = vunpack.c.l.b16 %v196
    %v1065 = vunpack.c.h.b16 %v196
    %v1066 = vunpack.c.l.b16 %v197
    %v1067 = vunpack.c.h.b16 %v197
    %v1068 = vunpack.c.l.b16 %v198
    %v1069 = vunpack.c.h.b16 %v198
    %v1070 = vunpack.c.l.b16 %v199
    %v1071 = vunpack.c.h.b16 %v199
    %v1072 = vunpack.c.l.b16 %v200
    %v1073 = vunpack.c.h.b16 %v200
    %v1074 = vunpack.c.l.b16 %v201
    %v1075 = vunpack.c.h.b16 %v201
    %v1076 = vunpack.c.l.b16 %v202
    %v1077 = vunpack.c.h.b16 %v202
    %v1078 = vunpack.c.l.b16 %v203
    %v1079 = vunpack.c.h.b16 %v203
    %v1080 = vunpack.c.l.b16 %v204
    %v1081 = vunpack.c.h.b16 %v204
    %v1082 = vunpack.c.l.b16 %v205
    %v1083 = vunpack.c.h.b16 %v205
    %v1084 = vunpack.c.l.b16 %v206
    %v1085 = vunpack.c.h.b16 %v206
    %v1086 = vunpack.c.l.b16 %v207
    %v1087 = vunpack.c.h.b16 %v207
    %v1088 = vunpack.c.l.b16 %v208
    %v1089 = vunpack.c.h.b16 %v208
    %v1090 = vunpack.c.l.b16 %v209
    %v1091 = vunpack.c.h.b16 %v209
    %v1092 = vunpack.c.l.b16 %v210
    %v1093 = vunpack.c.h.b16 %v210
    %v1094 = vunpack.c.l.b16 %v211
    %v1095 = vunpack.c.h.b16 %v211
    %v1096 = vunpack.c.l.b16 %v212
    %v1097 = vunpack.c.h.b16 %v212
    %v1098 = vunpack.c.l.b16 %v213
    %v1099 = vunpack.c.h.b16 %v213
    %v1100 = vunpack.c.l.b16 %v214
    %v1101 = vunpack.c.h.b16 %v214
    %v1102 = vunpack.c.l.b16 %v215
    %v1103 = vunpack.c.h.b16 %v215
    %v1104 = vunpack.c.l.b16 %v216
    %v1105 = vunpack.c.h.b16 %v216
    %v1106 = vunpack.c.l.b16 %v217
    %v1107 = vunpack.c.h.b16 %v217
    %v1108 = vunpack.c.l.b16 %v218
    %v1109 = vunpack.c.h.b16 %v218
    %v1110 = vunpack.c.l.b16 %v219
    %v1111 = vunpack.c.h.b16 %v219
    %v1112 = vunpack.c.l.b16 %v220
    %v1113 = vunpack.c.h.b16 %v220
    %v1114 = vunpack.c.l.b16 %v221
    %v1115 = vunpack.c.h.b16 %v221
    %v1116 = vunpack.c.l.b16 %v222
    %v1117 = vunpack.c.h.b16 %v222
    %v1118 = vunpack.c.l.b16 %v223
    %v1119 = vunpack.c.h.b16 %v223
    %v1120 = vunpack.c.l.b16 %v224
    %v1121 = vunpack.c.h.b16 %v224
    %v1122 = vunpack.c.l.b16 %v225
    %v1123 = vunpack.c.h.b16 %v225
    %v1124 = vunpack.c.l.b16 %v226
    %v1125 = vunpack.c.h.b16 %v226
    %v1126 = vunpack.c.l.b16 %v227
    %v1127 = vunpack.c.h.b16 %v227
    %v1128 = vunpack.c.l.b16 %v228
    %v1129 = vunpack.c.h.b16 %v228
    %v1130 = vunpack.c.l.b16 %v229
    %v1131 = vunpack.c.h.b16 %v229
    %v1132 = vunpack.c.l.b16 %v230
    %v1133 = vunpack.c.h.b16 %v230
    %v1134 = vunpack.c.l.b16 %v231
    %v1135 = vunpack.c.h.b16 %v231
    %v1136 = vunpack.c.l.b16 %v232
    %v1137 = vunpack.c.h.b16 %v232
    %v1138 = vunpack.c.l.b16 %v233
    %v1139 = vunpack.c.h.b16 %v233
    %v1140 = vunpack.c.l.b16 %v234
    %v1141 = vunpack.c.h.b16 %v234
    %v1142 = vunpack.c.l.b16 %v235
    %v1143 = vunpack.c.h.b16 %v235
    %v1144 = vunpack.c.l.b16 %v236
    %v1145 = vunpack.c.h.b16 %v236
    %v1146 = vunpack.c.l.b16 %v237
    %v1147 = vunpack.c.h.b16 %v237
    %v1148 = vunpack.c.l.b16 %v238
    %v1149 = vunpack.c.h.b16 %v238
    %v1150 = vunpack.c.l.b16 %v239
    %v1151 = vunpack.c.h.b16 %v239
    %v1152 = vunpack.c.l.b16 %v240
    %v1153 = vunpack.c.h.b16 %v240
    %v1154 = vunpack.c.l.b16 %v241
    %v1155 = vunpack.c.h.b16 %v241
    %v1156 = vunpack.c.l.b16 %v242
    %v1157 = vunpack.c.h.b16 %v242
    %v1158 = vunpack.c.l.b16 %v243
    %v1159 = vunpack.c.h.b16 %v243
    %v1160 = vunpack.c.l.b16 %v244
    %v1161 = vunpack.c.h.b16 %v244
    %v1162 = vunpack.c.l.b16 %v245
    %v1163 = vunpack.c.h.b16 %v245
    %v1164 = vunpack.c.l.b16 %v246
    %v1165 = vunpack.c.h.b16 %v246
    %v1166 = vunpack.c.l.b16 %v247
    %v1167 = vunpack.c.h.b16 %v247
    %v1168 = vunpack.c.l.b16 %v248
    %v1169 = vunpack.c.h.b16 %v248
    %v1170 = vunpack.c.l.b16 %v249
    %v1171 = vunpack.c.h.b16 %v249
    %v1172 = vunpack.c.l.b16 %v250
    %v1173 = vunpack.c.h.b16 %v250
    %v1174 = vunpack.c.l.b16 %v251
    %v1175 = vunpack.c.h.b16 %v251
    %v1176 = vunpack.c.l.b16 %v252
    %v1177 = vunpack.c.h.b16 %v252
    %v1178 = vunpack.c.l.b16 %v253
    %v1179 = vunpack.c.h.b16 %v253
    %v1180 = vunpack.c.l.b16 %v254
    %v1181 = vunpack.c.h.b16 %v254
    %v1182 = vunpack.c.l.b16 %v255
    %v1183 = vunpack.c.h.b16 %v255
    %v1184 = vunpack.c.l.b16 %v256
    %v1185 = vunpack.c.h.b16 %v256
    %v1186 = vunpack.c.l.b16 %v257
    %v1187 = vunpack.c.h.b16 %v257
    %v1188 = vunpack.c.l.b16 %v258
    %v1189 = vunpack.c.h.b16 %v258
    %v1190 = vunpack.c.l.b16 %v259
    %v1191 = vunpack.c.h.b16 %v259
    %v1192 = vunpack.c.l.b16 %v260
    %v1193 = vunpack.c.h.b16 %v260
    %v1194 = vunpack.c.l.b16 %v261
    %v1195 = vunpack.c.h.b16 %v261
    %v1196 = vunpack.c.l.b16 %v262
    %v1197 = vunpack.c.h.b16 %v262
    %v1198 = vunpack.c.l.b16 %v263
    %v1199 = vunpack.c.h.b16 %v263
    %v1200 = vunpack.c.l.b16 %v264
    %v1201 = vunpack.c.h.b16 %v264
    %v1202 = vunpack.c.l.b16 %v265
    %v1203 = vunpack.c.h.b16 %v265
    %v1204 = vunpack.c.l.b16 %v266
    %v1205 = vunpack.c.h.b16 %v266
    %v1206 = vunpack.c.l.b16 %v267
    %v1207 = vunpack.c.h.b16 %v267
    %v1208 = vunpack.c.l.b16 %v268
    %v1209 = vunpack.c.h.b16 %v268
    %v1210 = vunpack.c.l.b16 %v269
    %v1211 = vunpack.c.h.b16 %v269
    %v1212 = vunpack.c.l.b16 %v270
    %v1213 = vunpack.c.h.b16 %v270
    %v1214 = vunpack.c.l.b16 %v271
    %v1215 = vunpack.c.h.b16 %v271
    %v1216 = vunpack.c.l.b16 %v272
    %v1217 = vunpack.c.h.b16 %v272
    %v1218 = vunpack.c.l.b16 %v273
    %v1219 = vunpack.c.h.b16 %v273
    %v1220 = vunpack.c.l.b16 %v274
    %v1221 = vunpack.c.h.b16 %v274
    %v1222 = vunpack.c.l.b16 %v275
    %v1223 = vunpack.c.h.b16 %v275
    %v1224 = vunpack.c.l.b16 %v276
    %v1225 = vunpack.c.h.b16 %v276
    %v1226 = vunpack.c.l.b16 %v277
    %v1227 = vunpack.c.h.b16 %v277
    %v1228 = vunpack.c.l.b16 %v278
    %v1229 = vunpack.c.h.b16 %v278
    %v1230 = vunpack.c.l.b16 %v279
    %v1231 = vunpack.c.h.b16 %v279
    %v1232 = vunpack.c.l.b16 %v280
    %v1233 = vunpack.c.h.b16 %v280
    %v1234 = vunpack.c.l.b16 %v281
    %v1235 = vunpack.c.h.b16 %v281
    %v1236 = vunpack.c.l.b16 %v282
    %v1237 = vunpack.c.h.b16 %v282
    %v1238 = vunpack.c.l.b16 %v283
    %v1239 = vunpack.c.h.b16 %v283
    %v1240 = vunpack.c.l.b16 %v284
    %v1241 = vunpack.c.h.b16 %v284
    %v1242 = vunpack.c.l.b16 %v285
    %v1243 = vunpack.c.h.b16 %v285
    %v1244 = vunpack.c.l.b16 %v286
    %v1245 = vunpack.c.h.b16 %v286
    %v1246 = vunpack.c.l.b16 %v287
    %v1247 = vunpack.c.h.b16 %v287
    %v1248 = vunpack.c.l.b16 %v288
    %v1249 = vunpack.c.h.b16 %v288
    %v1250 = vunpack.c.l.b16 %v289
    %v1251 = vunpack.c.h.b16 %v289
    %v1252 = vunpack.c.l.b16 %v290
    %v1253 = vunpack.c.h.b16 %v290
    %v1254 = vunpack.c.l.b16 %v291
    %v1255 = vunpack.c.h.b16 %v291
    %v1256 = vunpack.c.l.b16 %v292
    %v1257 = vunpack.c.h.b16 %v292
    %v1258 = vunpack.c.l.b16 %v293
    %v1259 = vunpack.c.h.b16 %v293
    %v1260 = vunpack.c.l.b16 %v294
    %v1261 = vunpack.c.h.b16 %v294
    %v1262 = vunpack.c.l.b16 %v295
    %v1263 = vunpack.c.h.b16 %v295
    %v1264 = vunpack.c.l.b16 %v296
    %v1265 = vunpack.c.h.b16 %v296
    %v1266 = vunpack.c.l.b16 %v297
    %v1267 = vunpack.c.h.b16 %v297
    %v1268 = vunpack.c.l.b16 %v298
    %v1269 = vunpack.c.h.b16 %v298
    %v1270 = vunpack.c.l.b16 %v299
    %v1271 = vunpack.c.h.b16 %v299
    %v1272 = vunpack.c.l.b16 %v300
    %v1273 = vunpack.c.h.b16 %v300
    %v1274 = vunpack.c.l.b16 %v301
    %v1275 = vunpack.c.h.b16 %v301
    %v1276 = vunpack.c.l.b16 %v302
    %v1277 = vunpack.c.h.b16 %v302
    %v1278 = vunpack.c.l.b16 %v303
    %v1279 = vunpack.c.h.b16 %v303
    %v1280 = vunpack.c.l.b16 %v304
    %v1281 = vunpack.c.h.b16 %v304
    %v1282 = vunpack.c.l.b16 %v305
    %v1283 = vunpack.c.h.b16 %v305
    %v1284 = vunpack.c.l.b16 %v306
    %v1285 = vunpack.c.h.b16 %v306
    %v1286 = vunpack.c.l.b16 %v307
    %v1287 = vunpack.c.h.b16 %v307
    %v1288 = vunpack.c.l.b16 %v308
    %v1289 = vunpack.c.h.b16 %v308
    %v1290 = vunpack.c.l.b16 %v309
    %v1291 = vunpack.c.h.b16 %v309
    %v1292 = vunpack.c.l.b16 %v310
    %v1293 = vunpack.c.h.b16 %v310
    %v1294 = vunpack.c.l.b16 %v311
    %v1295 = vunpack.c.h.b16 %v311
    %v1296 = vunpack.c.l.b16 %v312
    %v1297 = vunpack.c.h.b16 %v312
    %v1298 = vunpack.c.l.b16 %v313
    %v1299 = vunpack.c.h.b16 %v313
    %v1300 = vunpack.c.l.b16 %v314
    %v1301 = vunpack.c.h.b16 %v314
    %v1302 = vunpack.c.l.b16 %v315
    %v1303 = vunpack.c.h.b16 %v315
    %v1304 = vunpack.c.l.b16 %v316
    %v1305 = vunpack.c.h.b16 %v316
    %v1306 = vunpack.c.l.b16 %v317
    %v1307 = vunpack.c.h.b16 %v317
    %v1308 = vunpack.c.l.b16 %v318
    %v1309 = vunpack.c.h.b16 %v318
    %v1310 = vunpack.c.l.b16 %v319
    %v1311 = vunpack.c.h.b16 %v319
    %v1312 = vunpack.c.l.b16 %v320
    %v1313 = vunpack.c.h.b16 %v320
    %v1314 = vunpack.c.l.b16 %v321
    %v1315 = vunpack.c.h.b16 %v321
    %v1316 = vunpack.c.l.b16 %v322
    %v1317 = vunpack.c.h.b16 %v322
    %v1318 = vunpack.c.l.b16 %v323
    %v1319 = vunpack.c.h.b16 %v323
    %v1320 = vunpack.c.l.b16 %v324
    %v1321 = vunpack.c.h.b16 %v324
    %v1322 = vunpack.c.l.b16 %v325
    %v1323 = vunpack.c.h.b16 %v325
    %v1324 = vunpack.c.l.b16 %v326
    %v1325 = vunpack.c.h.b16 %v326
    %v1326 = vunpack.c.l.b16 %v327
    %v1327 = vunpack.c.h.b16 %v327
    %v1328 = vunpack.c.l.b16 %v328
    %v1329 = vunpack.c.h.b16 %v328
    %v1330 = vunpack.c.l.b16 %v329
    %v1331 = vunpack.c.h.b16 %v329
    %v1332 = vunpack.c.l.b16 %v330
    %v1333 = vunpack.c.h.b16 %v330
    %v1334 = vunpack.c.l.b16 %v331
    %v1335 = vunpack.c.h.b16 %v331
    %v1336 = vunpack.c.l.b16 %v332
    %v1337 = vunpack.c.h.b16 %v332
    %v1338 = vunpack.c.l.b16 %v333
    %v1339 = vunpack.c.h.b16 %v333
    %v1340 = vunpack.c.l.b16 %v334
    %v1341 = vunpack.c.h.b16 %v334
    %v1342 = vunpack.c.l.b16 %v335
    %v1343 = vunpack.c.h.b16 %v335
    %v1344 = vunpack.c.l.b16 %v336
    %v1345 = vunpack.c.h.b16 %v336
    %v1346 = vunpack.c.l.b16 %v337
    %v1347 = vunpack.c.h.b16 %v337
    %v1348 = vunpack.c.l.b16 %v338
    %v1349 = vunpack.c.h.b16 %v338
    %v1350 = vunpack.c.l.b16 %v339
    %v1351 = vunpack.c.h.b16 %v339
    %v1352 = vunpack.c.l.b16 %v340
    %v1353 = vunpack.c.h.b16 %v340
    %v1354 = vunpack.c.l.b16 %v341
    %v1355 = vunpack.c.h.b16 %v341
    %v1356 = vunpack.c.l.b16 %v342
    %v1357 = vunpack.c.h.b16 %v342
    %v1358 = vunpack.c.l.b16 %v343
    %v1359 = vunpack.c.h.b16 %v343
    %v1360 = vunpack.c.l.b16 %v344
    %v1361 = vunpack.c.h.b16 %v344
    %v1362 = vunpack.c.l.b16 %v345
    %v1363 = vunpack.c.h.b16 %v345
    %v1364 = vunpack.c.l.b16 %v346
    %v1365 = vunpack.c.h.b16 %v346
    %v1366 = vunpack.c.l.b16 %v347
    %v1367 = vunpack.c.h.b16 %v347
    %v1368 = vunpack.c.l.b16 %v348
    %v1369 = vunpack.c.h.b16 %v348
    %v1370 = vunpack.c.l.b16 %v349
    %v1371 = vunpack.c.h.b16 %v349
    %v1372 = vunpack.c.l.b16 %v350
    %v1373 = vunpack.c.h.b16 %v350
    %v1374 = vunpack.c.l.b16 %v351
    %v1375 = vunpack.c.h.b16 %v351
    %v1376 = vunpack.c.l.b16 %v352
    %v1377 = vunpack.c.h.b16 %v352
    %v1378 = vunpack.c.l.b16 %v353
    %v1379 = vunpack.c.h.b16 %v353
    %v1380 = vunpack.c.l.b16 %v354
    %v1381 = vunpack.c.h.b16 %v354
    %v1382 = vunpack.c.l.b16 %v355
    %v1383 = vunpack.c.h.b16 %v355
    %v1384 = vunpack.c.l.b16 %v356
    %v1385 = vunpack.c.h.b16 %v356
    %v1386 = vunpack.c.l.b16 %v357
    %v1387 = vunpack.c.h.b16 %v357
    %v1388 = vunpack.c.l.b16 %v358
    %v1389 = vunpack.c.h.b16 %v358
    %v1390 = vunpack.c.l.b16 %v359
    %v1391 = vunpack.c.h.b16 %v359
    %v1392 = vunpack.c.l.b16 %v360
    %v1393 = vunpack.c.h.b16 %v360
    %v1394 = vunpack.c.l.b16 %v361
    %v1395 = vunpack.c.h.b16 %v361
    %v1396 = vunpack.c.l.b16 %v362
    %v1397 = vunpack.c.h.b16 %v362
    %v1398 = vunpack.c.l.b16 %v363
    %v1399 = vunpack.c.h.b16 %v363
    %v1400 = vunpack.c.l.b16 %v364
    %v1401 = vunpack.c.h.b16 %v364
    %v1402 = vunpack.c.l.b16 %v365
    %v1403 = vunpack.c.h.b16 %v365
    %v1404 = vunpack.c.l.b16 %v366
    %v1405 = vunpack.c.h.b16 %v366
    %v1406 = vunpack.c.l.b16 %v367
    %v1407 = vunpack.c.h.b16 %v367
    %v1408 = vunpack.c.l.b16 %v368
    %v1409 = vunpack.c.h.b16 %v368
    %v1410 = vunpack.c.l.b16 %v369
    %v1411 = vunpack.c.h.b16 %v369
    %v1412 = vunpack.c.l.b16 %v370
    %v1413 = vunpack.c.h.b16 %v370
    %v1414 = vunpack.c.l.b16 %v371
    %v1415 = vunpack.c.h.b16 %v371
    %v1416 = vunpack.c.l.b16 %v372
    %v1417 = vunpack.c.h.b16 %v372
    %v1418 = vunpack.c.l.b16 %v373
    %v1419 = vunpack.c.h.b16 %v373
    %v1420 = vunpack.c.l.b16 %v374
    %v1421 = vunpack.c.h.b16 %v374
    %v1422 = vunpack.c.l.b16 %v375
    %v1423 = vunpack.c.h.b16 %v375
    %v1424 = vunpack.c.l.b16 %v376
    %v1425 = vunpack.c.h.b16 %v376
    %v1426 = vunpack.c.l.b16 %v377
    %v1427 = vunpack.c.h.b16 %v377
    %v1428 = vunpack.c.l.b16 %v378
    %v1429 = vunpack.c.h.b16 %v378
    %v1430 = vunpack.c.l.b16 %v379
    %v1431 = vunpack.c.h.b16 %v379
    %v1432 = vunpack.c.l.b16 %v380
    %v1433 = vunpack.c.h.b16 %v380
    %v1434 = vunpack.c.l.b16 %v381
    %v1435 = vunpack.c.h.b16 %v381
    %v1436 = vunpack.c.l.b16 %v382
    %v1437 = vunpack.c.h.b16 %v382
    %v1438 = vunpack.c.l.b16 %v383
    %v1439 = vunpack.c.h.b16 %v383
    %v1440 = vunpack.c.l.b16 %v384
    %v1441 = vunpack.c.h.b16 %v384
    %v1442 = vunpack.c.l.b16 %v385
    %v1443 = vunpack.c.h.b16 %v385
    %v1444 = vunpack.c.l.b16 %v386
    %v1445 = vunpack.c.h.b16 %v386
    %v1446 = vunpack.c.l.b16 %v387
    %v1447 = vunpack.c.h.b16 %v387
    %v1448 = vunpack.c.l.b16 %v388
    %v1449 = vunpack.c.h.b16 %v388
    %v1450 = vunpack.c.l.b16 %v389
    %v1451 = vunpack.c.h.b16 %v389
    %v1452 = vunpack.c.l.b16 %v390
    %v1453 = vunpack.c.h.b16 %v390
    %v1454 = vunpack.c.l.b16 %v391
    %v1455 = vunpack.c.h.b16 %v391
    %v1456 = vunpack.c.l.b16 %v392
    %v1457 = vunpack.c.h.b16 %v392
    %v1458 = vunpack.c.l.b16 %v393
    %v1459 = vunpack.c.h.b16 %v393
    %v1460 = vunpack.c.l.b16 %v394
    %v1461 = vunpack.c.h.b16 %v394
    %v1462 = vunpack.c.l.b16 %v395
    %v1463 = vunpack.c.h.b16 %v395
    %v1464 = vunpack.c.l.b16 %v396
    %v1465 = vunpack.c.h.b16 %v396
    %v1466 = vunpack.c.l.b16 %v397
    %v1467 = vunpack.c.h.b16 %v397
    %v1468 = vunpack.c.l.b16 %v398
    %v1469 = vunpack.c.h.b16 %v398
    %v1470 = vunpack.c.l.b16 %v399
    %v1471 = vunpack.c.h.b16 %v399
    %v1472 = vunpack.c.l.b16 %v400
    %v1473 = vunpack.c.h.b16 %v400
    %v1474 = vunpack.c.l.b16 %v401
    %v1475 = vunpack.c.h.b16 %v401
    %v1476 = vunpack.c.l.b16 %v402
    %v1477 = vunpack.c.h.b16 %v402
    %v1478 = vunpack.c.l.b16 %v403
    %v1479 = vunpack.c.h.b16 %v403
    %v1480 = vunpack.c.l.b16 %v404
    %v1481 = vunpack.c.h.b16 %v404
    %v1482 = vunpack.c.l.b16 %v405
    %v1483 = vunpack.c.h.b16 %v405
    %v1484 = vunpack.c.l.b16 %v406
    %v1485 = vunpack.c.h.b16 %v406
    %v1486 = vunpack.c.l.b16 %v407
    %v1487 = vunpack.c.h.b16 %v407
    %v1488 = vunpack.c.l.b16 %v408
    %v1489 = vunpack.c.h.b16 %v408
    %v1490 = vunpack.c.l.b16 %v409
    %v1491 = vunpack.c.h.b16 %v409
    %v1492 = vunpack.c.l.b16 %v410
    %v1493 = vunpack.c.h.b16 %v410
    %v1494 = vunpack.c.l.b16 %v411
    %v1495 = vunpack.c.h.b16 %v411
    %v1496 = vunpack.c.l.b16 %v412
    %v1497 = vunpack.c.h.b16 %v412
    %v1498 = vunpack.c.l.b16 %v413
    %v1499 = vunpack.c.h.b16 %v413
    %v1500 = vunpack.c.l.b16 %v414
    %v1501 = vunpack.c.h.b16 %v414
    %v1502 = vunpack.c.l.b16 %v415
    %v1503 = vunpack.c.h.b16 %v415
    %v1504 = vunpack.c.l.b16 %v416
    %v1505 = vunpack.c.h.b16 %v416
    %v1506 = vunpack.c.l.b16 %v417
    %v1507 = vunpack.c.h.b16 %v417
    %v1508 = vunpack.c.l.b16 %v418
    %v1509 = vunpack.c.h.b16 %v418
    %v1510 = vunpack.c.l.b16 %v419
    %v1511 = vunpack.c.h.b16 %v419
    %v1512 = vunpack.c.l.b16 %v420
    %v1513 = vunpack.c.h.b16 %v420
    %v1514 = vunpack.c.l.b16 %v421
    %v1515 = vunpack.c.h.b16 %v421
    %v1516 = vunpack.c.l.b16 %v422
    %v1517 = vunpack.c.h.b16 %v422
    %v1518 = vunpack.c.l.b16 %v423
    %v1519 = vunpack.c.h.b16 %v423
    %v1520 = vunpack.c.l.b16 %v424
    %v1521 = vunpack.c.h.b16 %v424
    %v1522 = vunpack.c.l.b16 %v425
    %v1523 = vunpack.c.h.b16 %v425
    %v1524 = vunpack.c.l.b16 %v426
    %v1525 = vunpack.c.h.b16 %v426
    %v1526 = vunpack.c.l.b16 %v427
    %v1527 = vunpack.c.h.b16 %v427
    %v1528 = vunpack.c.l.b16 %v428
    %v1529 = vunpack.c.h.b16 %v428
    %v1530 = vunpack.c.l.b16 %v429
    %v1531 = vunpack.c.h.b16 %v429
    %v1532 = vunpack.c.l.b16 %v430
    %v1533 = vunpack.c.h.b16 %v430
    %v1534 = vunpack.c.l.b16 %v431
    %v1535 = vunpack.c.h.b16 %v431
    %v1536 = vunpack.c.l.b16 %v432
    %v1537 = vunpack.c.h.b16 %v432
    %v1538 = vunpack.c.l.b16 %v433
    %v1539 = vunpack.c.h.b16 %v433
    %v1540 = vunpack.c.l.b16 %v434
    %v1541 = vunpack.c.h.b16 %v434
    %v1542 = vunpack.c.l.b16 %v435
    %v1543 = vunpack.c.h.b16 %v435
    %v1544 = vunpack.c.l.b16 %v436
    %v1545 = vunpack.c.h.b16 %v436
    %v1546 = vunpack.c.l.b16 %v437
    %v1547 = vunpack.c.h.b16 %v437
    %v1548 = vunpack.c.l.b16 %v438
    %v1549 = vunpack.c.h.b16 %v438
    %v1550 = vunpack.c.l.b16 %v439
    %v1551 = vunpack.c.h.b16 %v439
    %v1552 = vunpack.c.l.b16 %v440
    %v1553 = vunpack.c.h.b16 %v440
    %v1554 = vunpack.c.l.b16 %v441
    %v1555 = vunpack.c.h.b16 %v441
    %v1556 = vunpack.c.l.b16 %v442
    %v1557 = vunpack.c.h.b16 %v442
    %v1558 = vunpack.c.l.b16 %v443
    %v1559 = vunpack.c.h.b16 %v443
    %v1560 = vunpack.c.l.b16 %v444
    %v1561 = vunpack.c.h.b16 %v444
    %v1562 = vunpack.c.l.b16 %v445
    %v1563 = vunpack.c.h.b16 %v445
    %v1564 = vunpack.c.l.b16 %v446
    %v1565 = vunpack.c.h.b16 %v446
    %v1566 = vunpack.c.l.b16 %v447
    %v1567 = vunpack.c.h.b16 %v447
    %v1568 = vunpack.c.l.b16 %v448
    %v1569 = vunpack.c.h.b16 %v448
    %v1570 = vunpack.c.l.b16 %v449
    %v1571 = vunpack.c.h.b16 %v449
    %v1572 = vunpack.c.l.b16 %v450
    %v1573 = vunpack.c.h.b16 %v450
    %v1574 = vunpack.c.l.b16 %v451
    %v1575 = vunpack.c.h.b16 %v451
    %v1576 = vunpack.c.l.b16 %v452
    %v1577 = vunpack.c.h.b16 %v452
    %v1578 = vunpack.c.l.b16 %v453
    %v1579 = vunpack.c.h.b16 %v453
    %v1580 = vunpack.c.l.b16 %v454
    %v1581 = vunpack.c.h.b16 %v454
    %v1582 = vunpack.c.l.b16 %v455
    %v1583 = vunpack.c.h.b16 %v455
    %v1584 = vunpack.c.l.b16 %v456
    %v1585 = vunpack.c.h.b16 %v456
    %v1586 = vunpack.c.l.b16 %v457
    %v1587 = vunpack.c.h.b16 %v457
    %v1588 = vunpack.c.l.b16 %v458
    %v1589 = vunpack.c.h.b16 %v458
    %v1590 = vunpack.c.l.b16 %v459
    %v1591 = vunpack.c.h.b16 %v459
    %v1592 = vunpack.c.l.b16 %v460
    %v1593 = vunpack.c.h.b16 %v460
    %v1594 = vunpack.c.l.b16 %v461
    %v1595 = vunpack.c.h.b16 %v461
    %v1596 = vunpack.c.l.b16 %v462
    %v1597 = vunpack.c.h.b16 %v462
    %v1598 = vunpack.c.l.b16 %v463
    %v1599 = vunpack.c.h.b16 %v463
    %v1600 = vunpack.c.l.b16 %v464
    %v1601 = vunpack.c.h.b16 %v464
    %v1602 = vunpack.c.l.b16 %v465
    %v1603 = vunpack.c.h.b16 %v465
    %v1604 = vunpack.c.l.b16 %v466
    %v1605 = vunpack.c.h.b16 %v466
    %v1606 = vunpack.c.l.b16 %v467
    %v1607 = vunpack.c.h.b16 %v467
    %v1608 = vunpack.c.l.b16 %v468
    %v1609 = vunpack.c.h.b16 %v468
    %v1610 = vunpack.c.l.b16 %v469
    %v1611 = vunpack.c.h.b16 %v469
    %v1612 = vunpack.c.l.b16 %v470
    %v1613 = vunpack.c.h.b16 %v470
    %v1614 = vunpack.c.l.b16 %v471
    %v1615 = vunpack.c.h.b16 %v471
    %v1616 = vunpack.c.l.b16 %v472
    %v1617 = vunpack.c.h.b16 %v472
    %v1618 = vunpack.c.l.b16 %v473
    %v1619 = vunpack.c.h.b16 %v473
    %v1620 = vunpack.c.l.b16 %v474
    %v1621 = vunpack.c.h.b16 %v474
    %v1622 = vunpack.c.l.b16 %v475
    %v1623 = vunpack.c.h.b16 %v475
    %v1624 = vunpack.c.l.b16 %v476
    %v1625 = vunpack.c.h.b16 %v476
    %v1626 = vunpack.c.l.b16 %v477
    %v1627 = vunpack.c.h.b16 %v477
    %v1628 = vunpack.c.l.b16 %v478
    %v1629 = vunpack.c.h.b16 %v478
    %v1630 = vunpack.c.l.b16 %v479
    %v1631 = vunpack.c.h.b16 %v479
    %v1632 = vunpack.c.l.b16 %v480
    %v1633 = vunpack.c.h.b16 %v480
    %v1634 = vunpack.c.l.b16 %v481
    %v1635 = vunpack.c.h.b16 %v481
    %v1636 = vunpack.c.l.b16 %v482
    %v1637 = vunpack.c.h.b16 %v482
    %v1638 = vunpack.c.l.b16 %v483
    %v1639 = vunpack.c.h.b16 %v483
    %v1640 = vunpack.c.l.b16 %v484
    %v1641 = vunpack.c.h.b16 %v484
    %v1642 = vunpack.c.l.b16 %v485
    %v1643 = vunpack.c.h.b16 %v485
    %v1644 = vunpack.c.l.b16 %v486
    %v1645 = vunpack.c.h.b16 %v486
    %v1646 = vunpack.c.l.b16 %v487
    %v1647 = vunpack.c.h.b16 %v487
    %v1648 = vunpack.c.l.b16 %v488
    %v1649 = vunpack.c.h.b16 %v488
    %v1650 = vunpack.c.l.b16 %v489
    %v1651 = vunpack.c.h.b16 %v489
    %v1652 = vunpack.c.l.b16 %v490
    %v1653 = vunpack.c.h.b16 %v490
    %v1654 = vunpack.c.l.b16 %v491
    %v1655 = vunpack.c.h.b16 %v491
    %v1656 = vunpack.c.l.b16 %v492
    %v1657 = vunpack.c.h.b16 %v492
    %v1658 = vunpack.c.l.b16 %v493
    %v1659 = vunpack.c.h.b16 %v493
    %v1660 = vunpack.c.l.b16 %v494
    %v1661 = vunpack.c.h.b16 %v494
    %v1662 = vunpack.c.l.b16 %v495
    %v1663 = vunpack.c.h.b16 %v495
    %v1664 = vunpack.c.l.b16 %v496
    %v1665 = vunpack.c.h.b16 %v496
    %v1666 = vunpack.c.l.b16 %v497
    %v1667 = vunpack.c.h.b16 %v497
    %v1668 = vunpack.c.l.b16 %v498
    %v1669 = vunpack.c.h.b16 %v498
    %v1670 = vunpack.c.l.b16 %v499
    %v1671 = vunpack.c.h.b16 %v499
    %v1672 = vunpack.c.l.b16 %v500
    %v1673 = vunpack.c.h.b16 %v500
    %v1674 = vunpack.c.l.b16 %v501
    %v1675 = vunpack.c.h.b16 %v501
    %v1676 = vunpack.c.l.b16 %v502
    %v1677 = vunpack.c.h.b16 %v502
    %v1678 = vunpack.c.l.b16 %v503
    %v1679 = vunpack.c.h.b16 %v503
    %v1680 = vunpack.c.l.b16 %v504
    %v1681 = vunpack.c.h.b16 %v504
    %v1682 = vunpack.c.l.b16 %v505
    %v1683 = vunpack.c.h.b16 %v505
    %v1684 = vunpack.c.l.b16 %v506
    %v1685 = vunpack.c.h.b16 %v506
    %v1686 = vunpack.c.l.b16 %v507
    %v1687 = vunpack.c.h.b16 %v507
    %v1688 = vunpack.c.l.b16 %v508
    %v1689 = vunpack.c.h.b16 %v508
    %v1690 = vunpack.c.l.b16 %v509
    %v1691 = vunpack.c.h.b16 %v509
    %v1692 = vunpack.c.l.b16 %v510
    %v1693 = vunpack.c.h.b16 %v510
    %v1694 = vunpack.c.l.b16 %v511
    %v1695 = vunpack.c.h.b16 %v511
    %v1696 = vunpack.c.l.b16 %v512
    %v1697 = vunpack.c.h.b16 %v512
    %v1698 = vunpack.c.l.b16 %v513
    %v1699 = vunpack.c.h.b16 %v513
    %v1700 = vunpack.c.l.b16 %v514
    %v1701 = vunpack.c.h.b16 %v514
    %v1702 = vunpack.c.l.b16 %v515
    %v1703 = vunpack.c.h.b16 %v515
    %v1704 = vunpack.c.l.b16 %v516
    %v1705 = vunpack.c.h.b16 %v516
    %v1706 = vunpack.c.l.b16 %v517
    %v1707 = vunpack.c.h.b16 %v517
    %v1708 = vunpack.c.l.b16 %v518
    %v1709 = vunpack.c.h.b16 %v518
    %v1710 = vunpack.c.l.b16 %v519
    %v1711 = vunpack.c.h.b16 %v519
    %v1712 = vunpack.c.l.b16 %v520
    %v1713 = vunpack.c.h.b16 %v520
    %v1714 = vunpack.c.l.b16 %v521
    %v1715 = vunpack.c.h.b16 %v521
    %v1716 = vpack.c.b16 %v940, %v932
    %v1717 = vpack.c.b16 %v941, %v933
    %v1718 = vpack.c.b16 %v942, %v934
    %v1719 = vpack.c.b16 %v943, %v935
    %v1720 = vpack.c.b16 %v944, %v936
    %v1721 = vpack.c.b16 %v945, %v937
    %v1722 = vpack.c.b16 %v946, %v938
    %v1723 = vpack.c.b16 %v947, %v939
    %v1724 = vpack.c.b16 %v956, %v948
    %v1725 = vpack.c.b16 %v957, %v949
    %v1726 = vpack.c.b16 %v958, %v950
    %v1727 = vpack.c.b16 %v959, %v951
    %v1728 = vpack.c.b16 %v960, %v952
    %v1729 = vpack.c.b16 %v961, %v953
    %v1730 = vpack.c.b16 %v962, %v954
    %v1731 = vpack.c.b16 %v963, %v955
    %v1732 = vpack.c.b16 %v972, %v964
    %v1733 = vpack.c.b16 %v973, %v965
    %v1734 = vpack.c.b16 %v974, %v966
    %v1735 = vpack.c.b16 %v975, %v967
    %v1736 = vpack.c.b16 %v976, %v968
    %v1737 = vpack.c.b16 %v977, %v969
    %v1738 = vpack.c.b16 %v978, %v970
    %v1739 = vpack.c.b16 %v979, %v971
    %v1740 = vpack.c.b16 %v988, %v980
    %v1741 = vpack.c.b16 %v989, %v981
    %v1742 = vpack.c.b16 %v990, %v982
    %v1743 = vpack.c.b16 %v991, %v983
    %v1744 = vpack.c.b16 %v992, %v984
    %v1745 = vpack.c.b16 %v993, %v985
    %v1746 = vpack.c.b16 %v994, %v986
    %v1747 = vpack.c.b16 %v995, %v987
    %v1748 = vpack.c.b16 %v1004, %v996
    %v1749 = vpack.c.b16 %v1005, %v997
    %v1750 = vpack.c.b16 %v1006, %v998
    %v1751 = vpack.c.b16 %v1007, %v999
    %v1752 = vpack.c.b16 %v1008, %v1000
    %v1753 = vpack.c.b16 %v1009, %v1001
    %v1754 = vpack.c.b16 %v1010, %v1002
    %v1755 = vpack.c.b16 %v1011, %v1003
    %v1756 = vpack.c.b16 %v1020, %v1012
    %v1757 = vpack.c.b16 %v1021, %v1013
    %v1758 = vpack.c.b16 %v1022, %v1014
    %v1759 = vpack.c.b16 %v1023, %v1015
    %v1760 = vpack.c.b16 %v1024, %v1016
    %v1761 = vpack.c.b16 %v1025, %v1017
    %v1762 = vpack.c.b16 %v1026, %v1018
    %v1763 = vpack.c.b16 %v1027, %v1019
    %v1764 = vpack.c.b16 %v1036, %v1028
    %v1765 = vpack.c.b16 %v1037, %v1029
    %v1766 = vpack.c.b16 %v1038, %v1030
    %v1767 = vpack.c.b16 %v1039, %v1031
    %v1768 = vpack.c.b16 %v1040, %v1032
    %v1769 = vpack.c.b16 %v1041, %v1033
    %v1770 = vpack.c.b16 %v1042, %v1034
    %v1771 = vpack.c.b16 %v1043, %v1035
    %v1772 = vpack.c.b16 %v1052, %v1044
    %v1773 = vpack.c.b16 %v1053, %v1045
    %v1774 = vpack.c.b16 %v1054, %v1046
    %v1775 = vpack.c.b16 %v1055, %v1047
    %v1776 = vpack.c.b16 %v1056, %v1048
    %v1777 = vpack.c.b16 %v1057, %v1049
    %v1778 = vpack.c.b16 %v1058, %v1050
    %v1779 = vpack.c.b16 %v1059, %v1051
    %v1780 = vpack.c.b16 %v1068, %v1060
    %v1781 = vpack.c.b16 %v1069, %v1061
    %v1782 = vpack.c.b16 %v1070, %v1062
    %v1783 = vpack.c.b16 %v1071, %v1063
    %v1784 = vpack.c.b16 %v1072, %v1064
    %v1785 = vpack.c.b16 %v1073, %v1065
    %v1786 = vpack.c.b16 %v1074, %v1066
    %v1787 = vpack.c.b16 %v1075, %v1067
    %v1788 = vpack.c.b16 %v1084, %v1076
    %v1789 = vpack.c.b16 %v1085, %v1077
    %v1790 = vpack.c.b16 %v1086, %v1078
    %v1791 = vpack.c.b16 %v1087, %v1079
    %v1792 = vpack.c.b16 %v1088, %v1080
    %v1793 = vpack.c.b16 %v1089, %v1081
    %v1794 = vpack.c.b16 %v1090, %v1082
    %v1795 = vpack.c.b16 %v1091, %v1083
    %v1796 = vpack.c.b16 %v1100, %v1092
    %v1797 = vpack.c.b16 %v1101, %v1093
    %v1798 = vpack.c.b16 %v1102, %v1094
    %v1799 = vpack.c.b16 %v1103, %v1095
    %v1800 = vpack.c.b16 %v1104, %v1096
    %v1801 = vpack.c.b16 %v1105, %v1097
    %v1802 = vpack.c.b16 %v1106, %v1098
    %v1803 = vpack.c.b16 %v1107, %v1099
    %v1804 = vpack.c.b16 %v1116, %v1108
    %v1805 = vpack.c.b16 %v1117, %v1109
    %v1806 = vpack.c.b16 %v1118, %v1110
    %v1807 = vpack.c.b16 %v1119, %v1111
    %v1808 = vpack.c.b16 %v1120, %v1112
    %v1809 = vpack.c.b16 %v1121, %v1113
    %v1810 = vpack.c.b16 %v1122, %v1114
    %v1811 = vpack.c.b16 %v1123, %v1115
    %v1812 = vpack.c.b16 %v1132, %v1124
    %v1813 = vpack.c.b16 %v1133, %v1125
    %v1814 = vpack.c.b16 %v1134, %v1126
    %v1815 = vpack.c.b16 %v1135, %v1127
    %v1816 = vpack.c.b16 %v1136, %v1128
    %v1817 = vpack.c.b16 %v1137, %v1129
    %v1818 = vpack.c.b16 %v1138, %v1130
    %v1819 = vpack.c.b16 %v1139, %v1131
    %v1820 = vpack.c.b16 %v1148, %v1140
    %v1821 = vpack.c.b16 %v1149, %v1141
    %v1822 = vpack.c.b16 %v1150, %v1142
    %v1823 = vpack.c.b16 %v1151, %v1143
    %v1824 = vpack.c.b16 %v1152, %v1144
    %v1825 = vpack.c.b16 %v1153, %v1145
    %v1826 = vpack.c.b16 %v1154, %v1146
    %v1827 = vpack.c.b16 %v1155, %v1147
    %v1828 = vpack.c.b16 %v1164, %v1156
    %v1829 = vpack.c.b16 %v1165, %v1157
    %v1830 = vpack.c.b16 %v1166, %v1158
    %v1831 = vpack.c.b16 %v1167, %v1159
    %v1832 = vpack.c.b16 %v1168, %v1160
    %v1833 = vpack.c.b16 %v1169, %v1161
    %v1834 = vpack.c.b16 %v1170, %v1162
    %v1835 = vpack.c.b16 %v1171, %v1163
    %v1836 = vpack.c.b16 %v1180, %v1172
    %v1837 = vpack.c.b16 %v1181, %v1173
    %v1838 = vpack.c.b16 %v1182, %v1174
    %v1839 = vpack.c.b16 %v1183, %v1175
    %v1840 = vpack.c.b16 %v1184, %v1176
    %v1841 = vpack.c.b16 %v1185, %v1177
    %v1842 = vpack.c.b16 %v1186, %v1178
    %v1843 = vpack.c.b16 %v1187, %v1179
    %v1844 = vpack.c.b16 %v1196, %v1188
    %v1845 = vpack.c.b16 %v1197, %v1189
    %v1846 = vpack.c.b16 %v1198, %v1190
    %v1847 = vpack.c.b16 %v1199, %v1191
    %v1848 = vpack.c.b16 %v1200, %v1192
    %v1849 = vpack.c.b16 %v1201, %v1193
    %v1850 = vpack.c.b16 %v1202, %v1194
    %v1851 = vpack.c.b16 %v1203, %v1195
    %v1852 = vpack.c.b16 %v1212, %v1204
    %v1853 = vpack.c.b16 %v1213, %v1205
    %v1854 = vpack.c.b16 %v1214, %v1206
    %v1855 = vpack.c.b16 %v1215, %v1207
    %v1856 = vpack.c.b16 %v1216, %v1208
    %v1857 = vpack.c.b16 %v1217, %v1209
    %v1858 = vpack.c.b16 %v1218, %v1210
    %v1859 = vpack.c.b16 %v1219, %v1211
    %v1860 = vpack.c.b16 %v1228, %v1220
    %v1861 = vpack.c.b16 %v1229, %v1221
    %v1862 = vpack.c.b16 %v1230, %v1222
    %v1863 = vpack.c.b16 %v1231, %v1223
    %v1864 = vpack.c.b16 %v1232, %v1224
    %v1865 = vpack.c.b16 %v1233, %v1225
    %v1866 = vpack.c.b16 %v1234, %v1226
    %v1867 = vpack.c.b16 %v1235, %v1227
    %v1868 = vpack.c.b16 %v1244, %v1236
    %v1869 = vpack.c.b16 %v1245, %v1237
    %v1870 = vpack.c.b16 %v1246, %v1238
    %v1871 = vpack.c.b16 %v1247, %v1239
    %v1872 = vpack.c.b16 %v1248, %v1240
    %v1873 = vpack.c.b16 %v1249, %v1241
    %v1874 = vpack.c.b16 %v1250, %v1242
    %v1875 = vpack.c.b16 %v1251, %v1243
    %v1876 = vpack.c.b16 %v1260, %v1252
    %v1877 = vpack.c.b16 %v1261, %v1253
    %v1878 = vpack.c.b16 %v1262, %v1254
    %v1879 = vpack.c.b16 %v1263, %v1255
    %v1880 = vpack.c.b16 %v1264, %v1256
    %v1881 = vpack.c.b16 %v1265, %v1257
    %v1882 = vpack.c.b16 %v1266, %v1258
    %v1883 = vpack.c.b16 %v1267, %v1259
    %v1884 = vpack.c.b16 %v1276, %v1268
    %v1885 = vpack.c.b16 %v1277, %v1269
    %v1886 = vpack.c.b16 %v1278, %v1270
    %v1887 = vpack.c.b16 %v1279, %v1271
    %v1888 = vpack.c.b16 %v1280, %v1272
    %v1889 = vpack.c.b16 %v1281, %v1273
    %v1890 = vpack.c.b16 %v1282, %v1274
    %v1891 = vpack.c.b16 %v1283, %v1275
    %v1892 = vpack.c.b16 %v1292, %v1284
    %v1893 = vpack.c.b16 %v1293, %v1285
    %v1894 = vpack.c.b16 %v1294, %v1286
    %v1895 = vpack.c.b16 %v1295, %v1287
    %v1896 = vpack.c.b16 %v1296, %v1288
    %v1897 = vpack.c.b16 %v1297, %v1289
    %v1898 = vpack.c.b16 %v1298, %v1290
    %v1899 = vpack.c.b16 %v1299, %v1291
    %v1900 = vpack.c.b16 %v1308, %v1300
    %v1901 = vpack.c.b16 %v1309, %v1301
    %v1902 = vpack.c.b16 %v1310, %v1302
    %v1903 = vpack.c.b16 %v1311, %v1303
    %v1904 = vpack.c.b16 %v1312, %v1304
    %v1905 = vpack.c.b16 %v1313, %v1305
    %v1906 = vpack.c.b16 %v1314, %v1306
    %v1907 = vpack.c.b16 %v1315, %v1307
    %v1908 = vpack.c.b16 %v1324, %v1316
    %v1909 = vpack.c.b16 %v1325, %v1317
    %v1910 = vpack.c.b16 %v1326, %v1318
    %v1911 = vpack.c.b16 %v1327, %v1319
    %v1912 = vpack.c.b16 %v1328, %v1320
    %v1913 = vpack.c.b16 %v1329, %v1321
    %v1914 = vpack.c.b16 %v1330, %v1322
    %v1915 = vpack.c.b16 %v1331, %v1323
    %v1916 = vpack.c.b16 %v1340, %v1332
    %v1917 = vpack.c.b16 %v1341, %v1333
    %v1918 = vpack.c.b16 %v1342, %v1334
    %v1919 = vpack.c.b16 %v1343, %v1335
    %v1920 = vpack.c.b16 %v1344, %v1336
    %v1921 = vpack.c.b16 %v1345, %v1337
    %v1922 = vpack.c.b16 %v1346, %v1338
    %v1923 = vpack.c.b16 %v1347, %v1339
    %v1924 = vpack.c.b16 %v1356, %v1348
    %v1925 = vpack.c.b16 %v1357, %v1349
    %v1926 = vpack.c.b16 %v1358, %v1350
    %v1927 = vpack.c.b16 %v1359, %v1351
    %v1928 = vpack.c.b16 %v1360, %v1352
    %v1929 = vpack.c.b16 %v1361, %v1353
    %v1930 = vpack.c.b16 %v1362, %v1354
    %v1931 = vpack.c.b16 %v1363, %v1355
    %v1932 = vpack.c.b16 %v1372, %v1364
    %v1933 = vpack.c.b16 %v1373, %v1365
    %v1934 = vpack.c.b16 %v1374, %v1366
    %v1935 = vpack.c.b16 %v1375, %v1367
    %v1936 = vpack.c.b16 %v1376, %v1368
    %v1937 = vpack.c.b16 %v1377, %v1369
    %v1938 = vpack.c.b16 %v1378, %v1370
    %v1939 = vpack.c.b16 %v1379, %v1371
    %v1940 = vpack.c.b16 %v1388, %v1380
    %v1941 = vpack.c.b16 %v1389, %v1381
    %v1942 = vpack.c.b16 %v1390, %v1382
    %v1943 = vpack.c.b16 %v1391, %v1383
    %v1944 = vpack.c.b16 %v1392, %v1384
    %v1945 = vpack.c.b16 %v1393, %v1385
    %v1946 = vpack.c.b16 %v1394, %v1386
    %v1947 = vpack.c.b16 %v1395, %v1387
    %v1948 = vpack.c.b16 %v1404, %v1396
    %v1949 = vpack.c.b16 %v1405, %v1397
    %v1950 = vpack.c.b16 %v1406, %v1398
    %v1951 = vpack.c.b16 %v1407, %v1399
    %v1952 = vpack.c.b16 %v1408, %v1400
    %v1953 = vpack.c.b16 %v1409, %v1401
    %v1954 = vpack.c.b16 %v1410, %v1402
    %v1955 = vpack.c.b16 %v1411, %v1403
    %v1956 = vpack.c.b16 %v1420, %v1412
    %v1957 = vpack.c.b16 %v1421, %v1413
    %v1958 = vpack.c.b16 %v1422, %v1414
    %v1959 = vpack.c.b16 %v1423, %v1415
    %v1960 = vpack.c.b16 %v1424, %v1416
    %v1961 = vpack.c.b16 %v1425, %v1417
    %v1962 = vpack.c.b16 %v1426, %v1418
    %v1963 = vpack.c.b16 %v1427, %v1419
    %v1964 = vpack.c.b16 %v1436, %v1428
    %v1965 = vpack.c.b16 %v1437, %v1429
    %v1966 = vpack.c.b16 %v1438, %v1430
    %v1967 = vpack.c.b16 %v1439, %v1431
    %v1968 = vpack.c.b16 %v1440, %v1432
    %v1969 = vpack.c.b16 %v1441, %v1433
    %v1970 = vpack.c.b16 %v1442, %v1434
    %v1971 = vpack.c.b16 %v1443, %v1435
    %v1972 = vpack.c.b16 %v1452, %v1444
    %v1973 = vpack.c.b16 %v1453, %v1445
    %v1974 = vpack.c.b16 %v1454, %v1446
    %v1975 = vpack.c.b16 %v1455, %v1447
    %v1976 = vpack.c.b16 %v1456, %v1448
    %v1977 = vpack.c.b16 %v1457, %v1449
    %v1978 = vpack.c.b16 %v1458, %v1450
    %v1979 = vpack.c.b16 %v1459, %v1451
    %v1980 = vpack.c.b16 %v1468, %v1460
    %v1981 = vpack.c.b16 %v1469, %v1461
    %v1982 = vpack.c.b16 %v1470, %v1462
    %v1983 = vpack.c.b16 %v1471, %v1463
    %v1984 = vpack.c.b16 %v1472, %v1464
    %v1985 = vpack.c.b16 %v1473, %v1465
    %v1986 = vpack.c.b16 %v1474, %v1466
    %v1987 = vpack.c.b16 %v1475, %v1467
    %v1988 = vpack.c.b16 %v1484, %v1476
    %v1989 = vpack.c.b16 %v1485, %v1477
    %v1990 = vpack.c.b16 %v1486, %v1478
    %v1991 = vpack.c.b16 %v1487, %v1479
    %v1992 = vpack.c.b16 %v1488, %v1480
    %v1993 = vpack.c.b16 %v1489, %v1481
    %v1994 = vpack.c.b16 %v1490, %v1482
    %v1995 = vpack.c.b16 %v1491, %v1483
    %v1996 = vpack.c.b16 %v1500, %v1492
    %v1997 = vpack.c.b16 %v1501, %v1493
    %v1998 = vpack.c.b16 %v1502, %v1494
    %v1999 = vpack.c.b16 %v1503, %v1495
    %v2000 = vpack.c.b16 %v1504, %v1496
    %v2001 = vpack.c.b16 %v1505, %v1497
    %v2002 = vpack.c.b16 %v1506, %v1498
    %v2003 = vpack.c.b16 %v1507, %v1499
    %v2004 = vpack.c.b16 %v1516, %v1508
    %v2005 = vpack.c.b16 %v1517, %v1509
    %v2006 = vpack.c.b16 %v1518, %v1510
    %v2007 = vpack.c.b16 %v1519, %v1511
    %v2008 = vpack.c.b16 %v1520, %v1512
    %v2009 = vpack.c.b16 %v1521, %v1513
    %v2010 = vpack.c.b16 %v1522, %v1514
    %v2011 = vpack.c.b16 %v1523, %v1515
    %v2012 = vpack.c.b16 %v1532, %v1524
    %v2013 = vpack.c.b16 %v1533, %v1525
    %v2014 = vpack.c.b16 %v1534, %v1526
    %v2015 = vpack.c.b16 %v1535, %v1527
    %v2016 = vpack.c.b16 %v1536, %v1528
    %v2017 = vpack.c.b16 %v1537, %v1529
    %v2018 = vpack.c.b16 %v1538, %v1530
    %v2019 = vpack.c.b16 %v1539, %v1531
    %v2020 = vpack.c.b16 %v1548, %v1540
    %v2021 = vpack.c.b16 %v1549, %v1541
    %v2022 = vpack.c.b16 %v1550, %v1542
    %v2023 = vpack.c.b16 %v1551, %v1543
    %v2024 = vpack.c.b16 %v1552, %v1544
    %v2025 = vpack.c.b16 %v1553, %v1545
    %v2026 = vpack.c.b16 %v1554, %v1546
    %v2027 = vpack.c.b16 %v1555, %v1547
    %v2028 = vpack.c.b16 %v1564, %v1556
    %v2029 = vpack.c.b16 %v1565, %v1557
    %v2030 = vpack.c.b16 %v1566, %v1558
    %v2031 = vpack.c.b16 %v1567, %v1559
    %v2032 = vpack.c.b16 %v1568, %v1560
    %v2033 = vpack.c.b16 %v1569, %v1561
    %v2034 = vpack.c.b16 %v1570, %v1562
    %v2035 = vpack.c.b16 %v1571, %v1563
    %v2036 = vpack.c.b16 %v1580, %v1572
    %v2037 = vpack.c.b16 %v1581, %v1573
    %v2038 = vpack.c.b16 %v1582, %v1574
    %v2039 = vpack.c.b16 %v1583, %v1575
    %v2040 = vpack.c.b16 %v1584, %v1576
    %v2041 = vpack.c.b16 %v1585, %v1577
    %v2042 = vpack.c.b16 %v1586, %v1578
    %v2043 = vpack.c.b16 %v1587, %v1579
    %v2044 = vpack.c.b16 %v1596, %v1588
    %v2045 = vpack.c.b16 %v1597, %v1589
    %v2046 = vpack.c.b16 %v1598, %v1590
    %v2047 = vpack.c.b16 %v1599, %v1591
    %v2048 = vpack.c.b16 %v1600, %v1592
    %v2049 = vpack.c.b16 %v1601, %v1593
    %v2050 = vpack.c.b16 %v1602, %v1594
    %v2051 = vpack.c.b16 %v1603, %v1595
    %v2052 = vpack.c.b16 %v1612, %v1604
    %v2053 = vpack.c.b16 %v1613, %v1605
    %v2054 = vpack.c.b16 %v1614, %v1606
    %v2055 = vpack.c.b16 %v1615, %v1607
    %v2056 = vpack.c.b16 %v1616, %v1608
    %v2057 = vpack.c.b16 %v1617, %v1609
    %v2058 = vpack.c.b16 %v1618, %v1610
    %v2059 = vpack.c.b16 %v1619, %v1611
    %v2060 = vpack.c.b16 %v1628, %v1620
    %v2061 = vpack.c.b16 %v1629, %v1621
    %v2062 = vpack.c.b16 %v1630, %v1622
    %v2063 = vpack.c.b16 %v1631, %v1623
    %v2064 = vpack.c.b16 %v1632, %v1624
    %v2065 = vpack.c.b16 %v1633, %v1625
    %v2066 = vpack.c.b16 %v1634, %v1626
    %v2067 = vpack.c.b16 %v1635, %v1627
    %v2068 = vpack.c.b16 %v1644, %v1636
    %v2069 = vpack.c.b16 %v1645, %v1637
    %v2070 = vpack.c.b16 %v1646, %v1638
    %v2071 = vpack.c.b16 %v1647, %v1639
    %v2072 = vpack.c.b16 %v1648, %v1640
    %v2073 = vpack.c.b16 %v1649, %v1641
    %v2074 = vpack.c.b16 %v1650, %v1642
    %v2075 = vpack.c.b16 %v1651, %v1643
    %v2076 = vpack.c.b16 %v1660, %v1652
    %v2077 = vpack.c.b16 %v1661, %v1653
    %v2078 = vpack.c.b16 %v1662, %v1654
    %v2079 = vpack.c.b16 %v1663, %v1655
    %v2080 = vpack.c.b16 %v1664, %v1656
    %v2081 = vpack.c.b16 %v1665, %v1657
    %v2082 = vpack.c.b16 %v1666, %v1658
    %v2083 = vpack.c.b16 %v1667, %v1659
    %v2084 = vpack.c.b16 %v1676, %v1668
    %v2085 = vpack.c.b16 %v1677, %v1669
    %v2086 = vpack.c.b16 %v1678, %v1670
    %v2087 = vpack.c.b16 %v1679, %v1671
    %v2088 = vpack.c.b16 %v1680, %v1672
    %v2089 = vpack.c.b16 %v1681, %v1673
    %v2090 = vpack.c.b16 %v1682, %v1674
    %v2091 = vpack.c.b16 %v1683, %v1675
    %v2092 = vpack.c.b16 %v1692, %v1684
    %v2093 = vpack.c.b16 %v1693, %v1685
    %v2094 = vpack.c.b16 %v1694, %v1686
    %v2095 = vpack.c.b16 %v1695, %v1687
    %v2096 = vpack.c.b16 %v1696, %v1688
    %v2097 = vpack.c.b16 %v1697, %v1689
    %v2098 = vpack.c.b16 %v1698, %v1690
    %v2099 = vpack.c.b16 %v1699, %v1691
    %v2100 = vpack.c.b16 %v1708, %v1700
    %v2101 = vpack.c.b16 %v1709, %v1701
    %v2102 = vpack.c.b16 %v1710, %v1702
    %v2103 = vpack.c.b16 %v1711, %v1703
    %v2104 = vpack.c.b16 %v1712, %v1704
    %v2105 = vpack.c.b16 %v1713, %v1705
    %v2106 = vpack.c.b16 %v1714, %v1706
    %v2107 = vpack.c.b16 %v1715, %v1707
    %vm2500 = vcmask 130048
    %v2502 = vsel %vm2500, %v129, 0
    %2504 = vmatpush.bf16.msra.mxu0 %v1772
    %2505 = vmatpush.bf16.msra.mxu0 %v1764
    %2506 = vmatpush.bf16.msra.mxu0 %v1756
    %2507 = vmatpush.bf16.msra.mxu0 %v1748
    %2508 = vmatpush.bf16.msra.mxu0 %v1740
    %2509 = vmatpush.bf16.msra.mxu0 %v1732
    %2510 = vmatpush.bf16.msra.mxu0 %v1724
    %2511 = vmatpush.bf16.msra.mxu0 %v1716
    %2512 = vmatmul.bf16.gmra.mxu0 %v123
    %v2513 = vpop.f32.mrf.mxu0
    %v2514 = vadd.f32 %v524, %v2513
    %v2515 = vpop.f32.mrf.mxu0
    %2516 = vdwg.mxu0
    %2517 = vmatpush.bf16.msra.mxu0 %v1836
    %2518 = vmatpush.bf16.msra.mxu0 %v1828
    %2519 = vmatpush.bf16.msra.mxu0 %v1820
    %2520 = vmatpush.bf16.msra.mxu0 %v1812
    %2521 = vmatpush.bf16.msra.mxu0 %v1804
    %2522 = vmatpush.bf16.msra.mxu0 %v1796
    %2523 = vmatpush.bf16.msra.mxu0 %v1788
    %2524 = vmatpush.bf16.msra.mxu0 %v1780
    %2525 = vmatmul.bf16.gmra.mxu0 %v124
    %v2526 = vpop.f32.mrf.mxu0
    %v2527 = vadd.f32 %v2514, %v2526
    %v2528 = vpop.f32.mrf.mxu0
    %2529 = vdwg.mxu0
    %2530 = vmatpush.bf16.msra.mxu0 %v1900
    %2531 = vmatpush.bf16.msra.mxu0 %v1892
    %2532 = vmatpush.bf16.msra.mxu0 %v1884
    %2533 = vmatpush.bf16.msra.mxu0 %v1876
    %2534 = vmatpush.bf16.msra.mxu0 %v1868
    %2535 = vmatpush.bf16.msra.mxu0 %v1860
    %2536 = vmatpush.bf16.msra.mxu0 %v1852
    %2537 = vmatpush.bf16.msra.mxu0 %v1844
    %2538 = vmatmul.bf16.gmra.mxu0 %v125
    %v2539 = vpop.f32.mrf.mxu0
    %v2540 = vadd.f32 %v2527, %v2539
    %v2541 = vpop.f32.mrf.mxu0
    %2542 = vdwg.mxu0
    %2543 = vmatpush.bf16.msra.mxu0 %v1964
    %2544 = vmatpush.bf16.msra.mxu0 %v1956
    %2545 = vmatpush.bf16.msra.mxu0 %v1948
    %2546 = vmatpush.bf16.msra.mxu0 %v1940
    %2547 = vmatpush.bf16.msra.mxu0 %v1932
    %2548 = vmatpush.bf16.msra.mxu0 %v1924
    %2549 = vmatpush.bf16.msra.mxu0 %v1916
    %2550 = vmatpush.bf16.msra.mxu0 %v1908
    %2551 = vmatmul.bf16.gmra.mxu0 %v126
    %v2552 = vpop.f32.mrf.mxu0
    %v2553 = vadd.f32 %v2540, %v2552
    %v2554 = vpop.f32.mrf.mxu0
    %2555 = vdwg.mxu0
    %2556 = vmatpush.bf16.msra.mxu0 %v2028
    %2557 = vmatpush.bf16.msra.mxu0 %v2020
    %2558 = vmatpush.bf16.msra.mxu0 %v2012
    %2559 = vmatpush.bf16.msra.mxu0 %v2004
    %2560 = vmatpush.bf16.msra.mxu0 %v1996
    %2561 = vmatpush.bf16.msra.mxu0 %v1988
    %2562 = vmatpush.bf16.msra.mxu0 %v1980
    %2563 = vmatpush.bf16.msra.mxu0 %v1972
    %2564 = vmatmul.bf16.gmra.mxu0 %v127
    %v2565 = vpop.f32.mrf.mxu0
    %v2566 = vadd.f32 %v2553, %v2565
    %v2567 = vpop.f32.mrf.mxu0
    %2568 = vdwg.mxu0
    %2569 = vmatpush.bf16.msra.mxu0 %v2092
    %2570 = vmatpush.bf16.msra.mxu0 %v2084
    %2571 = vmatpush.bf16.msra.mxu0 %v2076
    %2572 = vmatpush.bf16.msra.mxu0 %v2068
    %2573 = vmatpush.bf16.msra.mxu0 %v2060
    %2574 = vmatpush.bf16.msra.mxu0 %v2052
    %2575 = vmatpush.bf16.msra.mxu0 %v2044
    %2576 = vmatpush.bf16.msra.mxu0 %v2036
    %2577 = vmatmul.bf16.gmra.mxu0 %v128
    %v2578 = vpop.f32.mrf.mxu0
    %v2579 = vadd.f32 %v2566, %v2578
    %v2580 = vpop.f32.mrf.mxu0
    %2581 = vdwg.mxu0
    %2582 = vmatpush.bf16.msra.mxu0 0
    %2583 = vmatpush.bf16.msra.mxu0 0
    %2584 = vmatpush.bf16.msra.mxu0 0
    %2585 = vmatpush.bf16.msra.mxu0 0
    %2586 = vmatpush.bf16.msra.mxu0 0
    %2587 = vmatpush.bf16.msra.mxu0 0
    %2588 = vmatpush.bf16.msra.mxu0 0
    %2589 = vmatpush.bf16.msra.mxu0 %v2100
    %2590 = vmatmul.bf16.gmra.mxu0 %v2502
    %v2591 = vpop.f32.mrf.mxu0
    %v2592 = vadd.f32 %v2579, %v2591
    %v2593 = vpop.f32.mrf.mxu0
    %2594 = vdwg.mxu0
    %2595 = vmatpush.bf16.msra.mxu0 %v1773
    %2596 = vmatpush.bf16.msra.mxu0 %v1765
    %2597 = vmatpush.bf16.msra.mxu0 %v1757
    %2598 = vmatpush.bf16.msra.mxu0 %v1749
    %2599 = vmatpush.bf16.msra.mxu0 %v1741
    %2600 = vmatpush.bf16.msra.mxu0 %v1733
    %2601 = vmatpush.bf16.msra.mxu0 %v1725
    %2602 = vmatpush.bf16.msra.mxu0 %v1717
    %2603 = vmatmul.bf16.gmra.mxu0 %v123
    %v2604 = vpop.f32.mrf.mxu0
    %v2605 = vadd.f32 %v525, %v2604
    %v2606 = vpop.f32.mrf.mxu0
    %2607 = vdwg.mxu0
    %2608 = vmatpush.bf16.msra.mxu0 %v1837
    %2609 = vmatpush.bf16.msra.mxu0 %v1829
    %2610 = vmatpush.bf16.msra.mxu0 %v1821
    %2611 = vmatpush.bf16.msra.mxu0 %v1813
    %2612 = vmatpush.bf16.msra.mxu0 %v1805
    %2613 = vmatpush.bf16.msra.mxu0 %v1797
    %2614 = vmatpush.bf16.msra.mxu0 %v1789
    %2615 = vmatpush.bf16.msra.mxu0 %v1781
    %2616 = vmatmul.bf16.gmra.mxu0 %v124
    %v2617 = vpop.f32.mrf.mxu0
    %v2618 = vadd.f32 %v2605, %v2617
    %v2619 = vpop.f32.mrf.mxu0
    %2620 = vdwg.mxu0
    %2621 = vmatpush.bf16.msra.mxu0 %v1901
    %2622 = vmatpush.bf16.msra.mxu0 %v1893
    %2623 = vmatpush.bf16.msra.mxu0 %v1885
    %2624 = vmatpush.bf16.msra.mxu0 %v1877
    %2625 = vmatpush.bf16.msra.mxu0 %v1869
    %2626 = vmatpush.bf16.msra.mxu0 %v1861
    %2627 = vmatpush.bf16.msra.mxu0 %v1853
    %2628 = vmatpush.bf16.msra.mxu0 %v1845
    %2629 = vmatmul.bf16.gmra.mxu0 %v125
    %v2630 = vpop.f32.mrf.mxu0
    %v2631 = vadd.f32 %v2618, %v2630
    %v2632 = vpop.f32.mrf.mxu0
    %2633 = vdwg.mxu0
    %2634 = vmatpush.bf16.msra.mxu0 %v1965
    %2635 = vmatpush.bf16.msra.mxu0 %v1957
    %2636 = vmatpush.bf16.msra.mxu0 %v1949
    %2637 = vmatpush.bf16.msra.mxu0 %v1941
    %2638 = vmatpush.bf16.msra.mxu0 %v1933
    %2639 = vmatpush.bf16.msra.mxu0 %v1925
    %2640 = vmatpush.bf16.msra.mxu0 %v1917
    %2641 = vmatpush.bf16.msra.mxu0 %v1909
    %2642 = vmatmul.bf16.gmra.mxu0 %v126
    %v2643 = vpop.f32.mrf.mxu0
    %v2644 = vadd.f32 %v2631, %v2643
    %v2645 = vpop.f32.mrf.mxu0
    %2646 = vdwg.mxu0
    %2647 = vmatpush.bf16.msra.mxu0 %v2029
    %2648 = vmatpush.bf16.msra.mxu0 %v2021
    %2649 = vmatpush.bf16.msra.mxu0 %v2013
    %2650 = vmatpush.bf16.msra.mxu0 %v2005
    %2651 = vmatpush.bf16.msra.mxu0 %v1997
    %2652 = vmatpush.bf16.msra.mxu0 %v1989
    %2653 = vmatpush.bf16.msra.mxu0 %v1981
    %2654 = vmatpush.bf16.msra.mxu0 %v1973
    %2655 = vmatmul.bf16.gmra.mxu0 %v127
    %v2656 = vpop.f32.mrf.mxu0
    %v2657 = vadd.f32 %v2644, %v2656
    %v2658 = vpop.f32.mrf.mxu0
    %2659 = vdwg.mxu0
    %2660 = vmatpush.bf16.msra.mxu0 %v2093
    %2661 = vmatpush.bf16.msra.mxu0 %v2085
    %2662 = vmatpush.bf16.msra.mxu0 %v2077
    %2663 = vmatpush.bf16.msra.mxu0 %v2069
    %2664 = vmatpush.bf16.msra.mxu0 %v2061
    %2665 = vmatpush.bf16.msra.mxu0 %v2053
    %2666 = vmatpush.bf16.msra.mxu0 %v2045
    %2667 = vmatpush.bf16.msra.mxu0 %v2037
    %2668 = vmatmul.bf16.gmra.mxu0 %v128
    %v2669 = vpop.f32.mrf.mxu0
    %v2670 = vadd.f32 %v2657, %v2669
    %v2671 = vpop.f32.mrf.mxu0
    %2672 = vdwg.mxu0
    %2673 = vmatpush.bf16.msra.mxu0 0
    %2674 = vmatpush.bf16.msra.mxu0 0
    %2675 = vmatpush.bf16.msra.mxu0 0
    %2676 = vmatpush.bf16.msra.mxu0 0
    %2677 = vmatpush.bf16.msra.mxu0 0
    %2678 = vmatpush.bf16.msra.mxu0 0
    %2679 = vmatpush.bf16.msra.mxu0 0
    %2680 = vmatpush.bf16.msra.mxu0 %v2101
    %2681 = vmatmul.bf16.gmra.mxu0 %v2502
    %v2682 = vpop.f32.mrf.mxu0
    %v2683 = vadd.f32 %v2670, %v2682
    %v2684 = vpop.f32.mrf.mxu0
    %2685 = vdwg.mxu0
    %2686 = vmatpush.bf16.msra.mxu0 %v1774
    %2687 = vmatpush.bf16.msra.mxu0 %v1766
    %2688 = vmatpush.bf16.msra.mxu0 %v1758
    %2689 = vmatpush.bf16.msra.mxu0 %v1750
    %2690 = vmatpush.bf16.msra.mxu0 %v1742
    %2691 = vmatpush.bf16.msra.mxu0 %v1734
    %2692 = vmatpush.bf16.msra.mxu0 %v1726
    %2693 = vmatpush.bf16.msra.mxu0 %v1718
    %2694 = vmatmul.bf16.gmra.mxu0 %v123
    %v2695 = vpop.f32.mrf.mxu0
    %v2696 = vadd.f32 %v526, %v2695
    %v2697 = vpop.f32.mrf.mxu0
    %2698 = vdwg.mxu0
    %2699 = vmatpush.bf16.msra.mxu0 %v1838
    %2700 = vmatpush.bf16.msra.mxu0 %v1830
    %2701 = vmatpush.bf16.msra.mxu0 %v1822
    %2702 = vmatpush.bf16.msra.mxu0 %v1814
    %2703 = vmatpush.bf16.msra.mxu0 %v1806
    %2704 = vmatpush.bf16.msra.mxu0 %v1798
    %2705 = vmatpush.bf16.msra.mxu0 %v1790
    %2706 = vmatpush.bf16.msra.mxu0 %v1782
    %2707 = vmatmul.bf16.gmra.mxu0 %v124
    %v2708 = vpop.f32.mrf.mxu0
    %v2709 = vadd.f32 %v2696, %v2708
    %v2710 = vpop.f32.mrf.mxu0
    %2711 = vdwg.mxu0
    %2712 = vmatpush.bf16.msra.mxu0 %v1902
    %2713 = vmatpush.bf16.msra.mxu0 %v1894
    %2714 = vmatpush.bf16.msra.mxu0 %v1886
    %2715 = vmatpush.bf16.msra.mxu0 %v1878
    %2716 = vmatpush.bf16.msra.mxu0 %v1870
    %2717 = vmatpush.bf16.msra.mxu0 %v1862
    %2718 = vmatpush.bf16.msra.mxu0 %v1854
    %2719 = vmatpush.bf16.msra.mxu0 %v1846
    %2720 = vmatmul.bf16.gmra.mxu0 %v125
    %v2721 = vpop.f32.mrf.mxu0
    %v2722 = vadd.f32 %v2709, %v2721
    %v2723 = vpop.f32.mrf.mxu0
    %2724 = vdwg.mxu0
    %2725 = vmatpush.bf16.msra.mxu0 %v1966
    %2726 = vmatpush.bf16.msra.mxu0 %v1958
    %2727 = vmatpush.bf16.msra.mxu0 %v1950
    %2728 = vmatpush.bf16.msra.mxu0 %v1942
    %2729 = vmatpush.bf16.msra.mxu0 %v1934
    %2730 = vmatpush.bf16.msra.mxu0 %v1926
    %2731 = vmatpush.bf16.msra.mxu0 %v1918
    %2732 = vmatpush.bf16.msra.mxu0 %v1910
    %2733 = vmatmul.bf16.gmra.mxu0 %v126
    %v2734 = vpop.f32.mrf.mxu0
    %v2735 = vadd.f32 %v2722, %v2734
    %v2736 = vpop.f32.mrf.mxu0
    %2737 = vdwg.mxu0
    %2738 = vmatpush.bf16.msra.mxu0 %v2030
    %2739 = vmatpush.bf16.msra.mxu0 %v2022
    %2740 = vmatpush.bf16.msra.mxu0 %v2014
    %2741 = vmatpush.bf16.msra.mxu0 %v2006
    %2742 = vmatpush.bf16.msra.mxu0 %v1998
    %2743 = vmatpush.bf16.msra.mxu0 %v1990
    %2744 = vmatpush.bf16.msra.mxu0 %v1982
    %2745 = vmatpush.bf16.msra.mxu0 %v1974
    %2746 = vmatmul.bf16.gmra.mxu0 %v127
    %v2747 = vpop.f32.mrf.mxu0
    %v2748 = vadd.f32 %v2735, %v2747
    %v2749 = vpop.f32.mrf.mxu0
    %2750 = vdwg.mxu0
    %2751 = vmatpush.bf16.msra.mxu0 %v2094
    %2752 = vmatpush.bf16.msra.mxu0 %v2086
    %2753 = vmatpush.bf16.msra.mxu0 %v2078
    %2754 = vmatpush.bf16.msra.mxu0 %v2070
    %2755 = vmatpush.bf16.msra.mxu0 %v2062
    %2756 = vmatpush.bf16.msra.mxu0 %v2054
    %2757 = vmatpush.bf16.msra.mxu0 %v2046
    %2758 = vmatpush.bf16.msra.mxu0 %v2038
    %2759 = vmatmul.bf16.gmra.mxu0 %v128
    %v2760 = vpop.f32.mrf.mxu0
    %v2761 = vadd.f32 %v2748, %v2760
    %v2762 = vpop.f32.mrf.mxu0
    %2763 = vdwg.mxu0
    %2764 = vmatpush.bf16.msra.mxu0 0
    %2765 = vmatpush.bf16.msra.mxu0 0
    %2766 = vmatpush.bf16.msra.mxu0 0
    %2767 = vmatpush.bf16.msra.mxu0 0
    %2768 = vmatpush.bf16.msra.mxu0 0
    %2769 = vmatpush.bf16.msra.mxu0 0
    %2770 = vmatpush.bf16.msra.mxu0 0
    %2771 = vmatpush.bf16.msra.mxu0 %v2102
    %2772 = vmatmul.bf16.gmra.mxu0 %v2502
    %v2773 = vpop.f32.mrf.mxu0
    %v2774 = vadd.f32 %v2761, %v2773
    %v2775 = vpop.f32.mrf.mxu0
    %2776 = vdwg.mxu0
    %2777 = vmatpush.bf16.msra.mxu0 %v1775
    %2778 = vmatpush.bf16.msra.mxu0 %v1767
    %2779 = vmatpush.bf16.msra.mxu0 %v1759
    %2780 = vmatpush.bf16.msra.mxu0 %v1751
    %2781 = vmatpush.bf16.msra.mxu0 %v1743
    %2782 = vmatpush.bf16.msra.mxu0 %v1735
    %2783 = vmatpush.bf16.msra.mxu0 %v1727
    %2784 = vmatpush.bf16.msra.mxu0 %v1719
    %2785 = vmatmul.bf16.gmra.mxu0 %v123
    %v2786 = vpop.f32.mrf.mxu0
    %v2787 = vadd.f32 %v527, %v2786
    %v2788 = vpop.f32.mrf.mxu0
    %2789 = vdwg.mxu0
    %2790 = vmatpush.bf16.msra.mxu0 %v1839
    %2791 = vmatpush.bf16.msra.mxu0 %v1831
    %2792 = vmatpush.bf16.msra.mxu0 %v1823
    %2793 = vmatpush.bf16.msra.mxu0 %v1815
    %2794 = vmatpush.bf16.msra.mxu0 %v1807
    %2795 = vmatpush.bf16.msra.mxu0 %v1799
    %2796 = vmatpush.bf16.msra.mxu0 %v1791
    %2797 = vmatpush.bf16.msra.mxu0 %v1783
    %2798 = vmatmul.bf16.gmra.mxu0 %v124
    %v2799 = vpop.f32.mrf.mxu0
    %v2800 = vadd.f32 %v2787, %v2799
    %v2801 = vpop.f32.mrf.mxu0
    %2802 = vdwg.mxu0
    %2803 = vmatpush.bf16.msra.mxu0 %v1903
    %2804 = vmatpush.bf16.msra.mxu0 %v1895
    %2805 = vmatpush.bf16.msra.mxu0 %v1887
    %2806 = vmatpush.bf16.msra.mxu0 %v1879
    %2807 = vmatpush.bf16.msra.mxu0 %v1871
    %2808 = vmatpush.bf16.msra.mxu0 %v1863
    %2809 = vmatpush.bf16.msra.mxu0 %v1855
    %2810 = vmatpush.bf16.msra.mxu0 %v1847
    %2811 = vmatmul.bf16.gmra.mxu0 %v125
    %v2812 = vpop.f32.mrf.mxu0
    %v2813 = vadd.f32 %v2800, %v2812
    %v2814 = vpop.f32.mrf.mxu0
    %2815 = vdwg.mxu0
    %2816 = vmatpush.bf16.msra.mxu0 %v1967
    %2817 = vmatpush.bf16.msra.mxu0 %v1959
    %2818 = vmatpush.bf16.msra.mxu0 %v1951
    %2819 = vmatpush.bf16.msra.mxu0 %v1943
    %2820 = vmatpush.bf16.msra.mxu0 %v1935
    %2821 = vmatpush.bf16.msra.mxu0 %v1927
    %2822 = vmatpush.bf16.msra.mxu0 %v1919
    %2823 = vmatpush.bf16.msra.mxu0 %v1911
    %2824 = vmatmul.bf16.gmra.mxu0 %v126
    %v2825 = vpop.f32.mrf.mxu0
    %v2826 = vadd.f32 %v2813, %v2825
    %v2827 = vpop.f32.mrf.mxu0
    %2828 = vdwg.mxu0
    %2829 = vmatpush.bf16.msra.mxu0 %v2031
    %2830 = vmatpush.bf16.msra.mxu0 %v2023
    %2831 = vmatpush.bf16.msra.mxu0 %v2015
    %2832 = vmatpush.bf16.msra.mxu0 %v2007
    %2833 = vmatpush.bf16.msra.mxu0 %v1999
    %2834 = vmatpush.bf16.msra.mxu0 %v1991
    %2835 = vmatpush.bf16.msra.mxu0 %v1983
    %2836 = vmatpush.bf16.msra.mxu0 %v1975
    %2837 = vmatmul.bf16.gmra.mxu0 %v127
    %v2838 = vpop.f32.mrf.mxu0
    %v2839 = vadd.f32 %v2826, %v2838
    %v2840 = vpop.f32.mrf.mxu0
    %2841 = vdwg.mxu0
    %2842 = vmatpush.bf16.msra.mxu0 %v2095
    %2843 = vmatpush.bf16.msra.mxu0 %v2087
    %2844 = vmatpush.bf16.msra.mxu0 %v2079
    %2845 = vmatpush.bf16.msra.mxu0 %v2071
    %2846 = vmatpush.bf16.msra.mxu0 %v2063
    %2847 = vmatpush.bf16.msra.mxu0 %v2055
    %2848 = vmatpush.bf16.msra.mxu0 %v2047
    %2849 = vmatpush.bf16.msra.mxu0 %v2039
    %2850 = vmatmul.bf16.gmra.mxu0 %v128
    %v2851 = vpop.f32.mrf.mxu0
    %v2852 = vadd.f32 %v2839, %v2851
    %v2853 = vpop.f32.mrf.mxu0
    %2854 = vdwg.mxu0
    %2855 = vmatpush.bf16.msra.mxu0 0
    %2856 = vmatpush.bf16.msra.mxu0 0
    %2857 = vmatpush.bf16.msra.mxu0 0
    %2858 = vmatpush.bf16.msra.mxu0 0
    %2859 = vmatpush.bf16.msra.mxu0 0
    %2860 = vmatpush.bf16.msra.mxu0 0
    %2861 = vmatpush.bf16.msra.mxu0 0
    %2862 = vmatpush.bf16.msra.mxu0 %v2103
    %2863 = vmatmul.bf16.gmra.mxu0 %v2502
    %v2864 = vpop.f32.mrf.mxu0
    %v2865 = vadd.f32 %v2852, %v2864
    %v2866 = vpop.f32.mrf.mxu0
    %2867 = vdwg.mxu0
    %2868 = vmatpush.bf16.msra.mxu0 %v1776
    %2869 = vmatpush.bf16.msra.mxu0 %v1768
    %2870 = vmatpush.bf16.msra.mxu0 %v1760
    %2871 = vmatpush.bf16.msra.mxu0 %v1752
    %2872 = vmatpush.bf16.msra.mxu0 %v1744
    %2873 = vmatpush.bf16.msra.mxu0 %v1736
    %2874 = vmatpush.bf16.msra.mxu0 %v1728
    %2875 = vmatpush.bf16.msra.mxu0 %v1720
    %2876 = vmatmul.bf16.gmra.mxu0 %v123
    %v2877 = vpop.f32.mrf.mxu0
    %v2878 = vadd.f32 %v528, %v2877
    %v2879 = vpop.f32.mrf.mxu0
    %2880 = vdwg.mxu0
    %2881 = vmatpush.bf16.msra.mxu0 %v1840
    %2882 = vmatpush.bf16.msra.mxu0 %v1832
    %2883 = vmatpush.bf16.msra.mxu0 %v1824
    %2884 = vmatpush.bf16.msra.mxu0 %v1816
    %2885 = vmatpush.bf16.msra.mxu0 %v1808
    %2886 = vmatpush.bf16.msra.mxu0 %v1800
    %2887 = vmatpush.bf16.msra.mxu0 %v1792
    %2888 = vmatpush.bf16.msra.mxu0 %v1784
    %2889 = vmatmul.bf16.gmra.mxu0 %v124
    %v2890 = vpop.f32.mrf.mxu0
    %v2891 = vadd.f32 %v2878, %v2890
    %v2892 = vpop.f32.mrf.mxu0
    %2893 = vdwg.mxu0
    %2894 = vmatpush.bf16.msra.mxu0 %v1904
    %2895 = vmatpush.bf16.msra.mxu0 %v1896
    %2896 = vmatpush.bf16.msra.mxu0 %v1888
    %2897 = vmatpush.bf16.msra.mxu0 %v1880
    %2898 = vmatpush.bf16.msra.mxu0 %v1872
    %2899 = vmatpush.bf16.msra.mxu0 %v1864
    %2900 = vmatpush.bf16.msra.mxu0 %v1856
    %2901 = vmatpush.bf16.msra.mxu0 %v1848
    %2902 = vmatmul.bf16.gmra.mxu0 %v125
    %v2903 = vpop.f32.mrf.mxu0
    %v2904 = vadd.f32 %v2891, %v2903
    %v2905 = vpop.f32.mrf.mxu0
    %2906 = vdwg.mxu0
    %2907 = vmatpush.bf16.msra.mxu0 %v1968
    %2908 = vmatpush.bf16.msra.mxu0 %v1960
    %2909 = vmatpush.bf16.msra.mxu0 %v1952
    %2910 = vmatpush.bf16.msra.mxu0 %v1944
    %2911 = vmatpush.bf16.msra.mxu0 %v1936
    %2912 = vmatpush.bf16.msra.mxu0 %v1928
    %2913 = vmatpush.bf16.msra.mxu0 %v1920
    %2914 = vmatpush.bf16.msra.mxu0 %v1912
    %2915 = vmatmul.bf16.gmra.mxu0 %v126
    %v2916 = vpop.f32.mrf.mxu0
    %v2917 = vadd.f32 %v2904, %v2916
    %v2918 = vpop.f32.mrf.mxu0
    %2919 = vdwg.mxu0
    %2920 = vmatpush.bf16.msra.mxu0 %v2032
    %2921 = vmatpush.bf16.msra.mxu0 %v2024
    %2922 = vmatpush.bf16.msra.mxu0 %v2016
    %2923 = vmatpush.bf16.msra.mxu0 %v2008
    %2924 = vmatpush.bf16.msra.mxu0 %v2000
    %2925 = vmatpush.bf16.msra.mxu0 %v1992
    %2926 = vmatpush.bf16.msra.mxu0 %v1984
    %2927 = vmatpush.bf16.msra.mxu0 %v1976
    %2928 = vmatmul.bf16.gmra.mxu0 %v127
    %v2929 = vpop.f32.mrf.mxu0
    %v2930 = vadd.f32 %v2917, %v2929
    %v2931 = vpop.f32.mrf.mxu0
    %2932 = vdwg.mxu0
    %2933 = vmatpush.bf16.msra.mxu0 %v2096
    %2934 = vmatpush.bf16.msra.mxu0 %v2088
    %2935 = vmatpush.bf16.msra.mxu0 %v2080
    %2936 = vmatpush.bf16.msra.mxu0 %v2072
    %2937 = vmatpush.bf16.msra.mxu0 %v2064
    %2938 = vmatpush.bf16.msra.mxu0 %v2056
    %2939 = vmatpush.bf16.msra.mxu0 %v2048
    %2940 = vmatpush.bf16.msra.mxu0 %v2040
    %2941 = vmatmul.bf16.gmra.mxu0 %v128
    %v2942 = vpop.f32.mrf.mxu0
    %v2943 = vadd.f32 %v2930, %v2942
    %v2944 = vpop.f32.mrf.mxu0
    %2945 = vdwg.mxu0
    %2946 = vmatpush.bf16.msra.mxu0 0
    %2947 = vmatpush.bf16.msra.mxu0 0
    %2948 = vmatpush.bf16.msra.mxu0 0
    %2949 = vmatpush.bf16.msra.mxu0 0
    %2950 = vmatpush.bf16.msra.mxu0 0
    %2951 = vmatpush.bf16.msra.mxu0 0
    %2952 = vmatpush.bf16.msra.mxu0 0
    %2953 = vmatpush.bf16.msra.mxu0 %v2104
    %2954 = vmatmul.bf16.gmra.mxu0 %v2502
    %v2955 = vpop.f32.mrf.mxu0
    %v2956 = vadd.f32 %v2943, %v2955
    %v2957 = vpop.f32.mrf.mxu0
    %2958 = vdwg.mxu0
    %2959 = vmatpush.bf16.msra.mxu0 %v1777
    %2960 = vmatpush.bf16.msra.mxu0 %v1769
    %2961 = vmatpush.bf16.msra.mxu0 %v1761
    %2962 = vmatpush.bf16.msra.mxu0 %v1753
    %2963 = vmatpush.bf16.msra.mxu0 %v1745
    %2964 = vmatpush.bf16.msra.mxu0 %v1737
    %2965 = vmatpush.bf16.msra.mxu0 %v1729
    %2966 = vmatpush.bf16.msra.mxu0 %v1721
    %2967 = vmatmul.bf16.gmra.mxu0 %v123
    %v2968 = vpop.f32.mrf.mxu0
    %v2969 = vadd.f32 %v529, %v2968
    %v2970 = vpop.f32.mrf.mxu0
    %2971 = vdwg.mxu0
    %2972 = vmatpush.bf16.msra.mxu0 %v1841
    %2973 = vmatpush.bf16.msra.mxu0 %v1833
    %2974 = vmatpush.bf16.msra.mxu0 %v1825
    %2975 = vmatpush.bf16.msra.mxu0 %v1817
    %2976 = vmatpush.bf16.msra.mxu0 %v1809
    %2977 = vmatpush.bf16.msra.mxu0 %v1801
    %2978 = vmatpush.bf16.msra.mxu0 %v1793
    %2979 = vmatpush.bf16.msra.mxu0 %v1785
    %2980 = vmatmul.bf16.gmra.mxu0 %v124
    %v2981 = vpop.f32.mrf.mxu0
    %v2982 = vadd.f32 %v2969, %v2981
    %v2983 = vpop.f32.mrf.mxu0
    %2984 = vdwg.mxu0
    %2985 = vmatpush.bf16.msra.mxu0 %v1905
    %2986 = vmatpush.bf16.msra.mxu0 %v1897
    %2987 = vmatpush.bf16.msra.mxu0 %v1889
    %2988 = vmatpush.bf16.msra.mxu0 %v1881
    %2989 = vmatpush.bf16.msra.mxu0 %v1873
    %2990 = vmatpush.bf16.msra.mxu0 %v1865
    %2991 = vmatpush.bf16.msra.mxu0 %v1857
    %2992 = vmatpush.bf16.msra.mxu0 %v1849
    %2993 = vmatmul.bf16.gmra.mxu0 %v125
    %v2994 = vpop.f32.mrf.mxu0
    %v2995 = vadd.f32 %v2982, %v2994
    %v2996 = vpop.f32.mrf.mxu0
    %2997 = vdwg.mxu0
    %2998 = vmatpush.bf16.msra.mxu0 %v1969
    %2999 = vmatpush.bf16.msra.mxu0 %v1961
    %3000 = vmatpush.bf16.msra.mxu0 %v1953
    %3001 = vmatpush.bf16.msra.mxu0 %v1945
    %3002 = vmatpush.bf16.msra.mxu0 %v1937
    %3003 = vmatpush.bf16.msra.mxu0 %v1929
    %3004 = vmatpush.bf16.msra.mxu0 %v1921
    %3005 = vmatpush.bf16.msra.mxu0 %v1913
    %3006 = vmatmul.bf16.gmra.mxu0 %v126
    %v3007 = vpop.f32.mrf.mxu0
    %v3008 = vadd.f32 %v2995, %v3007
    %v3009 = vpop.f32.mrf.mxu0
    %3010 = vdwg.mxu0
    %3011 = vmatpush.bf16.msra.mxu0 %v2033
    %3012 = vmatpush.bf16.msra.mxu0 %v2025
    %3013 = vmatpush.bf16.msra.mxu0 %v2017
    %3014 = vmatpush.bf16.msra.mxu0 %v2009
    %3015 = vmatpush.bf16.msra.mxu0 %v2001
    %3016 = vmatpush.bf16.msra.mxu0 %v1993
    %3017 = vmatpush.bf16.msra.mxu0 %v1985
    %3018 = vmatpush.bf16.msra.mxu0 %v1977
    %3019 = vmatmul.bf16.gmra.mxu0 %v127
    %v3020 = vpop.f32.mrf.mxu0
    %v3021 = vadd.f32 %v3008, %v3020
    %v3022 = vpop.f32.mrf.mxu0
    %3023 = vdwg.mxu0
    %3024 = vmatpush.bf16.msra.mxu0 %v2097
    %3025 = vmatpush.bf16.msra.mxu0 %v2089
    %3026 = vmatpush.bf16.msra.mxu0 %v2081
    %3027 = vmatpush.bf16.msra.mxu0 %v2073
    %3028 = vmatpush.bf16.msra.mxu0 %v2065
    %3029 = vmatpush.bf16.msra.mxu0 %v2057
    %3030 = vmatpush.bf16.msra.mxu0 %v2049
    %3031 = vmatpush.bf16.msra.mxu0 %v2041
    %3032 = vmatmul.bf16.gmra.mxu0 %v128
    %v3033 = vpop.f32.mrf.mxu0
    %v3034 = vadd.f32 %v3021, %v3033
    %v3035 = vpop.f32.mrf.mxu0
    %3036 = vdwg.mxu0
    %3037 = vmatpush.bf16.msra.mxu0 0
    %3038 = vmatpush.bf16.msra.mxu0 0
    %3039 = vmatpush.bf16.msra.mxu0 0
    %3040 = vmatpush.bf16.msra.mxu0 0
    %3041 = vmatpush.bf16.msra.mxu0 0
    %3042 = vmatpush.bf16.msra.mxu0 0
    %3043 = vmatpush.bf16.msra.mxu0 0
    %3044 = vmatpush.bf16.msra.mxu0 %v2105
    %3045 = vmatmul.bf16.gmra.mxu0 %v2502
    %v3046 = vpop.f32.mrf.mxu0
    %v3047 = vadd.f32 %v3034, %v3046
    %v3048 = vpop.f32.mrf.mxu0
    %3049 = vdwg.mxu0
    %3050 = vmatpush.bf16.msra.mxu0 %v1778
    %3051 = vmatpush.bf16.msra.mxu0 %v1770
    %3052 = vmatpush.bf16.msra.mxu0 %v1762
    %3053 = vmatpush.bf16.msra.mxu0 %v1754
    %3054 = vmatpush.bf16.msra.mxu0 %v1746
    %3055 = vmatpush.bf16.msra.mxu0 %v1738
    %3056 = vmatpush.bf16.msra.mxu0 %v1730
    %3057 = vmatpush.bf16.msra.mxu0 %v1722
    %3058 = vmatmul.bf16.gmra.mxu0 %v123
    %v3059 = vpop.f32.mrf.mxu0
    %v3060 = vadd.f32 %v530, %v3059
    %v3061 = vpop.f32.mrf.mxu0
    %3062 = vdwg.mxu0
    %3063 = vmatpush.bf16.msra.mxu0 %v1842
    %3064 = vmatpush.bf16.msra.mxu0 %v1834
    %3065 = vmatpush.bf16.msra.mxu0 %v1826
    %3066 = vmatpush.bf16.msra.mxu0 %v1818
    %3067 = vmatpush.bf16.msra.mxu0 %v1810
    %3068 = vmatpush.bf16.msra.mxu0 %v1802
    %3069 = vmatpush.bf16.msra.mxu0 %v1794
    %3070 = vmatpush.bf16.msra.mxu0 %v1786
    %3071 = vmatmul.bf16.gmra.mxu0 %v124
    %v3072 = vpop.f32.mrf.mxu0
    %v3073 = vadd.f32 %v3060, %v3072
    %v3074 = vpop.f32.mrf.mxu0
    %3075 = vdwg.mxu0
    %3076 = vmatpush.bf16.msra.mxu0 %v1906
    %3077 = vmatpush.bf16.msra.mxu0 %v1898
    %3078 = vmatpush.bf16.msra.mxu0 %v1890
    %3079 = vmatpush.bf16.msra.mxu0 %v1882
    %3080 = vmatpush.bf16.msra.mxu0 %v1874
    %3081 = vmatpush.bf16.msra.mxu0 %v1866
    %3082 = vmatpush.bf16.msra.mxu0 %v1858
    %3083 = vmatpush.bf16.msra.mxu0 %v1850
    %3084 = vmatmul.bf16.gmra.mxu0 %v125
    %v3085 = vpop.f32.mrf.mxu0
    %v3086 = vadd.f32 %v3073, %v3085
    %v3087 = vpop.f32.mrf.mxu0
    %3088 = vdwg.mxu0
    %3089 = vmatpush.bf16.msra.mxu0 %v1970
    %3090 = vmatpush.bf16.msra.mxu0 %v1962
    %3091 = vmatpush.bf16.msra.mxu0 %v1954
    %3092 = vmatpush.bf16.msra.mxu0 %v1946
    %3093 = vmatpush.bf16.msra.mxu0 %v1938
    %3094 = vmatpush.bf16.msra.mxu0 %v1930
    %3095 = vmatpush.bf16.msra.mxu0 %v1922
    %3096 = vmatpush.bf16.msra.mxu0 %v1914
    %3097 = vmatmul.bf16.gmra.mxu0 %v126
    %v3098 = vpop.f32.mrf.mxu0
    %v3099 = vadd.f32 %v3086, %v3098
    %v3100 = vpop.f32.mrf.mxu0
    %3101 = vdwg.mxu0
    %3102 = vmatpush.bf16.msra.mxu0 %v2034
    %3103 = vmatpush.bf16.msra.mxu0 %v2026
    %3104 = vmatpush.bf16.msra.mxu0 %v2018
    %3105 = vmatpush.bf16.msra.mxu0 %v2010
    %3106 = vmatpush.bf16.msra.mxu0 %v2002
    %3107 = vmatpush.bf16.msra.mxu0 %v1994
    %3108 = vmatpush.bf16.msra.mxu0 %v1986
    %3109 = vmatpush.bf16.msra.mxu0 %v1978
    %3110 = vmatmul.bf16.gmra.mxu0 %v127
    %v3111 = vpop.f32.mrf.mxu0
    %v3112 = vadd.f32 %v3099, %v3111
    %v3113 = vpop.f32.mrf.mxu0
    %3114 = vdwg.mxu0
    %3115 = vmatpush.bf16.msra.mxu0 %v2098
    %3116 = vmatpush.bf16.msra.mxu0 %v2090
    %3117 = vmatpush.bf16.msra.mxu0 %v2082
    %3118 = vmatpush.bf16.msra.mxu0 %v2074
    %3119 = vmatpush.bf16.msra.mxu0 %v2066
    %3120 = vmatpush.bf16.msra.mxu0 %v2058
    %3121 = vmatpush.bf16.msra.mxu0 %v2050
    %3122 = vmatpush.bf16.msra.mxu0 %v2042
    %3123 = vmatmul.bf16.gmra.mxu0 %v128
    %v3124 = vpop.f32.mrf.mxu0
    %v3125 = vadd.f32 %v3112, %v3124
    %v3126 = vpop.f32.mrf.mxu0
    %3127 = vdwg.mxu0
    %3128 = vmatpush.bf16.msra.mxu0 0
    %3129 = vmatpush.bf16.msra.mxu0 0
    %3130 = vmatpush.bf16.msra.mxu0 0
    %3131 = vmatpush.bf16.msra.mxu0 0
    %3132 = vmatpush.bf16.msra.mxu0 0
    %3133 = vmatpush.bf16.msra.mxu0 0
    %3134 = vmatpush.bf16.msra.mxu0 0
    %3135 = vmatpush.bf16.msra.mxu0 %v2106
    %3136 = vmatmul.bf16.gmra.mxu0 %v2502
    %v3137 = vpop.f32.mrf.mxu0
    %v3138 = vadd.f32 %v3125, %v3137
    %v3139 = vpop.f32.mrf.mxu0
    %3140 = vdwg.mxu0
    %3141 = vmatpush.bf16.msra.mxu0 %v1779
    %3142 = vmatpush.bf16.msra.mxu0 %v1771
    %3143 = vmatpush.bf16.msra.mxu0 %v1763
    %3144 = vmatpush.bf16.msra.mxu0 %v1755
    %3145 = vmatpush.bf16.msra.mxu0 %v1747
    %3146 = vmatpush.bf16.msra.mxu0 %v1739
    %3147 = vmatpush.bf16.msra.mxu0 %v1731
    %3148 = vmatpush.bf16.msra.mxu0 %v1723
    %3149 = vmatmul.bf16.gmra.mxu0 %v123
    %v3150 = vpop.f32.mrf.mxu0
    %v3151 = vadd.f32 %v531, %v3150
    %v3152 = vpop.f32.mrf.mxu0
    %3153 = vdwg.mxu0
    %3154 = vmatpush.bf16.msra.mxu0 %v1843
    %3155 = vmatpush.bf16.msra.mxu0 %v1835
    %3156 = vmatpush.bf16.msra.mxu0 %v1827
    %3157 = vmatpush.bf16.msra.mxu0 %v1819
    %3158 = vmatpush.bf16.msra.mxu0 %v1811
    %3159 = vmatpush.bf16.msra.mxu0 %v1803
    %3160 = vmatpush.bf16.msra.mxu0 %v1795
    %3161 = vmatpush.bf16.msra.mxu0 %v1787
    %3162 = vmatmul.bf16.gmra.mxu0 %v124
    %v3163 = vpop.f32.mrf.mxu0
    %v3164 = vadd.f32 %v3151, %v3163
    %v3165 = vpop.f32.mrf.mxu0
    %3166 = vdwg.mxu0
    %3167 = vmatpush.bf16.msra.mxu0 %v1907
    %3168 = vmatpush.bf16.msra.mxu0 %v1899
    %3169 = vmatpush.bf16.msra.mxu0 %v1891
    %3170 = vmatpush.bf16.msra.mxu0 %v1883
    %3171 = vmatpush.bf16.msra.mxu0 %v1875
    %3172 = vmatpush.bf16.msra.mxu0 %v1867
    %3173 = vmatpush.bf16.msra.mxu0 %v1859
    %3174 = vmatpush.bf16.msra.mxu0 %v1851
    %3175 = vmatmul.bf16.gmra.mxu0 %v125
    %v3176 = vpop.f32.mrf.mxu0
    %v3177 = vadd.f32 %v3164, %v3176
    %v3178 = vpop.f32.mrf.mxu0
    %3179 = vdwg.mxu0
    %3180 = vmatpush.bf16.msra.mxu0 %v1971
    %3181 = vmatpush.bf16.msra.mxu0 %v1963
    %3182 = vmatpush.bf16.msra.mxu0 %v1955
    %3183 = vmatpush.bf16.msra.mxu0 %v1947
    %3184 = vmatpush.bf16.msra.mxu0 %v1939
    %3185 = vmatpush.bf16.msra.mxu0 %v1931
    %3186 = vmatpush.bf16.msra.mxu0 %v1923
    %3187 = vmatpush.bf16.msra.mxu0 %v1915
    %3188 = vmatmul.bf16.gmra.mxu0 %v126
    %v3189 = vpop.f32.mrf.mxu0
    %v3190 = vadd.f32 %v3177, %v3189
    %v3191 = vpop.f32.mrf.mxu0
    %3192 = vdwg.mxu0
    %3193 = vmatpush.bf16.msra.mxu0 %v2035
    %3194 = vmatpush.bf16.msra.mxu0 %v2027
    %3195 = vmatpush.bf16.msra.mxu0 %v2019
    %3196 = vmatpush.bf16.msra.mxu0 %v2011
    %3197 = vmatpush.bf16.msra.mxu0 %v2003
    %3198 = vmatpush.bf16.msra.mxu0 %v1995
    %3199 = vmatpush.bf16.msra.mxu0 %v1987
    %3200 = vmatpush.bf16.msra.mxu0 %v1979
    %3201 = vmatmul.bf16.gmra.mxu0 %v127
    %v3202 = vpop.f32.mrf.mxu0
    %v3203 = vadd.f32 %v3190, %v3202
    %v3204 = vpop.f32.mrf.mxu0
    %3205 = vdwg.mxu0
    %3206 = vmatpush.bf16.msra.mxu0 %v2099
    %3207 = vmatpush.bf16.msra.mxu0 %v2091
    %3208 = vmatpush.bf16.msra.mxu0 %v2083
    %3209 = vmatpush.bf16.msra.mxu0 %v2075
    %3210 = vmatpush.bf16.msra.mxu0 %v2067
    %3211 = vmatpush.bf16.msra.mxu0 %v2059
    %3212 = vmatpush.bf16.msra.mxu0 %v2051
    %3213 = vmatpush.bf16.msra.mxu0 %v2043
    %3214 = vmatmul.bf16.gmra.mxu0 %v128
    %v3215 = vpop.f32.mrf.mxu0
    %v3216 = vadd.f32 %v3203, %v3215
    %v3217 = vpop.f32.mrf.mxu0
    %3218 = vdwg.mxu0
    %3219 = vmatpush.bf16.msra.mxu0 0
    %3220 = vmatpush.bf16.msra.mxu0 0
    %3221 = vmatpush.bf16.msra.mxu0 0
    %3222 = vmatpush.bf16.msra.mxu0 0
    %3223 = vmatpush.bf16.msra.mxu0 0
    %3224 = vmatpush.bf16.msra.mxu0 0
    %3225 = vmatpush.bf16.msra.mxu0 0
    %3226 = vmatpush.bf16.msra.mxu0 %v2107
    %3227 = vmatmul.bf16.gmra.mxu0 %v2502
    %v3228 = vpop.f32.mrf.mxu0
    %v3229 = vadd.f32 %v3216, %v3228
    %v3230 = vpop.f32.mrf.mxu0
    %3231 = vdwg.mxu0
    %v3232 = vmax.f32 %v2592, 0.0
    %v3233 = vmax.f32 %v2683, 0.0
    %v3234 = vmax.f32 %v2774, 0.0
    %v3235 = vmax.f32 %v2865, 0.0
    %v3236 = vmax.f32 %v2956, 0.0
    %v3237 = vmax.f32 %v3047, 0.0
    %v3238 = vmax.f32 %v3138, 0.0
    %v3239 = vmax.f32 %v3229, 0.0
    %v3240 = vpack.c.bf16 %v3232, %v3232
    %v3241 = vpack.c.bf16 %v3233, %v3233
    %v3242 = vpack.c.bf16 %v3234, %v3234
    %v3243 = vpack.c.bf16 %v3235, %v3235
    %v3244 = vpack.c.bf16 %v3236, %v3236
    %v3245 = vpack.c.bf16 %v3237, %v3237
    %v3246 = vpack.c.bf16 %v3238, %v3238
    %v3247 = vpack.c.bf16 %v3239, %v3239
    %v3248 = vld [vmem:[#allocation7] sm:$0xff]
    %v3249 = vld [vmem:[#allocation7 + $0x8] sm:$0xff]
    %v3250 = vld [vmem:[#allocation7 + $0x10] sm:$0xff]
    %v3251 = vld [vmem:[#allocation7 + $0x18] sm:$0xff]
    %v3252 = vld [vmem:[#allocation7 + $0x20] sm:$0xff]
    %v3253 = vld [vmem:[#allocation7 + $0x28] sm:$0xff]
    %v3254 = vld [vmem:[#allocation7 + $0x30] sm:$0xff]
    %v3255 = vld [vmem:[#allocation7 + $0x38] sm:$0xff]
    %v3256 = vld [vmem:[#allocation7 + $0x40] sm:$0xff]
    %v3257 = vld [vmem:[#allocation7 + $0x48] sm:$0xff]
    %v3258 = vld [vmem:[#allocation7 + $0x50] sm:$0xff]
    %v3259 = vld [vmem:[#allocation7 + $0x58] sm:$0xff]
    %v3260 = vld [vmem:[#allocation7 + $0x60] sm:$0xff]
    %v3261 = vld [vmem:[#allocation7 + $0x68] sm:$0xff]
    %v3262 = vld [vmem:[#allocation7 + $0x70] sm:$0xff]
    %v3263 = vld [vmem:[#allocation7 + $0x78] sm:$0xff]
    %v3264 = vld [vmem:[#allocation7 + $0x80] sm:$0xff]
    %v3265 = vld [vmem:[#allocation7 + $0x88] sm:$0xff]
    %v3266 = vld [vmem:[#allocation7 + $0x90] sm:$0xff]
    %v3267 = vld [vmem:[#allocation7 + $0x98] sm:$0xff]
    %v3268 = vld [vmem:[#allocation7 + $0xa0] sm:$0xff]
    %v3269 = vld [vmem:[#allocation7 + $0xa8] sm:$0xff]
    %v3270 = vld [vmem:[#allocation7 + $0xb0] sm:$0xff]
    %v3271 = vld [vmem:[#allocation7 + $0xb8] sm:$0xff]
    %v3272 = vld [vmem:[#allocation7 + $0xc0] sm:$0xff]
    %v3273 = vld [vmem:[#allocation7 + $0xc8] sm:$0xff]
    %v3274 = vld [vmem:[#allocation7 + $0xd0] sm:$0xff]
    %v3275 = vld [vmem:[#allocation7 + $0xd8] sm:$0xff]
    %v3276 = vld [vmem:[#allocation7 + $0xe0] sm:$0xff]
    %v3277 = vld [vmem:[#allocation7 + $0xe8] sm:$0xff]
    %v3278 = vld [vmem:[#allocation7 + $0xf0] sm:$0xff]
    %v3279 = vld [vmem:[#allocation7 + $0xf8] sm:$0xff]
    %v3280 = vld [vmem:[#allocation7 + $0x100] sm:$0xff]
    %v3281 = vld [vmem:[#allocation7 + $0x108] sm:$0xff]
    %v3282 = vld [vmem:[#allocation7 + $0x110] sm:$0xff]
    %v3283 = vld [vmem:[#allocation7 + $0x118] sm:$0xff]
    %v3284 = vld [vmem:[#allocation7 + $0x120] sm:$0xff]
    %v3285 = vld [vmem:[#allocation7 + $0x128] sm:$0xff]
    %v3286 = vld [vmem:[#allocation7 + $0x130] sm:$0xff]
    %v3287 = vld [vmem:[#allocation7 + $0x138] sm:$0xff]
    %v3288 = vld [vmem:[#allocation7 + $0x140] sm:$0xff]
    %v3289 = vld [vmem:[#allocation7 + $0x148] sm:$0xff]
    %v3290 = vld [vmem:[#allocation7 + $0x150] sm:$0xff]
    %v3291 = vld [vmem:[#allocation7 + $0x158] sm:$0xff]
    %v3292 = vld [vmem:[#allocation7 + $0x160] sm:$0xff]
    %v3293 = vld [vmem:[#allocation7 + $0x168] sm:$0xff]
    %v3294 = vld [vmem:[#allocation7 + $0x170] sm:$0xff]
    %v3295 = vld [vmem:[#allocation7 + $0x178] sm:$0xff]
    %v3296 = vld [vmem:[#allocation7 + $0x180] sm:$0xff]
    %v3297 = vld [vmem:[#allocation7 + $0x188] sm:$0xff]
    %v3298 = vld [vmem:[#allocation7 + $0x190] sm:$0xff]
    %v3299 = vld [vmem:[#allocation7 + $0x198] sm:$0xff]
    %v3300 = vld [vmem:[#allocation7 + $0x1a0] sm:$0xff]
    %v3301 = vld [vmem:[#allocation7 + $0x1a8] sm:$0xff]
    %v3302 = vld [vmem:[#allocation7 + $0x1b0] sm:$0xff]
    %v3303 = vld [vmem:[#allocation7 + $0x1b8] sm:$0xff]
    %v3304 = vld [vmem:[#allocation7 + $0x1c0] sm:$0xff]
    %v3305 = vld [vmem:[#allocation7 + $0x1c8] sm:$0xff]
    %v3306 = vld [vmem:[#allocation7 + $0x1d0] sm:$0xff]
    %v3307 = vld [vmem:[#allocation7 + $0x1d8] sm:$0xff]
    %v3308 = vld [vmem:[#allocation7 + $0x1e0] sm:$0xff]
    %v3309 = vld [vmem:[#allocation7 + $0x1e8] sm:$0xff]
    %v3310 = vld [vmem:[#allocation7 + $0x1f0] sm:$0xff]
    %v3311 = vld [vmem:[#allocation7 + $0x1f8] sm:$0xff]
    %v3312 = vld [vmem:[#allocation7 + $0x200] sm:$0xff]
    %v3313 = vld [vmem:[#allocation7 + $0x208] sm:$0xff]
    %v3314 = vld [vmem:[#allocation7 + $0x210] sm:$0xff]
    %v3315 = vld [vmem:[#allocation7 + $0x218] sm:$0xff]
    %v3316 = vld [vmem:[#allocation7 + $0x220] sm:$0xff]
    %v3317 = vld [vmem:[#allocation7 + $0x228] sm:$0xff]
    %v3318 = vld [vmem:[#allocation7 + $0x230] sm:$0xff]
    %v3319 = vld [vmem:[#allocation7 + $0x238] sm:$0xff]
    %v3320 = vld [vmem:[#allocation7 + $0x240] sm:$0xff]
    %v3321 = vld [vmem:[#allocation7 + $0x248] sm:$0xff]
    %v3322 = vld [vmem:[#allocation7 + $0x250] sm:$0xff]
    %v3323 = vld [vmem:[#allocation7 + $0x258] sm:$0xff]
    %v3324 = vld [vmem:[#allocation7 + $0x260] sm:$0xff]
    %v3325 = vld [vmem:[#allocation7 + $0x268] sm:$0xff]
    %v3326 = vld [vmem:[#allocation7 + $0x270] sm:$0xff]
    %v3327 = vld [vmem:[#allocation7 + $0x278] sm:$0xff]
    %v3328 = vld [vmem:[#allocation7 + $0x280] sm:$0xff]
    %v3329 = vld [vmem:[#allocation7 + $0x288] sm:$0xff]
    %v3330 = vld [vmem:[#allocation7 + $0x290] sm:$0xff]
    %v3331 = vld [vmem:[#allocation7 + $0x298] sm:$0xff]
    %v3332 = vld [vmem:[#allocation7 + $0x2a0] sm:$0xff]
    %v3333 = vld [vmem:[#allocation7 + $0x2a8] sm:$0xff]
    %v3334 = vld [vmem:[#allocation7 + $0x2b0] sm:$0xff]
    %v3335 = vld [vmem:[#allocation7 + $0x2b8] sm:$0xff]
    %v3336 = vld [vmem:[#allocation7 + $0x2c0] sm:$0xff]
    %v3337 = vld [vmem:[#allocation7 + $0x2c8] sm:$0xff]
    %v3338 = vld [vmem:[#allocation7 + $0x2d0] sm:$0xff]
    %v3339 = vld [vmem:[#allocation7 + $0x2d8] sm:$0xff]
    %v3340 = vld [vmem:[#allocation7 + $0x2e0] sm:$0xff]
    %v3341 = vld [vmem:[#allocation7 + $0x2e8] sm:$0xff]
    %v3342 = vld [vmem:[#allocation7 + $0x2f0] sm:$0xff]
    %v3343 = vld [vmem:[#allocation7 + $0x2f8] sm:$0xff]
    %v3344 = vld [vmem:[#allocation7 + $0x300] sm:$0xff]
    %v3345 = vld [vmem:[#allocation7 + $0x308] sm:$0xff]
    %v3346 = vld [vmem:[#allocation7 + $0x310] sm:$0xff]
    %v3347 = vld [vmem:[#allocation7 + $0x318] sm:$0xff]
    %v3348 = vld [vmem:[#allocation7 + $0x320] sm:$0xff]
    %v3349 = vld [vmem:[#allocation7 + $0x328] sm:$0xff]
    %v3350 = vld [vmem:[#allocation7 + $0x330] sm:$0xff]
    %v3351 = vld [vmem:[#allocation7 + $0x338] sm:$0xff]
    %v3352 = vld [vmem:[#allocation7 + $0x340] sm:$0xff]
    %v3353 = vld [vmem:[#allocation7 + $0x348] sm:$0xff]
    %v3354 = vld [vmem:[#allocation7 + $0x350] sm:$0xff]
    %v3355 = vld [vmem:[#allocation7 + $0x358] sm:$0xff]
    %v3356 = vld [vmem:[#allocation7 + $0x360] sm:$0xff]
    %v3357 = vld [vmem:[#allocation7 + $0x368] sm:$0xff]
    %v3358 = vld [vmem:[#allocation7 + $0x370] sm:$0xff]
    %v3359 = vld [vmem:[#allocation7 + $0x378] sm:$0xff]
    %v3360 = vld [vmem:[#allocation7 + $0x380] sm:$0xff]
    %v3361 = vld [vmem:[#allocation7 + $0x388] sm:$0xff]
    %v3362 = vld [vmem:[#allocation7 + $0x390] sm:$0xff]
    %v3363 = vld [vmem:[#allocation7 + $0x398] sm:$0xff]
    %v3364 = vld [vmem:[#allocation7 + $0x3a0] sm:$0xff]
    %v3365 = vld [vmem:[#allocation7 + $0x3a8] sm:$0xff]
    %v3366 = vld [vmem:[#allocation7 + $0x3b0] sm:$0xff]
    %v3367 = vld [vmem:[#allocation7 + $0x3b8] sm:$0xff]
    %v3368 = vld [vmem:[#allocation7 + $0x3c0] sm:$0xff]
    %v3369 = vld [vmem:[#allocation7 + $0x3c8] sm:$0xff]
    %v3370 = vld [vmem:[#allocation7 + $0x3d0] sm:$0xff]
    %v3371 = vld [vmem:[#allocation7 + $0x3d8] sm:$0xff]
    %v3372 = vld [vmem:[#allocation7 + $0x3e0] sm:$0xff]
    %v3373 = vld [vmem:[#allocation7 + $0x3e8] sm:$0xff]
    %v3374 = vld [vmem:[#allocation7 + $0x3f0] sm:$0xff]
    %v3375 = vld [vmem:[#allocation7 + $0x3f8] sm:$0xff]
    %v3376 = vld [vmem:[#allocation7 + $0x400] sm:$0xff]
    %v3377 = vld [vmem:[#allocation7 + $0x408] sm:$0xff]
    %v3378 = vld [vmem:[#allocation7 + $0x410] sm:$0xff]
    %v3379 = vld [vmem:[#allocation7 + $0x418] sm:$0xff]
    %v3380 = vld [vmem:[#allocation7 + $0x420] sm:$0xff]
    %v3381 = vld [vmem:[#allocation7 + $0x428] sm:$0xff]
    %v3382 = vld [vmem:[#allocation7 + $0x430] sm:$0xff]
    %v3383 = vld [vmem:[#allocation7 + $0x438] sm:$0xff]
    %v3384 = vld [vmem:[#allocation7 + $0x440] sm:$0xff]
    %v3385 = vld [vmem:[#allocation7 + $0x448] sm:$0xff]
    %v3386 = vld [vmem:[#allocation7 + $0x450] sm:$0xff]
    %v3387 = vld [vmem:[#allocation7 + $0x458] sm:$0xff]
    %v3388 = vld [vmem:[#allocation7 + $0x460] sm:$0xff]
    %v3389 = vld [vmem:[#allocation7 + $0x468] sm:$0xff]
    %v3390 = vld [vmem:[#allocation7 + $0x470] sm:$0xff]
    %v3391 = vld [vmem:[#allocation7 + $0x478] sm:$0xff]
    %v3392 = vld [vmem:[#allocation7 + $0x480] sm:$0xff]
    %v3393 = vld [vmem:[#allocation7 + $0x488] sm:$0xff]
    %v3394 = vld [vmem:[#allocation7 + $0x490] sm:$0xff]
    %v3395 = vld [vmem:[#allocation7 + $0x498] sm:$0xff]
    %v3396 = vld [vmem:[#allocation7 + $0x4a0] sm:$0xff]
    %v3397 = vld [vmem:[#allocation7 + $0x4a8] sm:$0xff]
    %v3398 = vld [vmem:[#allocation7 + $0x4b0] sm:$0xff]
    %v3399 = vld [vmem:[#allocation7 + $0x4b8] sm:$0xff]
    %v3400 = vld [vmem:[#allocation7 + $0x4c0] sm:$0xff]
    %v3401 = vld [vmem:[#allocation7 + $0x4c8] sm:$0xff]
    %v3402 = vld [vmem:[#allocation7 + $0x4d0] sm:$0xff]
    %v3403 = vld [vmem:[#allocation7 + $0x4d8] sm:$0xff]
    %v3404 = vld [vmem:[#allocation7 + $0x4e0] sm:$0xff]
    %v3405 = vld [vmem:[#allocation7 + $0x4e8] sm:$0xff]
    %v3406 = vld [vmem:[#allocation7 + $0x4f0] sm:$0xff]
    %v3407 = vld [vmem:[#allocation7 + $0x4f8] sm:$0xff]
    %v3408 = vld [vmem:[#allocation7 + $0x500] sm:$0xff]
    %v3409 = vld [vmem:[#allocation7 + $0x508] sm:$0xff]
    %v3410 = vld [vmem:[#allocation7 + $0x510] sm:$0xff]
    %v3411 = vld [vmem:[#allocation7 + $0x518] sm:$0xff]
    %v3412 = vld [vmem:[#allocation7 + $0x520] sm:$0xff]
    %v3413 = vld [vmem:[#allocation7 + $0x528] sm:$0xff]
    %v3414 = vld [vmem:[#allocation7 + $0x530] sm:$0xff]
    %v3415 = vld [vmem:[#allocation7 + $0x538] sm:$0xff]
    %v3416 = vld [vmem:[#allocation7 + $0x540] sm:$0xff]
    %v3417 = vld [vmem:[#allocation7 + $0x548] sm:$0xff]
    %v3418 = vld [vmem:[#allocation7 + $0x550] sm:$0xff]
    %v3419 = vld [vmem:[#allocation7 + $0x558] sm:$0xff]
    %v3420 = vld [vmem:[#allocation7 + $0x560] sm:$0xff]
    %v3421 = vld [vmem:[#allocation7 + $0x568] sm:$0xff]
    %v3422 = vld [vmem:[#allocation7 + $0x570] sm:$0xff]
    %v3423 = vld [vmem:[#allocation7 + $0x578] sm:$0xff]
    %v3424 = vld [vmem:[#allocation7 + $0x580] sm:$0xff]
    %v3425 = vld [vmem:[#allocation7 + $0x588] sm:$0xff]
    %v3426 = vld [vmem:[#allocation7 + $0x590] sm:$0xff]
    %v3427 = vld [vmem:[#allocation7 + $0x598] sm:$0xff]
    %v3428 = vld [vmem:[#allocation7 + $0x5a0] sm:$0xff]
    %v3429 = vld [vmem:[#allocation7 + $0x5a8] sm:$0xff]
    %v3430 = vld [vmem:[#allocation7 + $0x5b0] sm:$0xff]
    %v3431 = vld [vmem:[#allocation7 + $0x5b8] sm:$0xff]
    %v3432 = vld [vmem:[#allocation7 + $0x5c0] sm:$0xff]
    %v3433 = vld [vmem:[#allocation7 + $0x5c8] sm:$0xff]
    %v3434 = vld [vmem:[#allocation7 + $0x5d0] sm:$0xff]
    %v3435 = vld [vmem:[#allocation7 + $0x5d8] sm:$0xff]
    %v3436 = vld [vmem:[#allocation7 + $0x5e0] sm:$0xff]
    %v3437 = vld [vmem:[#allocation7 + $0x5e8] sm:$0xff]
    %v3438 = vld [vmem:[#allocation7 + $0x5f0] sm:$0xff]
    %v3439 = vld [vmem:[#allocation7 + $0x5f8] sm:$0xff]
    %v3440 = vld [vmem:[#allocation7 + $0x600] sm:$0xff]
    %v3441 = vld [vmem:[#allocation7 + $0x608] sm:$0xff]
    %v3442 = vld [vmem:[#allocation7 + $0x610] sm:$0xff]
    %v3443 = vld [vmem:[#allocation7 + $0x618] sm:$0xff]
    %v3444 = vld [vmem:[#allocation7 + $0x620] sm:$0xff]
    %v3445 = vld [vmem:[#allocation7 + $0x628] sm:$0xff]
    %v3446 = vld [vmem:[#allocation7 + $0x630] sm:$0xff]
    %v3447 = vld [vmem:[#allocation7 + $0x638] sm:$0xff]
    %v3448 = vld [vmem:[#allocation7 + $0x640] sm:$0xff]
    %v3449 = vld [vmem:[#allocation7 + $0x648] sm:$0xff]
    %v3450 = vld [vmem:[#allocation7 + $0x650] sm:$0xff]
    %v3451 = vld [vmem:[#allocation7 + $0x658] sm:$0xff]
    %v3452 = vld [vmem:[#allocation7 + $0x660] sm:$0xff]
    %v3453 = vld [vmem:[#allocation7 + $0x668] sm:$0xff]
    %v3454 = vld [vmem:[#allocation7 + $0x670] sm:$0xff]
    %v3455 = vld [vmem:[#allocation7 + $0x678] sm:$0xff]
    %v3456 = vld [vmem:[#allocation7 + $0x680] sm:$0xff]
    %v3457 = vld [vmem:[#allocation7 + $0x688] sm:$0xff]
    %v3458 = vld [vmem:[#allocation7 + $0x690] sm:$0xff]
    %v3459 = vld [vmem:[#allocation7 + $0x698] sm:$0xff]
    %v3460 = vld [vmem:[#allocation7 + $0x6a0] sm:$0xff]
    %v3461 = vld [vmem:[#allocation7 + $0x6a8] sm:$0xff]
    %v3462 = vld [vmem:[#allocation7 + $0x6b0] sm:$0xff]
    %v3463 = vld [vmem:[#allocation7 + $0x6b8] sm:$0xff]
    %v3464 = vld [vmem:[#allocation7 + $0x6c0] sm:$0xff]
    %v3465 = vld [vmem:[#allocation7 + $0x6c8] sm:$0xff]
    %v3466 = vld [vmem:[#allocation7 + $0x6d0] sm:$0xff]
    %v3467 = vld [vmem:[#allocation7 + $0x6d8] sm:$0xff]
    %v3468 = vld [vmem:[#allocation7 + $0x6e0] sm:$0xff]
    %v3469 = vld [vmem:[#allocation7 + $0x6e8] sm:$0xff]
    %v3470 = vld [vmem:[#allocation7 + $0x6f0] sm:$0xff]
    %v3471 = vld [vmem:[#allocation7 + $0x6f8] sm:$0xff]
    %v3472 = vld [vmem:[#allocation7 + $0x700] sm:$0xff]
    %v3473 = vld [vmem:[#allocation7 + $0x708] sm:$0xff]
    %v3474 = vld [vmem:[#allocation7 + $0x710] sm:$0xff]
    %v3475 = vld [vmem:[#allocation7 + $0x718] sm:$0xff]
    %v3476 = vld [vmem:[#allocation7 + $0x720] sm:$0xff]
    %v3477 = vld [vmem:[#allocation7 + $0x728] sm:$0xff]
    %v3478 = vld [vmem:[#allocation7 + $0x730] sm:$0xff]
    %v3479 = vld [vmem:[#allocation7 + $0x738] sm:$0xff]
    %v3480 = vld [vmem:[#allocation7 + $0x740] sm:$0xff]
    %v3481 = vld [vmem:[#allocation7 + $0x748] sm:$0xff]
    %v3482 = vld [vmem:[#allocation7 + $0x750] sm:$0xff]
    %v3483 = vld [vmem:[#allocation7 + $0x758] sm:$0xff]
    %v3484 = vld [vmem:[#allocation7 + $0x760] sm:$0xff]
    %v3485 = vld [vmem:[#allocation7 + $0x768] sm:$0xff]
    %v3486 = vld [vmem:[#allocation7 + $0x770] sm:$0xff]
    %v3487 = vld [vmem:[#allocation7 + $0x778] sm:$0xff]
    %v3488 = vld [vmem:[#allocation7 + $0x780] sm:$0xff]
    %v3489 = vld [vmem:[#allocation7 + $0x788] sm:$0xff]
    %v3490 = vld [vmem:[#allocation7 + $0x790] sm:$0xff]
    %v3491 = vld [vmem:[#allocation7 + $0x798] sm:$0xff]
    %v3492 = vld [vmem:[#allocation7 + $0x7a0] sm:$0xff]
    %v3493 = vld [vmem:[#allocation7 + $0x7a8] sm:$0xff]
    %v3494 = vld [vmem:[#allocation7 + $0x7b0] sm:$0xff]
    %v3495 = vld [vmem:[#allocation7 + $0x7b8] sm:$0xff]
    %v3496 = vld [vmem:[#allocation7 + $0x7c0] sm:$0xff]
    %v3497 = vld [vmem:[#allocation7 + $0x7c8] sm:$0xff]
    %v3498 = vld [vmem:[#allocation7 + $0x7d0] sm:$0xff]
    %v3499 = vld [vmem:[#allocation7 + $0x7d8] sm:$0xff]
    %v3500 = vld [vmem:[#allocation7 + $0x7e0] sm:$0xff]
    %v3501 = vld [vmem:[#allocation7 + $0x7e8] sm:$0xff]
    %v3502 = vld [vmem:[#allocation7 + $0x7f0] sm:$0xff]
    %v3503 = vld [vmem:[#allocation7 + $0x7f8] sm:$0xff]
    %v3504 = vld [vmem:[#allocation7 + $0x800] sm:$0xff]
    %v3505 = vld [vmem:[#allocation7 + $0x808] sm:$0xff]
    %v3506 = vld [vmem:[#allocation7 + $0x810] sm:$0xff]
    %v3507 = vld [vmem:[#allocation7 + $0x818] sm:$0xff]
    %v3508 = vld [vmem:[#allocation7 + $0x820] sm:$0xff]
    %v3509 = vld [vmem:[#allocation7 + $0x828] sm:$0xff]
    %v3510 = vld [vmem:[#allocation7 + $0x830] sm:$0xff]
    %v3511 = vld [vmem:[#allocation7 + $0x838] sm:$0xff]
    %v3512 = vld [vmem:[#allocation7 + $0x840] sm:$0xff]
    %v3513 = vld [vmem:[#allocation7 + $0x848] sm:$0xff]
    %v3514 = vld [vmem:[#allocation7 + $0x850] sm:$0xff]
    %v3515 = vld [vmem:[#allocation7 + $0x858] sm:$0xff]
    %v3516 = vld [vmem:[#allocation7 + $0x860] sm:$0xff]
    %v3517 = vld [vmem:[#allocation7 + $0x868] sm:$0xff]
    %v3518 = vld [vmem:[#allocation7 + $0x870] sm:$0xff]
    %v3519 = vld [vmem:[#allocation7 + $0x878] sm:$0xff]
    %v3520 = vld [vmem:[#allocation7 + $0x880] sm:$0xff]
    %v3521 = vld [vmem:[#allocation7 + $0x888] sm:$0xff]
    %v3522 = vld [vmem:[#allocation7 + $0x890] sm:$0xff]
    %v3523 = vld [vmem:[#allocation7 + $0x898] sm:$0xff]
    %v3524 = vld [vmem:[#allocation7 + $0x8a0] sm:$0xff]
    %v3525 = vld [vmem:[#allocation7 + $0x8a8] sm:$0xff]
    %v3526 = vld [vmem:[#allocation7 + $0x8b0] sm:$0xff]
    %v3527 = vld [vmem:[#allocation7 + $0x8b8] sm:$0xff]
    %v3528 = vld [vmem:[#allocation7 + $0x8c0] sm:$0xff]
    %v3529 = vld [vmem:[#allocation7 + $0x8c8] sm:$0xff]
    %v3530 = vld [vmem:[#allocation7 + $0x8d0] sm:$0xff]
    %v3531 = vld [vmem:[#allocation7 + $0x8d8] sm:$0xff]
    %v3532 = vld [vmem:[#allocation7 + $0x8e0] sm:$0xff]
    %v3533 = vld [vmem:[#allocation7 + $0x8e8] sm:$0xff]
    %v3534 = vld [vmem:[#allocation7 + $0x8f0] sm:$0xff]
    %v3535 = vld [vmem:[#allocation7 + $0x8f8] sm:$0xff]
    %v3536 = vld [vmem:[#allocation7 + $0x900] sm:$0xff]
    %v3537 = vld [vmem:[#allocation7 + $0x908] sm:$0xff]
    %v3538 = vld [vmem:[#allocation7 + $0x910] sm:$0xff]
    %v3539 = vld [vmem:[#allocation7 + $0x918] sm:$0xff]
    %v3540 = vld [vmem:[#allocation7 + $0x920] sm:$0xff]
    %v3541 = vld [vmem:[#allocation7 + $0x928] sm:$0xff]
    %v3542 = vld [vmem:[#allocation7 + $0x930] sm:$0xff]
    %v3543 = vld [vmem:[#allocation7 + $0x938] sm:$0xff]
    %v3544 = vld [vmem:[#allocation7 + $0x940] sm:$0xff]
    %v3545 = vld [vmem:[#allocation7 + $0x948] sm:$0xff]
    %v3546 = vld [vmem:[#allocation7 + $0x950] sm:$0xff]
    %v3547 = vld [vmem:[#allocation7 + $0x958] sm:$0xff]
    %v3548 = vld [vmem:[#allocation7 + $0x960] sm:$0xff]
    %v3549 = vld [vmem:[#allocation7 + $0x968] sm:$0xff]
    %v3550 = vld [vmem:[#allocation7 + $0x970] sm:$0xff]
    %v3551 = vld [vmem:[#allocation7 + $0x978] sm:$0xff]
    %v3552 = vld [vmem:[#allocation7 + $0x980] sm:$0xff]
    %v3553 = vld [vmem:[#allocation7 + $0x988] sm:$0xff]
    %v3554 = vld [vmem:[#allocation7 + $0x990] sm:$0xff]
    %v3555 = vld [vmem:[#allocation7 + $0x998] sm:$0xff]
    %v3556 = vld [vmem:[#allocation7 + $0x9a0] sm:$0xff]
    %v3557 = vld [vmem:[#allocation7 + $0x9a8] sm:$0xff]
    %v3558 = vld [vmem:[#allocation7 + $0x9b0] sm:$0xff]
    %v3559 = vld [vmem:[#allocation7 + $0x9b8] sm:$0xff]
    %v3560 = vld [vmem:[#allocation7 + $0x9c0] sm:$0xff]
    %v3561 = vld [vmem:[#allocation7 + $0x9c8] sm:$0xff]
    %v3562 = vld [vmem:[#allocation7 + $0x9d0] sm:$0xff]
    %v3563 = vld [vmem:[#allocation7 + $0x9d8] sm:$0xff]
    %v3564 = vld [vmem:[#allocation7 + $0x9e0] sm:$0xff]
    %v3565 = vld [vmem:[#allocation7 + $0x9e8] sm:$0xff]
    %v3566 = vld [vmem:[#allocation7 + $0x9f0] sm:$0xff]
    %v3567 = vld [vmem:[#allocation7 + $0x9f8] sm:$0xff]
    %v3568 = vld [vmem:[#allocation7 + $0xa00] sm:$0xff]
    %v3569 = vld [vmem:[#allocation7 + $0xa08] sm:$0xff]
    %v3570 = vld [vmem:[#allocation7 + $0xa10] sm:$0xff]
    %v3571 = vld [vmem:[#allocation7 + $0xa18] sm:$0xff]
    %v3572 = vld [vmem:[#allocation7 + $0xa20] sm:$0xff]
    %v3573 = vld [vmem:[#allocation7 + $0xa28] sm:$0xff]
    %v3574 = vld [vmem:[#allocation7 + $0xa30] sm:$0xff]
    %v3575 = vld [vmem:[#allocation7 + $0xa38] sm:$0xff]
    %v3576 = vld [vmem:[#allocation7 + $0xa40] sm:$0xff]
    %v3577 = vld [vmem:[#allocation7 + $0xa48] sm:$0xff]
    %v3578 = vld [vmem:[#allocation7 + $0xa50] sm:$0xff]
    %v3579 = vld [vmem:[#allocation7 + $0xa58] sm:$0xff]
    %v3580 = vld [vmem:[#allocation7 + $0xa60] sm:$0xff]
    %v3581 = vld [vmem:[#allocation7 + $0xa68] sm:$0xff]
    %v3582 = vld [vmem:[#allocation7 + $0xa70] sm:$0xff]
    %v3583 = vld [vmem:[#allocation7 + $0xa78] sm:$0xff]
    %v3584 = vld [vmem:[#allocation7 + $0xa80] sm:$0xff]
    %v3585 = vld [vmem:[#allocation7 + $0xa88] sm:$0xff]
    %v3586 = vld [vmem:[#allocation7 + $0xa90] sm:$0xff]
    %v3587 = vld [vmem:[#allocation7 + $0xa98] sm:$0xff]
    %v3588 = vld [vmem:[#allocation7 + $0xaa0] sm:$0xff]
    %v3589 = vld [vmem:[#allocation7 + $0xaa8] sm:$0xff]
    %v3590 = vld [vmem:[#allocation7 + $0xab0] sm:$0xff]
    %v3591 = vld [vmem:[#allocation7 + $0xab8] sm:$0xff]
    %v3592 = vld [vmem:[#allocation7 + $0xac0] sm:$0xff]
    %v3593 = vld [vmem:[#allocation7 + $0xac8] sm:$0xff]
    %v3594 = vld [vmem:[#allocation7 + $0xad0] sm:$0xff]
    %v3595 = vld [vmem:[#allocation7 + $0xad8] sm:$0xff]
    %v3596 = vld [vmem:[#allocation7 + $0xae0] sm:$0xff]
    %v3597 = vld [vmem:[#allocation7 + $0xae8] sm:$0xff]
    %v3598 = vld [vmem:[#allocation7 + $0xaf0] sm:$0xff]
    %v3599 = vld [vmem:[#allocation7 + $0xaf8] sm:$0xff]
    %v3600 = vld [vmem:[#allocation7 + $0xb00] sm:$0xff]
    %v3601 = vld [vmem:[#allocation7 + $0xb08] sm:$0xff]
    %v3602 = vld [vmem:[#allocation7 + $0xb10] sm:$0xff]
    %v3603 = vld [vmem:[#allocation7 + $0xb18] sm:$0xff]
    %v3604 = vld [vmem:[#allocation7 + $0xb20] sm:$0xff]
    %v3605 = vld [vmem:[#allocation7 + $0xb28] sm:$0xff]
    %v3606 = vld [vmem:[#allocation7 + $0xb30] sm:$0xff]
    %v3607 = vld [vmem:[#allocation7 + $0xb38] sm:$0xff]
    %v3608 = vld [vmem:[#allocation7 + $0xb40] sm:$0xff]
    %v3609 = vld [vmem:[#allocation7 + $0xb48] sm:$0xff]
    %v3610 = vld [vmem:[#allocation7 + $0xb50] sm:$0xff]
    %v3611 = vld [vmem:[#allocation7 + $0xb58] sm:$0xff]
    %v3612 = vld [vmem:[#allocation7 + $0xb60] sm:$0xff]
    %v3613 = vld [vmem:[#allocation7 + $0xb68] sm:$0xff]
    %v3614 = vld [vmem:[#allocation7 + $0xb70] sm:$0xff]
    %v3615 = vld [vmem:[#allocation7 + $0xb78] sm:$0xff]
    %v3616 = vld [vmem:[#allocation7 + $0xb80] sm:$0xff]
    %v3617 = vld [vmem:[#allocation7 + $0xb88] sm:$0xff]
    %v3618 = vld [vmem:[#allocation7 + $0xb90] sm:$0xff]
    %v3619 = vld [vmem:[#allocation7 + $0xb98] sm:$0xff]
    %v3620 = vld [vmem:[#allocation7 + $0xba0] sm:$0xff]
    %v3621 = vld [vmem:[#allocation7 + $0xba8] sm:$0xff]
    %v3622 = vld [vmem:[#allocation7 + $0xbb0] sm:$0xff]
    %v3623 = vld [vmem:[#allocation7 + $0xbb8] sm:$0xff]
    %v3624 = vld [vmem:[#allocation7 + $0xbc0] sm:$0xff]
    %v3625 = vld [vmem:[#allocation7 + $0xbc8] sm:$0xff]
    %v3626 = vld [vmem:[#allocation7 + $0xbd0] sm:$0xff]
    %v3627 = vld [vmem:[#allocation7 + $0xbd8] sm:$0xff]
    %v3628 = vld [vmem:[#allocation7 + $0xbe0] sm:$0xff]
    %v3629 = vld [vmem:[#allocation7 + $0xbe8] sm:$0xff]
    %v3630 = vld [vmem:[#allocation7 + $0xbf0] sm:$0xff]
    %v3631 = vld [vmem:[#allocation7 + $0xbf8] sm:$0xff]
    %v3632 = vld [vmem:[#allocation7 + $0xc00] sm:$0xff]
    %v3633 = vld [vmem:[#allocation7 + $0xc08] sm:$0xff]
    %v3634 = vld [vmem:[#allocation7 + $0xc10] sm:$0xff]
    %v3635 = vld [vmem:[#allocation7 + $0xc18] sm:$0xff]
    %v3636 = vld [vmem:[#allocation7 + $0xc20] sm:$0xff]
    %v3637 = vld [vmem:[#allocation7 + $0xc28] sm:$0xff]
    %v3638 = vld [vmem:[#allocation7 + $0xc30] sm:$0xff]
    %v3639 = vld [vmem:[#allocation7 + $0xc38] sm:$0xff]
    %v3640 = vld [vmem:[#allocation7 + $0xc40] sm:$0xff]
    %v3641 = vld [vmem:[#allocation7 + $0xc48] sm:$0xff]
    %v3642 = vld [vmem:[#allocation7 + $0xc50] sm:$0xff]
    %v3643 = vld [vmem:[#allocation7 + $0xc58] sm:$0xff]
    %v3644 = vld [vmem:[#allocation7 + $0xc60] sm:$0xff]
    %v3645 = vld [vmem:[#allocation7 + $0xc68] sm:$0xff]
    %v3646 = vld [vmem:[#allocation7 + $0xc70] sm:$0xff]
    %v3647 = vld [vmem:[#allocation7 + $0xc78] sm:$0xff]
    %v3648 = vld [vmem:[#allocation7 + $0xc80] sm:$0xff]
    %v3649 = vld [vmem:[#allocation7 + $0xc88] sm:$0xff]
    %v3650 = vld [vmem:[#allocation7 + $0xc90] sm:$0xff]
    %v3651 = vld [vmem:[#allocation7 + $0xc98] sm:$0xff]
    %v3652 = vld [vmem:[#allocation7 + $0xca0] sm:$0xff]
    %v3653 = vld [vmem:[#allocation7 + $0xca8] sm:$0xff]
    %v3654 = vld [vmem:[#allocation7 + $0xcb0] sm:$0xff]
    %v3655 = vld [vmem:[#allocation7 + $0xcb8] sm:$0xff]
    %v3656 = vld [vmem:[#allocation7 + $0xcc0] sm:$0xff]
    %v3657 = vld [vmem:[#allocation7 + $0xcc8] sm:$0xff]
    %v3658 = vld [vmem:[#allocation7 + $0xcd0] sm:$0xff]
    %v3659 = vld [vmem:[#allocation7 + $0xcd8] sm:$0xff]
    %v3660 = vld [vmem:[#allocation7 + $0xce0] sm:$0xff]
    %v3661 = vld [vmem:[#allocation7 + $0xce8] sm:$0xff]
    %v3662 = vld [vmem:[#allocation7 + $0xcf0] sm:$0xff]
    %v3663 = vld [vmem:[#allocation7 + $0xcf8] sm:$0xff]
    %v3664 = vld [vmem:[#allocation7 + $0xd00] sm:$0xff]
    %v3665 = vld [vmem:[#allocation7 + $0xd08] sm:$0xff]
    %v3666 = vld [vmem:[#allocation7 + $0xd10] sm:$0xff]
    %v3667 = vld [vmem:[#allocation7 + $0xd18] sm:$0xff]
    %v3668 = vld [vmem:[#allocation7 + $0xd20] sm:$0xff]
    %v3669 = vld [vmem:[#allocation7 + $0xd28] sm:$0xff]
    %v3670 = vld [vmem:[#allocation7 + $0xd30] sm:$0xff]
    %v3671 = vld [vmem:[#allocation7 + $0xd38] sm:$0xff]
    %v3672 = vld [vmem:[#allocation7 + $0xd40] sm:$0xff]
    %v3673 = vld [vmem:[#allocation7 + $0xd48] sm:$0xff]
    %v3674 = vld [vmem:[#allocation7 + $0xd50] sm:$0xff]
    %v3675 = vld [vmem:[#allocation7 + $0xd58] sm:$0xff]
    %v3676 = vld [vmem:[#allocation7 + $0xd60] sm:$0xff]
    %v3677 = vld [vmem:[#allocation7 + $0xd68] sm:$0xff]
    %v3678 = vld [vmem:[#allocation7 + $0xd70] sm:$0xff]
    %v3679 = vld [vmem:[#allocation7 + $0xd78] sm:$0xff]
    %v3680 = vld [vmem:[#allocation7 + $0xd80] sm:$0xff]
    %v3681 = vld [vmem:[#allocation7 + $0xd88] sm:$0xff]
    %v3682 = vld [vmem:[#allocation7 + $0xd90] sm:$0xff]
    %v3683 = vld [vmem:[#allocation7 + $0xd98] sm:$0xff]
    %v3684 = vld [vmem:[#allocation7 + $0xda0] sm:$0xff]
    %v3685 = vld [vmem:[#allocation7 + $0xda8] sm:$0xff]
    %v3686 = vld [vmem:[#allocation7 + $0xdb0] sm:$0xff]
    %v3687 = vld [vmem:[#allocation7 + $0xdb8] sm:$0xff]
    %v3688 = vld [vmem:[#allocation7 + $0xdc0] sm:$0xff]
    %v3689 = vld [vmem:[#allocation7 + $0xdc8] sm:$0xff]
    %v3690 = vld [vmem:[#allocation7 + $0xdd0] sm:$0xff]
    %v3691 = vld [vmem:[#allocation7 + $0xdd8] sm:$0xff]
    %v3692 = vld [vmem:[#allocation7 + $0xde0] sm:$0xff]
    %v3693 = vld [vmem:[#allocation7 + $0xde8] sm:$0xff]
    %v3694 = vld [vmem:[#allocation7 + $0xdf0] sm:$0xff]
    %v3695 = vld [vmem:[#allocation7 + $0xdf8] sm:$0xff]
    %v3696 = vld [vmem:[#allocation7 + $0xe00] sm:$0xff]
    %v3697 = vld [vmem:[#allocation7 + $0xe08] sm:$0xff]
    %v3698 = vld [vmem:[#allocation7 + $0xe10] sm:$0xff]
    %v3699 = vld [vmem:[#allocation7 + $0xe18] sm:$0xff]
    %v3700 = vld [vmem:[#allocation7 + $0xe20] sm:$0xff]
    %v3701 = vld [vmem:[#allocation7 + $0xe28] sm:$0xff]
    %v3702 = vld [vmem:[#allocation7 + $0xe30] sm:$0xff]
    %v3703 = vld [vmem:[#allocation7 + $0xe38] sm:$0xff]
    %v3704 = vld [vmem:[#allocation7 + $0xe40] sm:$0xff]
    %v3705 = vld [vmem:[#allocation7 + $0xe48] sm:$0xff]
    %v3706 = vld [vmem:[#allocation7 + $0xe50] sm:$0xff]
    %v3707 = vld [vmem:[#allocation7 + $0xe58] sm:$0xff]
    %v3708 = vld [vmem:[#allocation7 + $0xe60] sm:$0xff]
    %v3709 = vld [vmem:[#allocation7 + $0xe68] sm:$0xff]
    %v3710 = vld [vmem:[#allocation7 + $0xe70] sm:$0xff]
    %v3711 = vld [vmem:[#allocation7 + $0xe78] sm:$0xff]
    %v3712 = vld [vmem:[#allocation7 + $0xe80] sm:$0xff]
    %v3713 = vld [vmem:[#allocation7 + $0xe88] sm:$0xff]
    %v3714 = vld [vmem:[#allocation7 + $0xe90] sm:$0xff]
    %v3715 = vld [vmem:[#allocation7 + $0xe98] sm:$0xff]
    %v3716 = vld [vmem:[#allocation7 + $0xea0] sm:$0xff]
    %v3717 = vld [vmem:[#allocation7 + $0xea8] sm:$0xff]
    %v3718 = vld [vmem:[#allocation7 + $0xeb0] sm:$0xff]
    %v3719 = vld [vmem:[#allocation7 + $0xeb8] sm:$0xff]
    %v3720 = vld [vmem:[#allocation7 + $0xec0] sm:$0xff]
    %v3721 = vld [vmem:[#allocation7 + $0xec8] sm:$0xff]
    %v3722 = vld [vmem:[#allocation7 + $0xed0] sm:$0xff]
    %v3723 = vld [vmem:[#allocation7 + $0xed8] sm:$0xff]
    %v3724 = vld [vmem:[#allocation7 + $0xee0] sm:$0xff]
    %v3725 = vld [vmem:[#allocation7 + $0xee8] sm:$0xff]
    %v3726 = vld [vmem:[#allocation7 + $0xef0] sm:$0xff]
    %v3727 = vld [vmem:[#allocation7 + $0xef8] sm:$0xff]
    %v3728 = vld [vmem:[#allocation7 + $0xf00] sm:$0xff]
    %v3729 = vld [vmem:[#allocation7 + $0xf08] sm:$0xff]
    %v3730 = vld [vmem:[#allocation7 + $0xf10] sm:$0xff]
    %v3731 = vld [vmem:[#allocation7 + $0xf18] sm:$0xff]
    %v3732 = vld [vmem:[#allocation7 + $0xf20] sm:$0xff]
    %v3733 = vld [vmem:[#allocation7 + $0xf28] sm:$0xff]
    %v3734 = vld [vmem:[#allocation7 + $0xf30] sm:$0xff]
    %v3735 = vld [vmem:[#allocation7 + $0xf38] sm:$0xff]
    %v3736 = vld [vmem:[#allocation7 + $0xf40] sm:$0xff]
    %v3737 = vld [vmem:[#allocation7 + $0xf48] sm:$0xff]
    %v3738 = vld [vmem:[#allocation7 + $0xf50] sm:$0xff]
    %v3739 = vld [vmem:[#allocation7 + $0xf58] sm:$0xff]
    %v3740 = vld [vmem:[#allocation7 + $0xf60] sm:$0xff]
    %v3741 = vld [vmem:[#allocation7 + $0xf68] sm:$0xff]
    %v3742 = vld [vmem:[#allocation7 + $0xf70] sm:$0xff]
    %v3743 = vld [vmem:[#allocation7 + $0xf78] sm:$0xff]
    %v3744 = vld [vmem:[#allocation7 + $0xf80] sm:$0xff]
    %v3745 = vld [vmem:[#allocation7 + $0xf88] sm:$0xff]
    %v3746 = vld [vmem:[#allocation7 + $0xf90] sm:$0xff]
    %v3747 = vld [vmem:[#allocation7 + $0xf98] sm:$0xff]
    %v3748 = vld [vmem:[#allocation7 + $0xfa0] sm:$0xff]
    %v3749 = vld [vmem:[#allocation7 + $0xfa8] sm:$0xff]
    %v3750 = vld [vmem:[#allocation7 + $0xfb0] sm:$0xff]
    %v3751 = vld [vmem:[#allocation7 + $0xfb8] sm:$0xff]
    %v3752 = vld [vmem:[#allocation7 + $0xfc0] sm:$0xff]
    %v3753 = vld [vmem:[#allocation7 + $0xfc8] sm:$0xff]
    %v3754 = vld [vmem:[#allocation7 + $0xfd0] sm:$0xff]
    %v3755 = vld [vmem:[#allocation7 + $0xfd8] sm:$0xff]
    %v3756 = vld [vmem:[#allocation7 + $0xfe0] sm:$0xff]
    %v3757 = vld [vmem:[#allocation7 + $0xfe8] sm:$0xff]
    %v3758 = vld [vmem:[#allocation7 + $0xff0] sm:$0xff]
    %v3759 = vld [vmem:[#allocation7 + $0xff8] sm:$0xff]
    %v3760 = vld [vmem:[#allocation8] sm:$0xff]
    %v3762 = vperm.slane %v3760, 0
    %v3763 = vperm.slane %v3760, 1
    %v3764 = vperm.slane %v3760, 2
    %v3765 = vperm.slane %v3760, 3
    %v3766 = vperm.slane %v3760, 4
    %v3767 = vperm.slane %v3760, 5
    %v3768 = vperm.slane %v3760, 6
    %v3769 = vperm.slane %v3760, 7
    %v4290 = vunpack.c.l.b16 %v3248
    %v4291 = vunpack.c.h.b16 %v3248
    %v4292 = vunpack.c.l.b16 %v3249
    %v4293 = vunpack.c.h.b16 %v3249
    %v4294 = vunpack.c.l.b16 %v3250
    %v4295 = vunpack.c.h.b16 %v3250
    %v4296 = vunpack.c.l.b16 %v3251
    %v4297 = vunpack.c.h.b16 %v3251
    %v4298 = vunpack.c.l.b16 %v3252
    %v4299 = vunpack.c.h.b16 %v3252
    %v4300 = vunpack.c.l.b16 %v3253
    %v4301 = vunpack.c.h.b16 %v3253
    %v4302 = vunpack.c.l.b16 %v3254
    %v4303 = vunpack.c.h.b16 %v3254
    %v4304 = vunpack.c.l.b16 %v3255
    %v4305 = vunpack.c.h.b16 %v3255
    %v4306 = vunpack.c.l.b16 %v3256
    %v4307 = vunpack.c.h.b16 %v3256
    %v4308 = vunpack.c.l.b16 %v3257
    %v4309 = vunpack.c.h.b16 %v3257
    %v4310 = vunpack.c.l.b16 %v3258
    %v4311 = vunpack.c.h.b16 %v3258
    %v4312 = vunpack.c.l.b16 %v3259
    %v4313 = vunpack.c.h.b16 %v3259
    %v4314 = vunpack.c.l.b16 %v3260
    %v4315 = vunpack.c.h.b16 %v3260
    %v4316 = vunpack.c.l.b16 %v3261
    %v4317 = vunpack.c.h.b16 %v3261
    %v4318 = vunpack.c.l.b16 %v3262
    %v4319 = vunpack.c.h.b16 %v3262
    %v4320 = vunpack.c.l.b16 %v3263
    %v4321 = vunpack.c.h.b16 %v3263
    %v4322 = vunpack.c.l.b16 %v3264
    %v4323 = vunpack.c.h.b16 %v3264
    %v4324 = vunpack.c.l.b16 %v3265
    %v4325 = vunpack.c.h.b16 %v3265
    %v4326 = vunpack.c.l.b16 %v3266
    %v4327 = vunpack.c.h.b16 %v3266
    %v4328 = vunpack.c.l.b16 %v3267
    %v4329 = vunpack.c.h.b16 %v3267
    %v4330 = vunpack.c.l.b16 %v3268
    %v4331 = vunpack.c.h.b16 %v3268
    %v4332 = vunpack.c.l.b16 %v3269
    %v4333 = vunpack.c.h.b16 %v3269
    %v4334 = vunpack.c.l.b16 %v3270
    %v4335 = vunpack.c.h.b16 %v3270
    %v4336 = vunpack.c.l.b16 %v3271
    %v4337 = vunpack.c.h.b16 %v3271
    %v4338 = vunpack.c.l.b16 %v3272
    %v4339 = vunpack.c.h.b16 %v3272
    %v4340 = vunpack.c.l.b16 %v3273
    %v4341 = vunpack.c.h.b16 %v3273
    %v4342 = vunpack.c.l.b16 %v3274
    %v4343 = vunpack.c.h.b16 %v3274
    %v4344 = vunpack.c.l.b16 %v3275
    %v4345 = vunpack.c.h.b16 %v3275
    %v4346 = vunpack.c.l.b16 %v3276
    %v4347 = vunpack.c.h.b16 %v3276
    %v4348 = vunpack.c.l.b16 %v3277
    %v4349 = vunpack.c.h.b16 %v3277
    %v4350 = vunpack.c.l.b16 %v3278
    %v4351 = vunpack.c.h.b16 %v3278
    %v4352 = vunpack.c.l.b16 %v3279
    %v4353 = vunpack.c.h.b16 %v3279
    %v4354 = vunpack.c.l.b16 %v3280
    %v4355 = vunpack.c.h.b16 %v3280
    %v4356 = vunpack.c.l.b16 %v3281
    %v4357 = vunpack.c.h.b16 %v3281
    %v4358 = vunpack.c.l.b16 %v3282
    %v4359 = vunpack.c.h.b16 %v3282
    %v4360 = vunpack.c.l.b16 %v3283
    %v4361 = vunpack.c.h.b16 %v3283
    %v4362 = vunpack.c.l.b16 %v3284
    %v4363 = vunpack.c.h.b16 %v3284
    %v4364 = vunpack.c.l.b16 %v3285
    %v4365 = vunpack.c.h.b16 %v3285
    %v4366 = vunpack.c.l.b16 %v3286
    %v4367 = vunpack.c.h.b16 %v3286
    %v4368 = vunpack.c.l.b16 %v3287
    %v4369 = vunpack.c.h.b16 %v3287
    %v4370 = vunpack.c.l.b16 %v3288
    %v4371 = vunpack.c.h.b16 %v3288
    %v4372 = vunpack.c.l.b16 %v3289
    %v4373 = vunpack.c.h.b16 %v3289
    %v4374 = vunpack.c.l.b16 %v3290
    %v4375 = vunpack.c.h.b16 %v3290
    %v4376 = vunpack.c.l.b16 %v3291
    %v4377 = vunpack.c.h.b16 %v3291
    %v4378 = vunpack.c.l.b16 %v3292
    %v4379 = vunpack.c.h.b16 %v3292
    %v4380 = vunpack.c.l.b16 %v3293
    %v4381 = vunpack.c.h.b16 %v3293
    %v4382 = vunpack.c.l.b16 %v3294
    %v4383 = vunpack.c.h.b16 %v3294
    %v4384 = vunpack.c.l.b16 %v3295
    %v4385 = vunpack.c.h.b16 %v3295
    %v4386 = vunpack.c.l.b16 %v3296
    %v4387 = vunpack.c.h.b16 %v3296
    %v4388 = vunpack.c.l.b16 %v3297
    %v4389 = vunpack.c.h.b16 %v3297
    %v4390 = vunpack.c.l.b16 %v3298
    %v4391 = vunpack.c.h.b16 %v3298
    %v4392 = vunpack.c.l.b16 %v3299
    %v4393 = vunpack.c.h.b16 %v3299
    %v4394 = vunpack.c.l.b16 %v3300
    %v4395 = vunpack.c.h.b16 %v3300
    %v4396 = vunpack.c.l.b16 %v3301
    %v4397 = vunpack.c.h.b16 %v3301
    %v4398 = vunpack.c.l.b16 %v3302
    %v4399 = vunpack.c.h.b16 %v3302
    %v4400 = vunpack.c.l.b16 %v3303
    %v4401 = vunpack.c.h.b16 %v3303
    %v4402 = vunpack.c.l.b16 %v3304
    %v4403 = vunpack.c.h.b16 %v3304
    %v4404 = vunpack.c.l.b16 %v3305
    %v4405 = vunpack.c.h.b16 %v3305
    %v4406 = vunpack.c.l.b16 %v3306
    %v4407 = vunpack.c.h.b16 %v3306
    %v4408 = vunpack.c.l.b16 %v3307
    %v4409 = vunpack.c.h.b16 %v3307
    %v4410 = vunpack.c.l.b16 %v3308
    %v4411 = vunpack.c.h.b16 %v3308
    %v4412 = vunpack.c.l.b16 %v3309
    %v4413 = vunpack.c.h.b16 %v3309
    %v4414 = vunpack.c.l.b16 %v3310
    %v4415 = vunpack.c.h.b16 %v3310
    %v4416 = vunpack.c.l.b16 %v3311
    %v4417 = vunpack.c.h.b16 %v3311
    %v4418 = vunpack.c.l.b16 %v3312
    %v4419 = vunpack.c.h.b16 %v3312
    %v4420 = vunpack.c.l.b16 %v3313
    %v4421 = vunpack.c.h.b16 %v3313
    %v4422 = vunpack.c.l.b16 %v3314
    %v4423 = vunpack.c.h.b16 %v3314
    %v4424 = vunpack.c.l.b16 %v3315
    %v4425 = vunpack.c.h.b16 %v3315
    %v4426 = vunpack.c.l.b16 %v3316
    %v4427 = vunpack.c.h.b16 %v3316
    %v4428 = vunpack.c.l.b16 %v3317
    %v4429 = vunpack.c.h.b16 %v3317
    %v4430 = vunpack.c.l.b16 %v3318
    %v4431 = vunpack.c.h.b16 %v3318
    %v4432 = vunpack.c.l.b16 %v3319
    %v4433 = vunpack.c.h.b16 %v3319
    %v4434 = vunpack.c.l.b16 %v3320
    %v4435 = vunpack.c.h.b16 %v3320
    %v4436 = vunpack.c.l.b16 %v3321
    %v4437 = vunpack.c.h.b16 %v3321
    %v4438 = vunpack.c.l.b16 %v3322
    %v4439 = vunpack.c.h.b16 %v3322
    %v4440 = vunpack.c.l.b16 %v3323
    %v4441 = vunpack.c.h.b16 %v3323
    %v4442 = vunpack.c.l.b16 %v3324
    %v4443 = vunpack.c.h.b16 %v3324
    %v4444 = vunpack.c.l.b16 %v3325
    %v4445 = vunpack.c.h.b16 %v3325
    %v4446 = vunpack.c.l.b16 %v3326
    %v4447 = vunpack.c.h.b16 %v3326
    %v4448 = vunpack.c.l.b16 %v3327
    %v4449 = vunpack.c.h.b16 %v3327
    %v4450 = vunpack.c.l.b16 %v3328
    %v4451 = vunpack.c.h.b16 %v3328
    %v4452 = vunpack.c.l.b16 %v3329
    %v4453 = vunpack.c.h.b16 %v3329
    %v4454 = vunpack.c.l.b16 %v3330
    %v4455 = vunpack.c.h.b16 %v3330
    %v4456 = vunpack.c.l.b16 %v3331
    %v4457 = vunpack.c.h.b16 %v3331
    %v4458 = vunpack.c.l.b16 %v3332
    %v4459 = vunpack.c.h.b16 %v3332
    %v4460 = vunpack.c.l.b16 %v3333
    %v4461 = vunpack.c.h.b16 %v3333
    %v4462 = vunpack.c.l.b16 %v3334
    %v4463 = vunpack.c.h.b16 %v3334
    %v4464 = vunpack.c.l.b16 %v3335
    %v4465 = vunpack.c.h.b16 %v3335
    %v4466 = vunpack.c.l.b16 %v3336
    %v4467 = vunpack.c.h.b16 %v3336
    %v4468 = vunpack.c.l.b16 %v3337
    %v4469 = vunpack.c.h.b16 %v3337
    %v4470 = vunpack.c.l.b16 %v3338
    %v4471 = vunpack.c.h.b16 %v3338
    %v4472 = vunpack.c.l.b16 %v3339
    %v4473 = vunpack.c.h.b16 %v3339
    %v4474 = vunpack.c.l.b16 %v3340
    %v4475 = vunpack.c.h.b16 %v3340
    %v4476 = vunpack.c.l.b16 %v3341
    %v4477 = vunpack.c.h.b16 %v3341
    %v4478 = vunpack.c.l.b16 %v3342
    %v4479 = vunpack.c.h.b16 %v3342
    %v4480 = vunpack.c.l.b16 %v3343
    %v4481 = vunpack.c.h.b16 %v3343
    %v4482 = vunpack.c.l.b16 %v3344
    %v4483 = vunpack.c.h.b16 %v3344
    %v4484 = vunpack.c.l.b16 %v3345
    %v4485 = vunpack.c.h.b16 %v3345
    %v4486 = vunpack.c.l.b16 %v3346
    %v4487 = vunpack.c.h.b16 %v3346
    %v4488 = vunpack.c.l.b16 %v3347
    %v4489 = vunpack.c.h.b16 %v3347
    %v4490 = vunpack.c.l.b16 %v3348
    %v4491 = vunpack.c.h.b16 %v3348
    %v4492 = vunpack.c.l.b16 %v3349
    %v4493 = vunpack.c.h.b16 %v3349
    %v4494 = vunpack.c.l.b16 %v3350
    %v4495 = vunpack.c.h.b16 %v3350
    %v4496 = vunpack.c.l.b16 %v3351
    %v4497 = vunpack.c.h.b16 %v3351
    %v4498 = vunpack.c.l.b16 %v3352
    %v4499 = vunpack.c.h.b16 %v3352
    %v4500 = vunpack.c.l.b16 %v3353
    %v4501 = vunpack.c.h.b16 %v3353
    %v4502 = vunpack.c.l.b16 %v3354
    %v4503 = vunpack.c.h.b16 %v3354
    %v4504 = vunpack.c.l.b16 %v3355
    %v4505 = vunpack.c.h.b16 %v3355
    %v4506 = vunpack.c.l.b16 %v3356
    %v4507 = vunpack.c.h.b16 %v3356
    %v4508 = vunpack.c.l.b16 %v3357
    %v4509 = vunpack.c.h.b16 %v3357
    %v4510 = vunpack.c.l.b16 %v3358
    %v4511 = vunpack.c.h.b16 %v3358
    %v4512 = vunpack.c.l.b16 %v3359
    %v4513 = vunpack.c.h.b16 %v3359
    %v4514 = vunpack.c.l.b16 %v3360
    %v4515 = vunpack.c.h.b16 %v3360
    %v4516 = vunpack.c.l.b16 %v3361
    %v4517 = vunpack.c.h.b16 %v3361
    %v4518 = vunpack.c.l.b16 %v3362
    %v4519 = vunpack.c.h.b16 %v3362
    %v4520 = vunpack.c.l.b16 %v3363
    %v4521 = vunpack.c.h.b16 %v3363
    %v4522 = vunpack.c.l.b16 %v3364
    %v4523 = vunpack.c.h.b16 %v3364
    %v4524 = vunpack.c.l.b16 %v3365
    %v4525 = vunpack.c.h.b16 %v3365
    %v4526 = vunpack.c.l.b16 %v3366
    %v4527 = vunpack.c.h.b16 %v3366
    %v4528 = vunpack.c.l.b16 %v3367
    %v4529 = vunpack.c.h.b16 %v3367
    %v4530 = vunpack.c.l.b16 %v3368
    %v4531 = vunpack.c.h.b16 %v3368
    %v4532 = vunpack.c.l.b16 %v3369
    %v4533 = vunpack.c.h.b16 %v3369
    %v4534 = vunpack.c.l.b16 %v3370
    %v4535 = vunpack.c.h.b16 %v3370
    %v4536 = vunpack.c.l.b16 %v3371
    %v4537 = vunpack.c.h.b16 %v3371
    %v4538 = vunpack.c.l.b16 %v3372
    %v4539 = vunpack.c.h.b16 %v3372
    %v4540 = vunpack.c.l.b16 %v3373
    %v4541 = vunpack.c.h.b16 %v3373
    %v4542 = vunpack.c.l.b16 %v3374
    %v4543 = vunpack.c.h.b16 %v3374
    %v4544 = vunpack.c.l.b16 %v3375
    %v4545 = vunpack.c.h.b16 %v3375
    %v4546 = vunpack.c.l.b16 %v3376
    %v4547 = vunpack.c.h.b16 %v3376
    %v4548 = vunpack.c.l.b16 %v3377
    %v4549 = vunpack.c.h.b16 %v3377
    %v4550 = vunpack.c.l.b16 %v3378
    %v4551 = vunpack.c.h.b16 %v3378
    %v4552 = vunpack.c.l.b16 %v3379
    %v4553 = vunpack.c.h.b16 %v3379
    %v4554 = vunpack.c.l.b16 %v3380
    %v4555 = vunpack.c.h.b16 %v3380
    %v4556 = vunpack.c.l.b16 %v3381
    %v4557 = vunpack.c.h.b16 %v3381
    %v4558 = vunpack.c.l.b16 %v3382
    %v4559 = vunpack.c.h.b16 %v3382
    %v4560 = vunpack.c.l.b16 %v3383
    %v4561 = vunpack.c.h.b16 %v3383
    %v4562 = vunpack.c.l.b16 %v3384
    %v4563 = vunpack.c.h.b16 %v3384
    %v4564 = vunpack.c.l.b16 %v3385
    %v4565 = vunpack.c.h.b16 %v3385
    %v4566 = vunpack.c.l.b16 %v3386
    %v4567 = vunpack.c.h.b16 %v3386
    %v4568 = vunpack.c.l.b16 %v3387
    %v4569 = vunpack.c.h.b16 %v3387
    %v4570 = vunpack.c.l.b16 %v3388
    %v4571 = vunpack.c.h.b16 %v3388
    %v4572 = vunpack.c.l.b16 %v3389
    %v4573 = vunpack.c.h.b16 %v3389
    %v4574 = vunpack.c.l.b16 %v3390
    %v4575 = vunpack.c.h.b16 %v3390
    %v4576 = vunpack.c.l.b16 %v3391
    %v4577 = vunpack.c.h.b16 %v3391
    %v4578 = vunpack.c.l.b16 %v3392
    %v4579 = vunpack.c.h.b16 %v3392
    %v4580 = vunpack.c.l.b16 %v3393
    %v4581 = vunpack.c.h.b16 %v3393
    %v4582 = vunpack.c.l.b16 %v3394
    %v4583 = vunpack.c.h.b16 %v3394
    %v4584 = vunpack.c.l.b16 %v3395
    %v4585 = vunpack.c.h.b16 %v3395
    %v4586 = vunpack.c.l.b16 %v3396
    %v4587 = vunpack.c.h.b16 %v3396
    %v4588 = vunpack.c.l.b16 %v3397
    %v4589 = vunpack.c.h.b16 %v3397
    %v4590 = vunpack.c.l.b16 %v3398
    %v4591 = vunpack.c.h.b16 %v3398
    %v4592 = vunpack.c.l.b16 %v3399
    %v4593 = vunpack.c.h.b16 %v3399
    %v4594 = vunpack.c.l.b16 %v3400
    %v4595 = vunpack.c.h.b16 %v3400
    %v4596 = vunpack.c.l.b16 %v3401
    %v4597 = vunpack.c.h.b16 %v3401
    %v4598 = vunpack.c.l.b16 %v3402
    %v4599 = vunpack.c.h.b16 %v3402
    %v4600 = vunpack.c.l.b16 %v3403
    %v4601 = vunpack.c.h.b16 %v3403
    %v4602 = vunpack.c.l.b16 %v3404
    %v4603 = vunpack.c.h.b16 %v3404
    %v4604 = vunpack.c.l.b16 %v3405
    %v4605 = vunpack.c.h.b16 %v3405
    %v4606 = vunpack.c.l.b16 %v3406
    %v4607 = vunpack.c.h.b16 %v3406
    %v4608 = vunpack.c.l.b16 %v3407
    %v4609 = vunpack.c.h.b16 %v3407
    %v4610 = vunpack.c.l.b16 %v3408
    %v4611 = vunpack.c.h.b16 %v3408
    %v4612 = vunpack.c.l.b16 %v3409
    %v4613 = vunpack.c.h.b16 %v3409
    %v4614 = vunpack.c.l.b16 %v3410
    %v4615 = vunpack.c.h.b16 %v3410
    %v4616 = vunpack.c.l.b16 %v3411
    %v4617 = vunpack.c.h.b16 %v3411
    %v4618 = vunpack.c.l.b16 %v3412
    %v4619 = vunpack.c.h.b16 %v3412
    %v4620 = vunpack.c.l.b16 %v3413
    %v4621 = vunpack.c.h.b16 %v3413
    %v4622 = vunpack.c.l.b16 %v3414
    %v4623 = vunpack.c.h.b16 %v3414
    %v4624 = vunpack.c.l.b16 %v3415
    %v4625 = vunpack.c.h.b16 %v3415
    %v4626 = vunpack.c.l.b16 %v3416
    %v4627 = vunpack.c.h.b16 %v3416
    %v4628 = vunpack.c.l.b16 %v3417
    %v4629 = vunpack.c.h.b16 %v3417
    %v4630 = vunpack.c.l.b16 %v3418
    %v4631 = vunpack.c.h.b16 %v3418
    %v4632 = vunpack.c.l.b16 %v3419
    %v4633 = vunpack.c.h.b16 %v3419
    %v4634 = vunpack.c.l.b16 %v3420
    %v4635 = vunpack.c.h.b16 %v3420
    %v4636 = vunpack.c.l.b16 %v3421
    %v4637 = vunpack.c.h.b16 %v3421
    %v4638 = vunpack.c.l.b16 %v3422
    %v4639 = vunpack.c.h.b16 %v3422
    %v4640 = vunpack.c.l.b16 %v3423
    %v4641 = vunpack.c.h.b16 %v3423
    %v4642 = vunpack.c.l.b16 %v3424
    %v4643 = vunpack.c.h.b16 %v3424
    %v4644 = vunpack.c.l.b16 %v3425
    %v4645 = vunpack.c.h.b16 %v3425
    %v4646 = vunpack.c.l.b16 %v3426
    %v4647 = vunpack.c.h.b16 %v3426
    %v4648 = vunpack.c.l.b16 %v3427
    %v4649 = vunpack.c.h.b16 %v3427
    %v4650 = vunpack.c.l.b16 %v3428
    %v4651 = vunpack.c.h.b16 %v3428
    %v4652 = vunpack.c.l.b16 %v3429
    %v4653 = vunpack.c.h.b16 %v3429
    %v4654 = vunpack.c.l.b16 %v3430
    %v4655 = vunpack.c.h.b16 %v3430
    %v4656 = vunpack.c.l.b16 %v3431
    %v4657 = vunpack.c.h.b16 %v3431
    %v4658 = vunpack.c.l.b16 %v3432
    %v4659 = vunpack.c.h.b16 %v3432
    %v4660 = vunpack.c.l.b16 %v3433
    %v4661 = vunpack.c.h.b16 %v3433
    %v4662 = vunpack.c.l.b16 %v3434
    %v4663 = vunpack.c.h.b16 %v3434
    %v4664 = vunpack.c.l.b16 %v3435
    %v4665 = vunpack.c.h.b16 %v3435
    %v4666 = vunpack.c.l.b16 %v3436
    %v4667 = vunpack.c.h.b16 %v3436
    %v4668 = vunpack.c.l.b16 %v3437
    %v4669 = vunpack.c.h.b16 %v3437
    %v4670 = vunpack.c.l.b16 %v3438
    %v4671 = vunpack.c.h.b16 %v3438
    %v4672 = vunpack.c.l.b16 %v3439
    %v4673 = vunpack.c.h.b16 %v3439
    %v4674 = vunpack.c.l.b16 %v3440
    %v4675 = vunpack.c.h.b16 %v3440
    %v4676 = vunpack.c.l.b16 %v3441
    %v4677 = vunpack.c.h.b16 %v3441
    %v4678 = vunpack.c.l.b16 %v3442
    %v4679 = vunpack.c.h.b16 %v3442
    %v4680 = vunpack.c.l.b16 %v3443
    %v4681 = vunpack.c.h.b16 %v3443
    %v4682 = vunpack.c.l.b16 %v3444
    %v4683 = vunpack.c.h.b16 %v3444
    %v4684 = vunpack.c.l.b16 %v3445
    %v4685 = vunpack.c.h.b16 %v3445
    %v4686 = vunpack.c.l.b16 %v3446
    %v4687 = vunpack.c.h.b16 %v3446
    %v4688 = vunpack.c.l.b16 %v3447
    %v4689 = vunpack.c.h.b16 %v3447
    %v4690 = vunpack.c.l.b16 %v3448
    %v4691 = vunpack.c.h.b16 %v3448
    %v4692 = vunpack.c.l.b16 %v3449
    %v4693 = vunpack.c.h.b16 %v3449
    %v4694 = vunpack.c.l.b16 %v3450
    %v4695 = vunpack.c.h.b16 %v3450
    %v4696 = vunpack.c.l.b16 %v3451
    %v4697 = vunpack.c.h.b16 %v3451
    %v4698 = vunpack.c.l.b16 %v3452
    %v4699 = vunpack.c.h.b16 %v3452
    %v4700 = vunpack.c.l.b16 %v3453
    %v4701 = vunpack.c.h.b16 %v3453
    %v4702 = vunpack.c.l.b16 %v3454
    %v4703 = vunpack.c.h.b16 %v3454
    %v4704 = vunpack.c.l.b16 %v3455
    %v4705 = vunpack.c.h.b16 %v3455
    %v4706 = vunpack.c.l.b16 %v3456
    %v4707 = vunpack.c.h.b16 %v3456
    %v4708 = vunpack.c.l.b16 %v3457
    %v4709 = vunpack.c.h.b16 %v3457
    %v4710 = vunpack.c.l.b16 %v3458
    %v4711 = vunpack.c.h.b16 %v3458
    %v4712 = vunpack.c.l.b16 %v3459
    %v4713 = vunpack.c.h.b16 %v3459
    %v4714 = vunpack.c.l.b16 %v3460
    %v4715 = vunpack.c.h.b16 %v3460
    %v4716 = vunpack.c.l.b16 %v3461
    %v4717 = vunpack.c.h.b16 %v3461
    %v4718 = vunpack.c.l.b16 %v3462
    %v4719 = vunpack.c.h.b16 %v3462
    %v4720 = vunpack.c.l.b16 %v3463
    %v4721 = vunpack.c.h.b16 %v3463
    %v4722 = vunpack.c.l.b16 %v3464
    %v4723 = vunpack.c.h.b16 %v3464
    %v4724 = vunpack.c.l.b16 %v3465
    %v4725 = vunpack.c.h.b16 %v3465
    %v4726 = vunpack.c.l.b16 %v3466
    %v4727 = vunpack.c.h.b16 %v3466
    %v4728 = vunpack.c.l.b16 %v3467
    %v4729 = vunpack.c.h.b16 %v3467
    %v4730 = vunpack.c.l.b16 %v3468
    %v4731 = vunpack.c.h.b16 %v3468
    %v4732 = vunpack.c.l.b16 %v3469
    %v4733 = vunpack.c.h.b16 %v3469
    %v4734 = vunpack.c.l.b16 %v3470
    %v4735 = vunpack.c.h.b16 %v3470
    %v4736 = vunpack.c.l.b16 %v3471
    %v4737 = vunpack.c.h.b16 %v3471
    %v4738 = vunpack.c.l.b16 %v3472
    %v4739 = vunpack.c.h.b16 %v3472
    %v4740 = vunpack.c.l.b16 %v3473
    %v4741 = vunpack.c.h.b16 %v3473
    %v4742 = vunpack.c.l.b16 %v3474
    %v4743 = vunpack.c.h.b16 %v3474
    %v4744 = vunpack.c.l.b16 %v3475
    %v4745 = vunpack.c.h.b16 %v3475
    %v4746 = vunpack.c.l.b16 %v3476
    %v4747 = vunpack.c.h.b16 %v3476
    %v4748 = vunpack.c.l.b16 %v3477
    %v4749 = vunpack.c.h.b16 %v3477
    %v4750 = vunpack.c.l.b16 %v3478
    %v4751 = vunpack.c.h.b16 %v3478
    %v4752 = vunpack.c.l.b16 %v3479
    %v4753 = vunpack.c.h.b16 %v3479
    %v4754 = vunpack.c.l.b16 %v3480
    %v4755 = vunpack.c.h.b16 %v3480
    %v4756 = vunpack.c.l.b16 %v3481
    %v4757 = vunpack.c.h.b16 %v3481
    %v4758 = vunpack.c.l.b16 %v3482
    %v4759 = vunpack.c.h.b16 %v3482
    %v4760 = vunpack.c.l.b16 %v3483
    %v4761 = vunpack.c.h.b16 %v3483
    %v4762 = vunpack.c.l.b16 %v3484
    %v4763 = vunpack.c.h.b16 %v3484
    %v4764 = vunpack.c.l.b16 %v3485
    %v4765 = vunpack.c.h.b16 %v3485
    %v4766 = vunpack.c.l.b16 %v3486
    %v4767 = vunpack.c.h.b16 %v3486
    %v4768 = vunpack.c.l.b16 %v3487
    %v4769 = vunpack.c.h.b16 %v3487
    %v4770 = vunpack.c.l.b16 %v3488
    %v4771 = vunpack.c.h.b16 %v3488
    %v4772 = vunpack.c.l.b16 %v3489
    %v4773 = vunpack.c.h.b16 %v3489
    %v4774 = vunpack.c.l.b16 %v3490
    %v4775 = vunpack.c.h.b16 %v3490
    %v4776 = vunpack.c.l.b16 %v3491
    %v4777 = vunpack.c.h.b16 %v3491
    %v4778 = vunpack.c.l.b16 %v3492
    %v4779 = vunpack.c.h.b16 %v3492
    %v4780 = vunpack.c.l.b16 %v3493
    %v4781 = vunpack.c.h.b16 %v3493
    %v4782 = vunpack.c.l.b16 %v3494
    %v4783 = vunpack.c.h.b16 %v3494
    %v4784 = vunpack.c.l.b16 %v3495
    %v4785 = vunpack.c.h.b16 %v3495
    %v4786 = vunpack.c.l.b16 %v3496
    %v4787 = vunpack.c.h.b16 %v3496
    %v4788 = vunpack.c.l.b16 %v3497
    %v4789 = vunpack.c.h.b16 %v3497
    %v4790 = vunpack.c.l.b16 %v3498
    %v4791 = vunpack.c.h.b16 %v3498
    %v4792 = vunpack.c.l.b16 %v3499
    %v4793 = vunpack.c.h.b16 %v3499
    %v4794 = vunpack.c.l.b16 %v3500
    %v4795 = vunpack.c.h.b16 %v3500
    %v4796 = vunpack.c.l.b16 %v3501
    %v4797 = vunpack.c.h.b16 %v3501
    %v4798 = vunpack.c.l.b16 %v3502
    %v4799 = vunpack.c.h.b16 %v3502
    %v4800 = vunpack.c.l.b16 %v3503
    %v4801 = vunpack.c.h.b16 %v3503
    %v4802 = vunpack.c.l.b16 %v3504
    %v4803 = vunpack.c.h.b16 %v3504
    %v4804 = vunpack.c.l.b16 %v3505
    %v4805 = vunpack.c.h.b16 %v3505
    %v4806 = vunpack.c.l.b16 %v3506
    %v4807 = vunpack.c.h.b16 %v3506
    %v4808 = vunpack.c.l.b16 %v3507
    %v4809 = vunpack.c.h.b16 %v3507
    %v4810 = vunpack.c.l.b16 %v3508
    %v4811 = vunpack.c.h.b16 %v3508
    %v4812 = vunpack.c.l.b16 %v3509
    %v4813 = vunpack.c.h.b16 %v3509
    %v4814 = vunpack.c.l.b16 %v3510
    %v4815 = vunpack.c.h.b16 %v3510
    %v4816 = vunpack.c.l.b16 %v3511
    %v4817 = vunpack.c.h.b16 %v3511
    %v4818 = vunpack.c.l.b16 %v3512
    %v4819 = vunpack.c.h.b16 %v3512
    %v4820 = vunpack.c.l.b16 %v3513
    %v4821 = vunpack.c.h.b16 %v3513
    %v4822 = vunpack.c.l.b16 %v3514
    %v4823 = vunpack.c.h.b16 %v3514
    %v4824 = vunpack.c.l.b16 %v3515
    %v4825 = vunpack.c.h.b16 %v3515
    %v4826 = vunpack.c.l.b16 %v3516
    %v4827 = vunpack.c.h.b16 %v3516
    %v4828 = vunpack.c.l.b16 %v3517
    %v4829 = vunpack.c.h.b16 %v3517
    %v4830 = vunpack.c.l.b16 %v3518
    %v4831 = vunpack.c.h.b16 %v3518
    %v4832 = vunpack.c.l.b16 %v3519
    %v4833 = vunpack.c.h.b16 %v3519
    %v4834 = vunpack.c.l.b16 %v3520
    %v4835 = vunpack.c.h.b16 %v3520
    %v4836 = vunpack.c.l.b16 %v3521
    %v4837 = vunpack.c.h.b16 %v3521
    %v4838 = vunpack.c.l.b16 %v3522
    %v4839 = vunpack.c.h.b16 %v3522
    %v4840 = vunpack.c.l.b16 %v3523
    %v4841 = vunpack.c.h.b16 %v3523
    %v4842 = vunpack.c.l.b16 %v3524
    %v4843 = vunpack.c.h.b16 %v3524
    %v4844 = vunpack.c.l.b16 %v3525
    %v4845 = vunpack.c.h.b16 %v3525
    %v4846 = vunpack.c.l.b16 %v3526
    %v4847 = vunpack.c.h.b16 %v3526
    %v4848 = vunpack.c.l.b16 %v3527
    %v4849 = vunpack.c.h.b16 %v3527
    %v4850 = vunpack.c.l.b16 %v3528
    %v4851 = vunpack.c.h.b16 %v3528
    %v4852 = vunpack.c.l.b16 %v3529
    %v4853 = vunpack.c.h.b16 %v3529
    %v4854 = vunpack.c.l.b16 %v3530
    %v4855 = vunpack.c.h.b16 %v3530
    %v4856 = vunpack.c.l.b16 %v3531
    %v4857 = vunpack.c.h.b16 %v3531
    %v4858 = vunpack.c.l.b16 %v3532
    %v4859 = vunpack.c.h.b16 %v3532
    %v4860 = vunpack.c.l.b16 %v3533
    %v4861 = vunpack.c.h.b16 %v3533
    %v4862 = vunpack.c.l.b16 %v3534
    %v4863 = vunpack.c.h.b16 %v3534
    %v4864 = vunpack.c.l.b16 %v3535
    %v4865 = vunpack.c.h.b16 %v3535
    %v4866 = vunpack.c.l.b16 %v3536
    %v4867 = vunpack.c.h.b16 %v3536
    %v4868 = vunpack.c.l.b16 %v3537
    %v4869 = vunpack.c.h.b16 %v3537
    %v4870 = vunpack.c.l.b16 %v3538
    %v4871 = vunpack.c.h.b16 %v3538
    %v4872 = vunpack.c.l.b16 %v3539
    %v4873 = vunpack.c.h.b16 %v3539
    %v4874 = vunpack.c.l.b16 %v3540
    %v4875 = vunpack.c.h.b16 %v3540
    %v4876 = vunpack.c.l.b16 %v3541
    %v4877 = vunpack.c.h.b16 %v3541
    %v4878 = vunpack.c.l.b16 %v3542
    %v4879 = vunpack.c.h.b16 %v3542
    %v4880 = vunpack.c.l.b16 %v3543
    %v4881 = vunpack.c.h.b16 %v3543
    %v4882 = vunpack.c.l.b16 %v3544
    %v4883 = vunpack.c.h.b16 %v3544
    %v4884 = vunpack.c.l.b16 %v3545
    %v4885 = vunpack.c.h.b16 %v3545
    %v4886 = vunpack.c.l.b16 %v3546
    %v4887 = vunpack.c.h.b16 %v3546
    %v4888 = vunpack.c.l.b16 %v3547
    %v4889 = vunpack.c.h.b16 %v3547
    %v4890 = vunpack.c.l.b16 %v3548
    %v4891 = vunpack.c.h.b16 %v3548
    %v4892 = vunpack.c.l.b16 %v3549
    %v4893 = vunpack.c.h.b16 %v3549
    %v4894 = vunpack.c.l.b16 %v3550
    %v4895 = vunpack.c.h.b16 %v3550
    %v4896 = vunpack.c.l.b16 %v3551
    %v4897 = vunpack.c.h.b16 %v3551
    %v4898 = vunpack.c.l.b16 %v3552
    %v4899 = vunpack.c.h.b16 %v3552
    %v4900 = vunpack.c.l.b16 %v3553
    %v4901 = vunpack.c.h.b16 %v3553
    %v4902 = vunpack.c.l.b16 %v3554
    %v4903 = vunpack.c.h.b16 %v3554
    %v4904 = vunpack.c.l.b16 %v3555
    %v4905 = vunpack.c.h.b16 %v3555
    %v4906 = vunpack.c.l.b16 %v3556
    %v4907 = vunpack.c.h.b16 %v3556
    %v4908 = vunpack.c.l.b16 %v3557
    %v4909 = vunpack.c.h.b16 %v3557
    %v4910 = vunpack.c.l.b16 %v3558
    %v4911 = vunpack.c.h.b16 %v3558
    %v4912 = vunpack.c.l.b16 %v3559
    %v4913 = vunpack.c.h.b16 %v3559
    %v4914 = vunpack.c.l.b16 %v3560
    %v4915 = vunpack.c.h.b16 %v3560
    %v4916 = vunpack.c.l.b16 %v3561
    %v4917 = vunpack.c.h.b16 %v3561
    %v4918 = vunpack.c.l.b16 %v3562
    %v4919 = vunpack.c.h.b16 %v3562
    %v4920 = vunpack.c.l.b16 %v3563
    %v4921 = vunpack.c.h.b16 %v3563
    %v4922 = vunpack.c.l.b16 %v3564
    %v4923 = vunpack.c.h.b16 %v3564
    %v4924 = vunpack.c.l.b16 %v3565
    %v4925 = vunpack.c.h.b16 %v3565
    %v4926 = vunpack.c.l.b16 %v3566
    %v4927 = vunpack.c.h.b16 %v3566
    %v4928 = vunpack.c.l.b16 %v3567
    %v4929 = vunpack.c.h.b16 %v3567
    %v4930 = vunpack.c.l.b16 %v3568
    %v4931 = vunpack.c.h.b16 %v3568
    %v4932 = vunpack.c.l.b16 %v3569
    %v4933 = vunpack.c.h.b16 %v3569
    %v4934 = vunpack.c.l.b16 %v3570
    %v4935 = vunpack.c.h.b16 %v3570
    %v4936 = vunpack.c.l.b16 %v3571
    %v4937 = vunpack.c.h.b16 %v3571
    %v4938 = vunpack.c.l.b16 %v3572
    %v4939 = vunpack.c.h.b16 %v3572
    %v4940 = vunpack.c.l.b16 %v3573
    %v4941 = vunpack.c.h.b16 %v3573
    %v4942 = vunpack.c.l.b16 %v3574
    %v4943 = vunpack.c.h.b16 %v3574
    %v4944 = vunpack.c.l.b16 %v3575
    %v4945 = vunpack.c.h.b16 %v3575
    %v4946 = vunpack.c.l.b16 %v3576
    %v4947 = vunpack.c.h.b16 %v3576
    %v4948 = vunpack.c.l.b16 %v3577
    %v4949 = vunpack.c.h.b16 %v3577
    %v4950 = vunpack.c.l.b16 %v3578
    %v4951 = vunpack.c.h.b16 %v3578
    %v4952 = vunpack.c.l.b16 %v3579
    %v4953 = vunpack.c.h.b16 %v3579
    %v4954 = vunpack.c.l.b16 %v3580
    %v4955 = vunpack.c.h.b16 %v3580
    %v4956 = vunpack.c.l.b16 %v3581
    %v4957 = vunpack.c.h.b16 %v3581
    %v4958 = vunpack.c.l.b16 %v3582
    %v4959 = vunpack.c.h.b16 %v3582
    %v4960 = vunpack.c.l.b16 %v3583
    %v4961 = vunpack.c.h.b16 %v3583
    %v4962 = vunpack.c.l.b16 %v3584
    %v4963 = vunpack.c.h.b16 %v3584
    %v4964 = vunpack.c.l.b16 %v3585
    %v4965 = vunpack.c.h.b16 %v3585
    %v4966 = vunpack.c.l.b16 %v3586
    %v4967 = vunpack.c.h.b16 %v3586
    %v4968 = vunpack.c.l.b16 %v3587
    %v4969 = vunpack.c.h.b16 %v3587
    %v4970 = vunpack.c.l.b16 %v3588
    %v4971 = vunpack.c.h.b16 %v3588
    %v4972 = vunpack.c.l.b16 %v3589
    %v4973 = vunpack.c.h.b16 %v3589
    %v4974 = vunpack.c.l.b16 %v3590
    %v4975 = vunpack.c.h.b16 %v3590
    %v4976 = vunpack.c.l.b16 %v3591
    %v4977 = vunpack.c.h.b16 %v3591
    %v4978 = vunpack.c.l.b16 %v3592
    %v4979 = vunpack.c.h.b16 %v3592
    %v4980 = vunpack.c.l.b16 %v3593
    %v4981 = vunpack.c.h.b16 %v3593
    %v4982 = vunpack.c.l.b16 %v3594
    %v4983 = vunpack.c.h.b16 %v3594
    %v4984 = vunpack.c.l.b16 %v3595
    %v4985 = vunpack.c.h.b16 %v3595
    %v4986 = vunpack.c.l.b16 %v3596
    %v4987 = vunpack.c.h.b16 %v3596
    %v4988 = vunpack.c.l.b16 %v3597
    %v4989 = vunpack.c.h.b16 %v3597
    %v4990 = vunpack.c.l.b16 %v3598
    %v4991 = vunpack.c.h.b16 %v3598
    %v4992 = vunpack.c.l.b16 %v3599
    %v4993 = vunpack.c.h.b16 %v3599
    %v4994 = vunpack.c.l.b16 %v3600
    %v4995 = vunpack.c.h.b16 %v3600
    %v4996 = vunpack.c.l.b16 %v3601
    %v4997 = vunpack.c.h.b16 %v3601
    %v4998 = vunpack.c.l.b16 %v3602
    %v4999 = vunpack.c.h.b16 %v3602
    %v5000 = vunpack.c.l.b16 %v3603
    %v5001 = vunpack.c.h.b16 %v3603
    %v5002 = vunpack.c.l.b16 %v3604
    %v5003 = vunpack.c.h.b16 %v3604
    %v5004 = vunpack.c.l.b16 %v3605
    %v5005 = vunpack.c.h.b16 %v3605
    %v5006 = vunpack.c.l.b16 %v3606
    %v5007 = vunpack.c.h.b16 %v3606
    %v5008 = vunpack.c.l.b16 %v3607
    %v5009 = vunpack.c.h.b16 %v3607
    %v5010 = vunpack.c.l.b16 %v3608
    %v5011 = vunpack.c.h.b16 %v3608
    %v5012 = vunpack.c.l.b16 %v3609
    %v5013 = vunpack.c.h.b16 %v3609
    %v5014 = vunpack.c.l.b16 %v3610
    %v5015 = vunpack.c.h.b16 %v3610
    %v5016 = vunpack.c.l.b16 %v3611
    %v5017 = vunpack.c.h.b16 %v3611
    %v5018 = vunpack.c.l.b16 %v3612
    %v5019 = vunpack.c.h.b16 %v3612
    %v5020 = vunpack.c.l.b16 %v3613
    %v5021 = vunpack.c.h.b16 %v3613
    %v5022 = vunpack.c.l.b16 %v3614
    %v5023 = vunpack.c.h.b16 %v3614
    %v5024 = vunpack.c.l.b16 %v3615
    %v5025 = vunpack.c.h.b16 %v3615
    %v5026 = vunpack.c.l.b16 %v3616
    %v5027 = vunpack.c.h.b16 %v3616
    %v5028 = vunpack.c.l.b16 %v3617
    %v5029 = vunpack.c.h.b16 %v3617
    %v5030 = vunpack.c.l.b16 %v3618
    %v5031 = vunpack.c.h.b16 %v3618
    %v5032 = vunpack.c.l.b16 %v3619
    %v5033 = vunpack.c.h.b16 %v3619
    %v5034 = vunpack.c.l.b16 %v3620
    %v5035 = vunpack.c.h.b16 %v3620
    %v5036 = vunpack.c.l.b16 %v3621
    %v5037 = vunpack.c.h.b16 %v3621
    %v5038 = vunpack.c.l.b16 %v3622
    %v5039 = vunpack.c.h.b16 %v3622
    %v5040 = vunpack.c.l.b16 %v3623
    %v5041 = vunpack.c.h.b16 %v3623
    %v5042 = vunpack.c.l.b16 %v3624
    %v5043 = vunpack.c.h.b16 %v3624
    %v5044 = vunpack.c.l.b16 %v3625
    %v5045 = vunpack.c.h.b16 %v3625
    %v5046 = vunpack.c.l.b16 %v3626
    %v5047 = vunpack.c.h.b16 %v3626
    %v5048 = vunpack.c.l.b16 %v3627
    %v5049 = vunpack.c.h.b16 %v3627
    %v5050 = vunpack.c.l.b16 %v3628
    %v5051 = vunpack.c.h.b16 %v3628
    %v5052 = vunpack.c.l.b16 %v3629
    %v5053 = vunpack.c.h.b16 %v3629
    %v5054 = vunpack.c.l.b16 %v3630
    %v5055 = vunpack.c.h.b16 %v3630
    %v5056 = vunpack.c.l.b16 %v3631
    %v5057 = vunpack.c.h.b16 %v3631
    %v5058 = vunpack.c.l.b16 %v3632
    %v5059 = vunpack.c.h.b16 %v3632
    %v5060 = vunpack.c.l.b16 %v3633
    %v5061 = vunpack.c.h.b16 %v3633
    %v5062 = vunpack.c.l.b16 %v3634
    %v5063 = vunpack.c.h.b16 %v3634
    %v5064 = vunpack.c.l.b16 %v3635
    %v5065 = vunpack.c.h.b16 %v3635
    %v5066 = vunpack.c.l.b16 %v3636
    %v5067 = vunpack.c.h.b16 %v3636
    %v5068 = vunpack.c.l.b16 %v3637
    %v5069 = vunpack.c.h.b16 %v3637
    %v5070 = vunpack.c.l.b16 %v3638
    %v5071 = vunpack.c.h.b16 %v3638
    %v5072 = vunpack.c.l.b16 %v3639
    %v5073 = vunpack.c.h.b16 %v3639
    %v5074 = vunpack.c.l.b16 %v3640
    %v5075 = vunpack.c.h.b16 %v3640
    %v5076 = vunpack.c.l.b16 %v3641
    %v5077 = vunpack.c.h.b16 %v3641
    %v5078 = vunpack.c.l.b16 %v3642
    %v5079 = vunpack.c.h.b16 %v3642
    %v5080 = vunpack.c.l.b16 %v3643
    %v5081 = vunpack.c.h.b16 %v3643
    %v5082 = vunpack.c.l.b16 %v3644
    %v5083 = vunpack.c.h.b16 %v3644
    %v5084 = vunpack.c.l.b16 %v3645
    %v5085 = vunpack.c.h.b16 %v3645
    %v5086 = vunpack.c.l.b16 %v3646
    %v5087 = vunpack.c.h.b16 %v3646
    %v5088 = vunpack.c.l.b16 %v3647
    %v5089 = vunpack.c.h.b16 %v3647
    %v5090 = vunpack.c.l.b16 %v3648
    %v5091 = vunpack.c.h.b16 %v3648
    %v5092 = vunpack.c.l.b16 %v3649
    %v5093 = vunpack.c.h.b16 %v3649
    %v5094 = vunpack.c.l.b16 %v3650
    %v5095 = vunpack.c.h.b16 %v3650
    %v5096 = vunpack.c.l.b16 %v3651
    %v5097 = vunpack.c.h.b16 %v3651
    %v5098 = vunpack.c.l.b16 %v3652
    %v5099 = vunpack.c.h.b16 %v3652
    %v5100 = vunpack.c.l.b16 %v3653
    %v5101 = vunpack.c.h.b16 %v3653
    %v5102 = vunpack.c.l.b16 %v3654
    %v5103 = vunpack.c.h.b16 %v3654
    %v5104 = vunpack.c.l.b16 %v3655
    %v5105 = vunpack.c.h.b16 %v3655
    %v5106 = vunpack.c.l.b16 %v3656
    %v5107 = vunpack.c.h.b16 %v3656
    %v5108 = vunpack.c.l.b16 %v3657
    %v5109 = vunpack.c.h.b16 %v3657
    %v5110 = vunpack.c.l.b16 %v3658
    %v5111 = vunpack.c.h.b16 %v3658
    %v5112 = vunpack.c.l.b16 %v3659
    %v5113 = vunpack.c.h.b16 %v3659
    %v5114 = vunpack.c.l.b16 %v3660
    %v5115 = vunpack.c.h.b16 %v3660
    %v5116 = vunpack.c.l.b16 %v3661
    %v5117 = vunpack.c.h.b16 %v3661
    %v5118 = vunpack.c.l.b16 %v3662
    %v5119 = vunpack.c.h.b16 %v3662
    %v5120 = vunpack.c.l.b16 %v3663
    %v5121 = vunpack.c.h.b16 %v3663
    %v5122 = vunpack.c.l.b16 %v3664
    %v5123 = vunpack.c.h.b16 %v3664
    %v5124 = vunpack.c.l.b16 %v3665
    %v5125 = vunpack.c.h.b16 %v3665
    %v5126 = vunpack.c.l.b16 %v3666
    %v5127 = vunpack.c.h.b16 %v3666
    %v5128 = vunpack.c.l.b16 %v3667
    %v5129 = vunpack.c.h.b16 %v3667
    %v5130 = vunpack.c.l.b16 %v3668
    %v5131 = vunpack.c.h.b16 %v3668
    %v5132 = vunpack.c.l.b16 %v3669
    %v5133 = vunpack.c.h.b16 %v3669
    %v5134 = vunpack.c.l.b16 %v3670
    %v5135 = vunpack.c.h.b16 %v3670
    %v5136 = vunpack.c.l.b16 %v3671
    %v5137 = vunpack.c.h.b16 %v3671
    %v5138 = vunpack.c.l.b16 %v3672
    %v5139 = vunpack.c.h.b16 %v3672
    %v5140 = vunpack.c.l.b16 %v3673
    %v5141 = vunpack.c.h.b16 %v3673
    %v5142 = vunpack.c.l.b16 %v3674
    %v5143 = vunpack.c.h.b16 %v3674
    %v5144 = vunpack.c.l.b16 %v3675
    %v5145 = vunpack.c.h.b16 %v3675
    %v5146 = vunpack.c.l.b16 %v3676
    %v5147 = vunpack.c.h.b16 %v3676
    %v5148 = vunpack.c.l.b16 %v3677
    %v5149 = vunpack.c.h.b16 %v3677
    %v5150 = vunpack.c.l.b16 %v3678
    %v5151 = vunpack.c.h.b16 %v3678
    %v5152 = vunpack.c.l.b16 %v3679
    %v5153 = vunpack.c.h.b16 %v3679
    %v5154 = vunpack.c.l.b16 %v3680
    %v5155 = vunpack.c.h.b16 %v3680
    %v5156 = vunpack.c.l.b16 %v3681
    %v5157 = vunpack.c.h.b16 %v3681
    %v5158 = vunpack.c.l.b16 %v3682
    %v5159 = vunpack.c.h.b16 %v3682
    %v5160 = vunpack.c.l.b16 %v3683
    %v5161 = vunpack.c.h.b16 %v3683
    %v5162 = vunpack.c.l.b16 %v3684
    %v5163 = vunpack.c.h.b16 %v3684
    %v5164 = vunpack.c.l.b16 %v3685
    %v5165 = vunpack.c.h.b16 %v3685
    %v5166 = vunpack.c.l.b16 %v3686
    %v5167 = vunpack.c.h.b16 %v3686
    %v5168 = vunpack.c.l.b16 %v3687
    %v5169 = vunpack.c.h.b16 %v3687
    %v5170 = vunpack.c.l.b16 %v3688
    %v5171 = vunpack.c.h.b16 %v3688
    %v5172 = vunpack.c.l.b16 %v3689
    %v5173 = vunpack.c.h.b16 %v3689
    %v5174 = vunpack.c.l.b16 %v3690
    %v5175 = vunpack.c.h.b16 %v3690
    %v5176 = vunpack.c.l.b16 %v3691
    %v5177 = vunpack.c.h.b16 %v3691
    %v5178 = vunpack.c.l.b16 %v3692
    %v5179 = vunpack.c.h.b16 %v3692
    %v5180 = vunpack.c.l.b16 %v3693
    %v5181 = vunpack.c.h.b16 %v3693
    %v5182 = vunpack.c.l.b16 %v3694
    %v5183 = vunpack.c.h.b16 %v3694
    %v5184 = vunpack.c.l.b16 %v3695
    %v5185 = vunpack.c.h.b16 %v3695
    %v5186 = vunpack.c.l.b16 %v3696
    %v5187 = vunpack.c.h.b16 %v3696
    %v5188 = vunpack.c.l.b16 %v3697
    %v5189 = vunpack.c.h.b16 %v3697
    %v5190 = vunpack.c.l.b16 %v3698
    %v5191 = vunpack.c.h.b16 %v3698
    %v5192 = vunpack.c.l.b16 %v3699
    %v5193 = vunpack.c.h.b16 %v3699
    %v5194 = vunpack.c.l.b16 %v3700
    %v5195 = vunpack.c.h.b16 %v3700
    %v5196 = vunpack.c.l.b16 %v3701
    %v5197 = vunpack.c.h.b16 %v3701
    %v5198 = vunpack.c.l.b16 %v3702
    %v5199 = vunpack.c.h.b16 %v3702
    %v5200 = vunpack.c.l.b16 %v3703
    %v5201 = vunpack.c.h.b16 %v3703
    %v5202 = vunpack.c.l.b16 %v3704
    %v5203 = vunpack.c.h.b16 %v3704
    %v5204 = vunpack.c.l.b16 %v3705
    %v5205 = vunpack.c.h.b16 %v3705
    %v5206 = vunpack.c.l.b16 %v3706
    %v5207 = vunpack.c.h.b16 %v3706
    %v5208 = vunpack.c.l.b16 %v3707
    %v5209 = vunpack.c.h.b16 %v3707
    %v5210 = vunpack.c.l.b16 %v3708
    %v5211 = vunpack.c.h.b16 %v3708
    %v5212 = vunpack.c.l.b16 %v3709
    %v5213 = vunpack.c.h.b16 %v3709
    %v5214 = vunpack.c.l.b16 %v3710
    %v5215 = vunpack.c.h.b16 %v3710
    %v5216 = vunpack.c.l.b16 %v3711
    %v5217 = vunpack.c.h.b16 %v3711
    %v5218 = vunpack.c.l.b16 %v3712
    %v5219 = vunpack.c.h.b16 %v3712
    %v5220 = vunpack.c.l.b16 %v3713
    %v5221 = vunpack.c.h.b16 %v3713
    %v5222 = vunpack.c.l.b16 %v3714
    %v5223 = vunpack.c.h.b16 %v3714
    %v5224 = vunpack.c.l.b16 %v3715
    %v5225 = vunpack.c.h.b16 %v3715
    %v5226 = vunpack.c.l.b16 %v3716
    %v5227 = vunpack.c.h.b16 %v3716
    %v5228 = vunpack.c.l.b16 %v3717
    %v5229 = vunpack.c.h.b16 %v3717
    %v5230 = vunpack.c.l.b16 %v3718
    %v5231 = vunpack.c.h.b16 %v3718
    %v5232 = vunpack.c.l.b16 %v3719
    %v5233 = vunpack.c.h.b16 %v3719
    %v5234 = vunpack.c.l.b16 %v3720
    %v5235 = vunpack.c.h.b16 %v3720
    %v5236 = vunpack.c.l.b16 %v3721
    %v5237 = vunpack.c.h.b16 %v3721
    %v5238 = vunpack.c.l.b16 %v3722
    %v5239 = vunpack.c.h.b16 %v3722
    %v5240 = vunpack.c.l.b16 %v3723
    %v5241 = vunpack.c.h.b16 %v3723
    %v5242 = vunpack.c.l.b16 %v3724
    %v5243 = vunpack.c.h.b16 %v3724
    %v5244 = vunpack.c.l.b16 %v3725
    %v5245 = vunpack.c.h.b16 %v3725
    %v5246 = vunpack.c.l.b16 %v3726
    %v5247 = vunpack.c.h.b16 %v3726
    %v5248 = vunpack.c.l.b16 %v3727
    %v5249 = vunpack.c.h.b16 %v3727
    %v5250 = vunpack.c.l.b16 %v3728
    %v5251 = vunpack.c.h.b16 %v3728
    %v5252 = vunpack.c.l.b16 %v3729
    %v5253 = vunpack.c.h.b16 %v3729
    %v5254 = vunpack.c.l.b16 %v3730
    %v5255 = vunpack.c.h.b16 %v3730
    %v5256 = vunpack.c.l.b16 %v3731
    %v5257 = vunpack.c.h.b16 %v3731
    %v5258 = vunpack.c.l.b16 %v3732
    %v5259 = vunpack.c.h.b16 %v3732
    %v5260 = vunpack.c.l.b16 %v3733
    %v5261 = vunpack.c.h.b16 %v3733
    %v5262 = vunpack.c.l.b16 %v3734
    %v5263 = vunpack.c.h.b16 %v3734
    %v5264 = vunpack.c.l.b16 %v3735
    %v5265 = vunpack.c.h.b16 %v3735
    %v5266 = vunpack.c.l.b16 %v3736
    %v5267 = vunpack.c.h.b16 %v3736
    %v5268 = vunpack.c.l.b16 %v3737
    %v5269 = vunpack.c.h.b16 %v3737
    %v5270 = vunpack.c.l.b16 %v3738
    %v5271 = vunpack.c.h.b16 %v3738
    %v5272 = vunpack.c.l.b16 %v3739
    %v5273 = vunpack.c.h.b16 %v3739
    %v5274 = vunpack.c.l.b16 %v3740
    %v5275 = vunpack.c.h.b16 %v3740
    %v5276 = vunpack.c.l.b16 %v3741
    %v5277 = vunpack.c.h.b16 %v3741
    %v5278 = vunpack.c.l.b16 %v3742
    %v5279 = vunpack.c.h.b16 %v3742
    %v5280 = vunpack.c.l.b16 %v3743
    %v5281 = vunpack.c.h.b16 %v3743
    %v5282 = vunpack.c.l.b16 %v3744
    %v5283 = vunpack.c.h.b16 %v3744
    %v5284 = vunpack.c.l.b16 %v3745
    %v5285 = vunpack.c.h.b16 %v3745
    %v5286 = vunpack.c.l.b16 %v3746
    %v5287 = vunpack.c.h.b16 %v3746
    %v5288 = vunpack.c.l.b16 %v3747
    %v5289 = vunpack.c.h.b16 %v3747
    %v5290 = vunpack.c.l.b16 %v3748
    %v5291 = vunpack.c.h.b16 %v3748
    %v5292 = vunpack.c.l.b16 %v3749
    %v5293 = vunpack.c.h.b16 %v3749
    %v5294 = vunpack.c.l.b16 %v3750
    %v5295 = vunpack.c.h.b16 %v3750
    %v5296 = vunpack.c.l.b16 %v3751
    %v5297 = vunpack.c.h.b16 %v3751
    %v5298 = vunpack.c.l.b16 %v3752
    %v5299 = vunpack.c.h.b16 %v3752
    %v5300 = vunpack.c.l.b16 %v3753
    %v5301 = vunpack.c.h.b16 %v3753
    %v5302 = vunpack.c.l.b16 %v3754
    %v5303 = vunpack.c.h.b16 %v3754
    %v5304 = vunpack.c.l.b16 %v3755
    %v5305 = vunpack.c.h.b16 %v3755
    %v5306 = vunpack.c.l.b16 %v3756
    %v5307 = vunpack.c.h.b16 %v3756
    %v5308 = vunpack.c.l.b16 %v3757
    %v5309 = vunpack.c.h.b16 %v3757
    %v5310 = vunpack.c.l.b16 %v3758
    %v5311 = vunpack.c.h.b16 %v3758
    %v5312 = vunpack.c.l.b16 %v3759
    %v5313 = vunpack.c.h.b16 %v3759
    %v5314 = vpack.c.b16 %v4298, %v4290
    %v5315 = vpack.c.b16 %v4299, %v4291
    %v5316 = vpack.c.b16 %v4300, %v4292
    %v5317 = vpack.c.b16 %v4301, %v4293
    %v5318 = vpack.c.b16 %v4302, %v4294
    %v5319 = vpack.c.b16 %v4303, %v4295
    %v5320 = vpack.c.b16 %v4304, %v4296
    %v5321 = vpack.c.b16 %v4305, %v4297
    %v5322 = vpack.c.b16 %v4314, %v4306
    %v5323 = vpack.c.b16 %v4315, %v4307
    %v5324 = vpack.c.b16 %v4316, %v4308
    %v5325 = vpack.c.b16 %v4317, %v4309
    %v5326 = vpack.c.b16 %v4318, %v4310
    %v5327 = vpack.c.b16 %v4319, %v4311
    %v5328 = vpack.c.b16 %v4320, %v4312
    %v5329 = vpack.c.b16 %v4321, %v4313
    %v5330 = vpack.c.b16 %v4330, %v4322
    %v5331 = vpack.c.b16 %v4331, %v4323
    %v5332 = vpack.c.b16 %v4332, %v4324
    %v5333 = vpack.c.b16 %v4333, %v4325
    %v5334 = vpack.c.b16 %v4334, %v4326
    %v5335 = vpack.c.b16 %v4335, %v4327
    %v5336 = vpack.c.b16 %v4336, %v4328
    %v5337 = vpack.c.b16 %v4337, %v4329
    %v5338 = vpack.c.b16 %v4346, %v4338
    %v5339 = vpack.c.b16 %v4347, %v4339
    %v5340 = vpack.c.b16 %v4348, %v4340
    %v5341 = vpack.c.b16 %v4349, %v4341
    %v5342 = vpack.c.b16 %v4350, %v4342
    %v5343 = vpack.c.b16 %v4351, %v4343
    %v5344 = vpack.c.b16 %v4352, %v4344
    %v5345 = vpack.c.b16 %v4353, %v4345
    %v5346 = vpack.c.b16 %v4362, %v4354
    %v5347 = vpack.c.b16 %v4363, %v4355
    %v5348 = vpack.c.b16 %v4364, %v4356
    %v5349 = vpack.c.b16 %v4365, %v4357
    %v5350 = vpack.c.b16 %v4366, %v4358
    %v5351 = vpack.c.b16 %v4367, %v4359
    %v5352 = vpack.c.b16 %v4368, %v4360
    %v5353 = vpack.c.b16 %v4369, %v4361
    %v5354 = vpack.c.b16 %v4378, %v4370
    %v5355 = vpack.c.b16 %v4379, %v4371
    %v5356 = vpack.c.b16 %v4380, %v4372
    %v5357 = vpack.c.b16 %v4381, %v4373
    %v5358 = vpack.c.b16 %v4382, %v4374
    %v5359 = vpack.c.b16 %v4383, %v4375
    %v5360 = vpack.c.b16 %v4384, %v4376
    %v5361 = vpack.c.b16 %v4385, %v4377
    %v5362 = vpack.c.b16 %v4394, %v4386
    %v5363 = vpack.c.b16 %v4395, %v4387
    %v5364 = vpack.c.b16 %v4396, %v4388
    %v5365 = vpack.c.b16 %v4397, %v4389
    %v5366 = vpack.c.b16 %v4398, %v4390
    %v5367 = vpack.c.b16 %v4399, %v4391
    %v5368 = vpack.c.b16 %v4400, %v4392
    %v5369 = vpack.c.b16 %v4401, %v4393
    %v5370 = vpack.c.b16 %v4410, %v4402
    %v5371 = vpack.c.b16 %v4411, %v4403
    %v5372 = vpack.c.b16 %v4412, %v4404
    %v5373 = vpack.c.b16 %v4413, %v4405
    %v5374 = vpack.c.b16 %v4414, %v4406
    %v5375 = vpack.c.b16 %v4415, %v4407
    %v5376 = vpack.c.b16 %v4416, %v4408
    %v5377 = vpack.c.b16 %v4417, %v4409
    %v5378 = vpack.c.b16 %v4426, %v4418
    %v5379 = vpack.c.b16 %v4427, %v4419
    %v5380 = vpack.c.b16 %v4428, %v4420
    %v5381 = vpack.c.b16 %v4429, %v4421
    %v5382 = vpack.c.b16 %v4430, %v4422
    %v5383 = vpack.c.b16 %v4431, %v4423
    %v5384 = vpack.c.b16 %v4432, %v4424
    %v5385 = vpack.c.b16 %v4433, %v4425
    %v5386 = vpack.c.b16 %v4442, %v4434
    %v5387 = vpack.c.b16 %v4443, %v4435
    %v5388 = vpack.c.b16 %v4444, %v4436
    %v5389 = vpack.c.b16 %v4445, %v4437
    %v5390 = vpack.c.b16 %v4446, %v4438
    %v5391 = vpack.c.b16 %v4447, %v4439
    %v5392 = vpack.c.b16 %v4448, %v4440
    %v5393 = vpack.c.b16 %v4449, %v4441
    %v5394 = vpack.c.b16 %v4458, %v4450
    %v5395 = vpack.c.b16 %v4459, %v4451
    %v5396 = vpack.c.b16 %v4460, %v4452
    %v5397 = vpack.c.b16 %v4461, %v4453
    %v5398 = vpack.c.b16 %v4462, %v4454
    %v5399 = vpack.c.b16 %v4463, %v4455
    %v5400 = vpack.c.b16 %v4464, %v4456
    %v5401 = vpack.c.b16 %v4465, %v4457
    %v5402 = vpack.c.b16 %v4474, %v4466
    %v5403 = vpack.c.b16 %v4475, %v4467
    %v5404 = vpack.c.b16 %v4476, %v4468
    %v5405 = vpack.c.b16 %v4477, %v4469
    %v5406 = vpack.c.b16 %v4478, %v4470
    %v5407 = vpack.c.b16 %v4479, %v4471
    %v5408 = vpack.c.b16 %v4480, %v4472
    %v5409 = vpack.c.b16 %v4481, %v4473
    %v5410 = vpack.c.b16 %v4490, %v4482
    %v5411 = vpack.c.b16 %v4491, %v4483
    %v5412 = vpack.c.b16 %v4492, %v4484
    %v5413 = vpack.c.b16 %v4493, %v4485
    %v5414 = vpack.c.b16 %v4494, %v4486
    %v5415 = vpack.c.b16 %v4495, %v4487
    %v5416 = vpack.c.b16 %v4496, %v4488
    %v5417 = vpack.c.b16 %v4497, %v4489
    %v5418 = vpack.c.b16 %v4506, %v4498
    %v5419 = vpack.c.b16 %v4507, %v4499
    %v5420 = vpack.c.b16 %v4508, %v4500
    %v5421 = vpack.c.b16 %v4509, %v4501
    %v5422 = vpack.c.b16 %v4510, %v4502
    %v5423 = vpack.c.b16 %v4511, %v4503
    %v5424 = vpack.c.b16 %v4512, %v4504
    %v5425 = vpack.c.b16 %v4513, %v4505
    %v5426 = vpack.c.b16 %v4522, %v4514
    %v5427 = vpack.c.b16 %v4523, %v4515
    %v5428 = vpack.c.b16 %v4524, %v4516
    %v5429 = vpack.c.b16 %v4525, %v4517
    %v5430 = vpack.c.b16 %v4526, %v4518
    %v5431 = vpack.c.b16 %v4527, %v4519
    %v5432 = vpack.c.b16 %v4528, %v4520
    %v5433 = vpack.c.b16 %v4529, %v4521
    %v5434 = vpack.c.b16 %v4538, %v4530
    %v5435 = vpack.c.b16 %v4539, %v4531
    %v5436 = vpack.c.b16 %v4540, %v4532
    %v5437 = vpack.c.b16 %v4541, %v4533
    %v5438 = vpack.c.b16 %v4542, %v4534
    %v5439 = vpack.c.b16 %v4543, %v4535
    %v5440 = vpack.c.b16 %v4544, %v4536
    %v5441 = vpack.c.b16 %v4545, %v4537
    %v5442 = vpack.c.b16 %v4554, %v4546
    %v5443 = vpack.c.b16 %v4555, %v4547
    %v5444 = vpack.c.b16 %v4556, %v4548
    %v5445 = vpack.c.b16 %v4557, %v4549
    %v5446 = vpack.c.b16 %v4558, %v4550
    %v5447 = vpack.c.b16 %v4559, %v4551
    %v5448 = vpack.c.b16 %v4560, %v4552
    %v5449 = vpack.c.b16 %v4561, %v4553
    %v5450 = vpack.c.b16 %v4570, %v4562
    %v5451 = vpack.c.b16 %v4571, %v4563
    %v5452 = vpack.c.b16 %v4572, %v4564
    %v5453 = vpack.c.b16 %v4573, %v4565
    %v5454 = vpack.c.b16 %v4574, %v4566
    %v5455 = vpack.c.b16 %v4575, %v4567
    %v5456 = vpack.c.b16 %v4576, %v4568
    %v5457 = vpack.c.b16 %v4577, %v4569
    %v5458 = vpack.c.b16 %v4586, %v4578
    %v5459 = vpack.c.b16 %v4587, %v4579
    %v5460 = vpack.c.b16 %v4588, %v4580
    %v5461 = vpack.c.b16 %v4589, %v4581
    %v5462 = vpack.c.b16 %v4590, %v4582
    %v5463 = vpack.c.b16 %v4591, %v4583
    %v5464 = vpack.c.b16 %v4592, %v4584
    %v5465 = vpack.c.b16 %v4593, %v4585
    %v5466 = vpack.c.b16 %v4602, %v4594
    %v5467 = vpack.c.b16 %v4603, %v4595
    %v5468 = vpack.c.b16 %v4604, %v4596
    %v5469 = vpack.c.b16 %v4605, %v4597
    %v5470 = vpack.c.b16 %v4606, %v4598
    %v5471 = vpack.c.b16 %v4607, %v4599
    %v5472 = vpack.c.b16 %v4608, %v4600
    %v5473 = vpack.c.b16 %v4609, %v4601
    %v5474 = vpack.c.b16 %v4618, %v4610
    %v5475 = vpack.c.b16 %v4619, %v4611
    %v5476 = vpack.c.b16 %v4620, %v4612
    %v5477 = vpack.c.b16 %v4621, %v4613
    %v5478 = vpack.c.b16 %v4622, %v4614
    %v5479 = vpack.c.b16 %v4623, %v4615
    %v5480 = vpack.c.b16 %v4624, %v4616
    %v5481 = vpack.c.b16 %v4625, %v4617
    %v5482 = vpack.c.b16 %v4634, %v4626
    %v5483 = vpack.c.b16 %v4635, %v4627
    %v5484 = vpack.c.b16 %v4636, %v4628
    %v5485 = vpack.c.b16 %v4637, %v4629
    %v5486 = vpack.c.b16 %v4638, %v4630
    %v5487 = vpack.c.b16 %v4639, %v4631
    %v5488 = vpack.c.b16 %v4640, %v4632
    %v5489 = vpack.c.b16 %v4641, %v4633
    %v5490 = vpack.c.b16 %v4650, %v4642
    %v5491 = vpack.c.b16 %v4651, %v4643
    %v5492 = vpack.c.b16 %v4652, %v4644
    %v5493 = vpack.c.b16 %v4653, %v4645
    %v5494 = vpack.c.b16 %v4654, %v4646
    %v5495 = vpack.c.b16 %v4655, %v4647
    %v5496 = vpack.c.b16 %v4656, %v4648
    %v5497 = vpack.c.b16 %v4657, %v4649
    %v5498 = vpack.c.b16 %v4666, %v4658
    %v5499 = vpack.c.b16 %v4667, %v4659
    %v5500 = vpack.c.b16 %v4668, %v4660
    %v5501 = vpack.c.b16 %v4669, %v4661
    %v5502 = vpack.c.b16 %v4670, %v4662
    %v5503 = vpack.c.b16 %v4671, %v4663
    %v5504 = vpack.c.b16 %v4672, %v4664
    %v5505 = vpack.c.b16 %v4673, %v4665
    %v5506 = vpack.c.b16 %v4682, %v4674
    %v5507 = vpack.c.b16 %v4683, %v4675
    %v5508 = vpack.c.b16 %v4684, %v4676
    %v5509 = vpack.c.b16 %v4685, %v4677
    %v5510 = vpack.c.b16 %v4686, %v4678
    %v5511 = vpack.c.b16 %v4687, %v4679
    %v5512 = vpack.c.b16 %v4688, %v4680
    %v5513 = vpack.c.b16 %v4689, %v4681
    %v5514 = vpack.c.b16 %v4698, %v4690
    %v5515 = vpack.c.b16 %v4699, %v4691
    %v5516 = vpack.c.b16 %v4700, %v4692
    %v5517 = vpack.c.b16 %v4701, %v4693
    %v5518 = vpack.c.b16 %v4702, %v4694
    %v5519 = vpack.c.b16 %v4703, %v4695
    %v5520 = vpack.c.b16 %v4704, %v4696
    %v5521 = vpack.c.b16 %v4705, %v4697
    %v5522 = vpack.c.b16 %v4714, %v4706
    %v5523 = vpack.c.b16 %v4715, %v4707
    %v5524 = vpack.c.b16 %v4716, %v4708
    %v5525 = vpack.c.b16 %v4717, %v4709
    %v5526 = vpack.c.b16 %v4718, %v4710
    %v5527 = vpack.c.b16 %v4719, %v4711
    %v5528 = vpack.c.b16 %v4720, %v4712
    %v5529 = vpack.c.b16 %v4721, %v4713
    %v5530 = vpack.c.b16 %v4730, %v4722
    %v5531 = vpack.c.b16 %v4731, %v4723
    %v5532 = vpack.c.b16 %v4732, %v4724
    %v5533 = vpack.c.b16 %v4733, %v4725
    %v5534 = vpack.c.b16 %v4734, %v4726
    %v5535 = vpack.c.b16 %v4735, %v4727
    %v5536 = vpack.c.b16 %v4736, %v4728
    %v5537 = vpack.c.b16 %v4737, %v4729
    %v5538 = vpack.c.b16 %v4746, %v4738
    %v5539 = vpack.c.b16 %v4747, %v4739
    %v5540 = vpack.c.b16 %v4748, %v4740
    %v5541 = vpack.c.b16 %v4749, %v4741
    %v5542 = vpack.c.b16 %v4750, %v4742
    %v5543 = vpack.c.b16 %v4751, %v4743
    %v5544 = vpack.c.b16 %v4752, %v4744
    %v5545 = vpack.c.b16 %v4753, %v4745
    %v5546 = vpack.c.b16 %v4762, %v4754
    %v5547 = vpack.c.b16 %v4763, %v4755
    %v5548 = vpack.c.b16 %v4764, %v4756
    %v5549 = vpack.c.b16 %v4765, %v4757
    %v5550 = vpack.c.b16 %v4766, %v4758
    %v5551 = vpack.c.b16 %v4767, %v4759
    %v5552 = vpack.c.b16 %v4768, %v4760
    %v5553 = vpack.c.b16 %v4769, %v4761
    %v5554 = vpack.c.b16 %v4778, %v4770
    %v5555 = vpack.c.b16 %v4779, %v4771
    %v5556 = vpack.c.b16 %v4780, %v4772
    %v5557 = vpack.c.b16 %v4781, %v4773
    %v5558 = vpack.c.b16 %v4782, %v4774
    %v5559 = vpack.c.b16 %v4783, %v4775
    %v5560 = vpack.c.b16 %v4784, %v4776
    %v5561 = vpack.c.b16 %v4785, %v4777
    %v5562 = vpack.c.b16 %v4794, %v4786
    %v5563 = vpack.c.b16 %v4795, %v4787
    %v5564 = vpack.c.b16 %v4796, %v4788
    %v5565 = vpack.c.b16 %v4797, %v4789
    %v5566 = vpack.c.b16 %v4798, %v4790
    %v5567 = vpack.c.b16 %v4799, %v4791
    %v5568 = vpack.c.b16 %v4800, %v4792
    %v5569 = vpack.c.b16 %v4801, %v4793
    %v5570 = vpack.c.b16 %v4810, %v4802
    %v5571 = vpack.c.b16 %v4811, %v4803
    %v5572 = vpack.c.b16 %v4812, %v4804
    %v5573 = vpack.c.b16 %v4813, %v4805
    %v5574 = vpack.c.b16 %v4814, %v4806
    %v5575 = vpack.c.b16 %v4815, %v4807
    %v5576 = vpack.c.b16 %v4816, %v4808
    %v5577 = vpack.c.b16 %v4817, %v4809
    %v5578 = vpack.c.b16 %v4826, %v4818
    %v5579 = vpack.c.b16 %v4827, %v4819
    %v5580 = vpack.c.b16 %v4828, %v4820
    %v5581 = vpack.c.b16 %v4829, %v4821
    %v5582 = vpack.c.b16 %v4830, %v4822
    %v5583 = vpack.c.b16 %v4831, %v4823
    %v5584 = vpack.c.b16 %v4832, %v4824
    %v5585 = vpack.c.b16 %v4833, %v4825
    %v5586 = vpack.c.b16 %v4842, %v4834
    %v5587 = vpack.c.b16 %v4843, %v4835
    %v5588 = vpack.c.b16 %v4844, %v4836
    %v5589 = vpack.c.b16 %v4845, %v4837
    %v5590 = vpack.c.b16 %v4846, %v4838
    %v5591 = vpack.c.b16 %v4847, %v4839
    %v5592 = vpack.c.b16 %v4848, %v4840
    %v5593 = vpack.c.b16 %v4849, %v4841
    %v5594 = vpack.c.b16 %v4858, %v4850
    %v5595 = vpack.c.b16 %v4859, %v4851
    %v5596 = vpack.c.b16 %v4860, %v4852
    %v5597 = vpack.c.b16 %v4861, %v4853
    %v5598 = vpack.c.b16 %v4862, %v4854
    %v5599 = vpack.c.b16 %v4863, %v4855
    %v5600 = vpack.c.b16 %v4864, %v4856
    %v5601 = vpack.c.b16 %v4865, %v4857
    %v5602 = vpack.c.b16 %v4874, %v4866
    %v5603 = vpack.c.b16 %v4875, %v4867
    %v5604 = vpack.c.b16 %v4876, %v4868
    %v5605 = vpack.c.b16 %v4877, %v4869
    %v5606 = vpack.c.b16 %v4878, %v4870
    %v5607 = vpack.c.b16 %v4879, %v4871
    %v5608 = vpack.c.b16 %v4880, %v4872
    %v5609 = vpack.c.b16 %v4881, %v4873
    %v5610 = vpack.c.b16 %v4890, %v4882
    %v5611 = vpack.c.b16 %v4891, %v4883
    %v5612 = vpack.c.b16 %v4892, %v4884
    %v5613 = vpack.c.b16 %v4893, %v4885
    %v5614 = vpack.c.b16 %v4894, %v4886
    %v5615 = vpack.c.b16 %v4895, %v4887
    %v5616 = vpack.c.b16 %v4896, %v4888
    %v5617 = vpack.c.b16 %v4897, %v4889
    %v5618 = vpack.c.b16 %v4906, %v4898
    %v5619 = vpack.c.b16 %v4907, %v4899
    %v5620 = vpack.c.b16 %v4908, %v4900
    %v5621 = vpack.c.b16 %v4909, %v4901
    %v5622 = vpack.c.b16 %v4910, %v4902
    %v5623 = vpack.c.b16 %v4911, %v4903
    %v5624 = vpack.c.b16 %v4912, %v4904
    %v5625 = vpack.c.b16 %v4913, %v4905
    %v5626 = vpack.c.b16 %v4922, %v4914
    %v5627 = vpack.c.b16 %v4923, %v4915
    %v5628 = vpack.c.b16 %v4924, %v4916
    %v5629 = vpack.c.b16 %v4925, %v4917
    %v5630 = vpack.c.b16 %v4926, %v4918
    %v5631 = vpack.c.b16 %v4927, %v4919
    %v5632 = vpack.c.b16 %v4928, %v4920
    %v5633 = vpack.c.b16 %v4929, %v4921
    %v5634 = vpack.c.b16 %v4938, %v4930
    %v5635 = vpack.c.b16 %v4939, %v4931
    %v5636 = vpack.c.b16 %v4940, %v4932
    %v5637 = vpack.c.b16 %v4941, %v4933
    %v5638 = vpack.c.b16 %v4942, %v4934
    %v5639 = vpack.c.b16 %v4943, %v4935
    %v5640 = vpack.c.b16 %v4944, %v4936
    %v5641 = vpack.c.b16 %v4945, %v4937
    %v5642 = vpack.c.b16 %v4954, %v4946
    %v5643 = vpack.c.b16 %v4955, %v4947
    %v5644 = vpack.c.b16 %v4956, %v4948
    %v5645 = vpack.c.b16 %v4957, %v4949
    %v5646 = vpack.c.b16 %v4958, %v4950
    %v5647 = vpack.c.b16 %v4959, %v4951
    %v5648 = vpack.c.b16 %v4960, %v4952
    %v5649 = vpack.c.b16 %v4961, %v4953
    %v5650 = vpack.c.b16 %v4970, %v4962
    %v5651 = vpack.c.b16 %v4971, %v4963
    %v5652 = vpack.c.b16 %v4972, %v4964
    %v5653 = vpack.c.b16 %v4973, %v4965
    %v5654 = vpack.c.b16 %v4974, %v4966
    %v5655 = vpack.c.b16 %v4975, %v4967
    %v5656 = vpack.c.b16 %v4976, %v4968
    %v5657 = vpack.c.b16 %v4977, %v4969
    %v5658 = vpack.c.b16 %v4986, %v4978
    %v5659 = vpack.c.b16 %v4987, %v4979
    %v5660 = vpack.c.b16 %v4988, %v4980
    %v5661 = vpack.c.b16 %v4989, %v4981
    %v5662 = vpack.c.b16 %v4990, %v4982
    %v5663 = vpack.c.b16 %v4991, %v4983
    %v5664 = vpack.c.b16 %v4992, %v4984
    %v5665 = vpack.c.b16 %v4993, %v4985
    %v5666 = vpack.c.b16 %v5002, %v4994
    %v5667 = vpack.c.b16 %v5003, %v4995
    %v5668 = vpack.c.b16 %v5004, %v4996
    %v5669 = vpack.c.b16 %v5005, %v4997
    %v5670 = vpack.c.b16 %v5006, %v4998
    %v5671 = vpack.c.b16 %v5007, %v4999
    %v5672 = vpack.c.b16 %v5008, %v5000
    %v5673 = vpack.c.b16 %v5009, %v5001
    %v5674 = vpack.c.b16 %v5018, %v5010
    %v5675 = vpack.c.b16 %v5019, %v5011
    %v5676 = vpack.c.b16 %v5020, %v5012
    %v5677 = vpack.c.b16 %v5021, %v5013
    %v5678 = vpack.c.b16 %v5022, %v5014
    %v5679 = vpack.c.b16 %v5023, %v5015
    %v5680 = vpack.c.b16 %v5024, %v5016
    %v5681 = vpack.c.b16 %v5025, %v5017
    %v5682 = vpack.c.b16 %v5034, %v5026
    %v5683 = vpack.c.b16 %v5035, %v5027
    %v5684 = vpack.c.b16 %v5036, %v5028
    %v5685 = vpack.c.b16 %v5037, %v5029
    %v5686 = vpack.c.b16 %v5038, %v5030
    %v5687 = vpack.c.b16 %v5039, %v5031
    %v5688 = vpack.c.b16 %v5040, %v5032
    %v5689 = vpack.c.b16 %v5041, %v5033
    %v5690 = vpack.c.b16 %v5050, %v5042
    %v5691 = vpack.c.b16 %v5051, %v5043
    %v5692 = vpack.c.b16 %v5052, %v5044
    %v5693 = vpack.c.b16 %v5053, %v5045
    %v5694 = vpack.c.b16 %v5054, %v5046
    %v5695 = vpack.c.b16 %v5055, %v5047
    %v5696 = vpack.c.b16 %v5056, %v5048
    %v5697 = vpack.c.b16 %v5057, %v5049
    %v5698 = vpack.c.b16 %v5066, %v5058
    %v5699 = vpack.c.b16 %v5067, %v5059
    %v5700 = vpack.c.b16 %v5068, %v5060
    %v5701 = vpack.c.b16 %v5069, %v5061
    %v5702 = vpack.c.b16 %v5070, %v5062
    %v5703 = vpack.c.b16 %v5071, %v5063
    %v5704 = vpack.c.b16 %v5072, %v5064
    %v5705 = vpack.c.b16 %v5073, %v5065
    %v5706 = vpack.c.b16 %v5082, %v5074
    %v5707 = vpack.c.b16 %v5083, %v5075
    %v5708 = vpack.c.b16 %v5084, %v5076
    %v5709 = vpack.c.b16 %v5085, %v5077
    %v5710 = vpack.c.b16 %v5086, %v5078
    %v5711 = vpack.c.b16 %v5087, %v5079
    %v5712 = vpack.c.b16 %v5088, %v5080
    %v5713 = vpack.c.b16 %v5089, %v5081
    %v5714 = vpack.c.b16 %v5098, %v5090
    %v5715 = vpack.c.b16 %v5099, %v5091
    %v5716 = vpack.c.b16 %v5100, %v5092
    %v5717 = vpack.c.b16 %v5101, %v5093
    %v5718 = vpack.c.b16 %v5102, %v5094
    %v5719 = vpack.c.b16 %v5103, %v5095
    %v5720 = vpack.c.b16 %v5104, %v5096
    %v5721 = vpack.c.b16 %v5105, %v5097
    %v5722 = vpack.c.b16 %v5114, %v5106
    %v5723 = vpack.c.b16 %v5115, %v5107
    %v5724 = vpack.c.b16 %v5116, %v5108
    %v5725 = vpack.c.b16 %v5117, %v5109
    %v5726 = vpack.c.b16 %v5118, %v5110
    %v5727 = vpack.c.b16 %v5119, %v5111
    %v5728 = vpack.c.b16 %v5120, %v5112
    %v5729 = vpack.c.b16 %v5121, %v5113
    %v5730 = vpack.c.b16 %v5130, %v5122
    %v5731 = vpack.c.b16 %v5131, %v5123
    %v5732 = vpack.c.b16 %v5132, %v5124
    %v5733 = vpack.c.b16 %v5133, %v5125
    %v5734 = vpack.c.b16 %v5134, %v5126
    %v5735 = vpack.c.b16 %v5135, %v5127
    %v5736 = vpack.c.b16 %v5136, %v5128
    %v5737 = vpack.c.b16 %v5137, %v5129
    %v5738 = vpack.c.b16 %v5146, %v5138
    %v5739 = vpack.c.b16 %v5147, %v5139
    %v5740 = vpack.c.b16 %v5148, %v5140
    %v5741 = vpack.c.b16 %v5149, %v5141
    %v5742 = vpack.c.b16 %v5150, %v5142
    %v5743 = vpack.c.b16 %v5151, %v5143
    %v5744 = vpack.c.b16 %v5152, %v5144
    %v5745 = vpack.c.b16 %v5153, %v5145
    %v5746 = vpack.c.b16 %v5162, %v5154
    %v5747 = vpack.c.b16 %v5163, %v5155
    %v5748 = vpack.c.b16 %v5164, %v5156
    %v5749 = vpack.c.b16 %v5165, %v5157
    %v5750 = vpack.c.b16 %v5166, %v5158
    %v5751 = vpack.c.b16 %v5167, %v5159
    %v5752 = vpack.c.b16 %v5168, %v5160
    %v5753 = vpack.c.b16 %v5169, %v5161
    %v5754 = vpack.c.b16 %v5178, %v5170
    %v5755 = vpack.c.b16 %v5179, %v5171
    %v5756 = vpack.c.b16 %v5180, %v5172
    %v5757 = vpack.c.b16 %v5181, %v5173
    %v5758 = vpack.c.b16 %v5182, %v5174
    %v5759 = vpack.c.b16 %v5183, %v5175
    %v5760 = vpack.c.b16 %v5184, %v5176
    %v5761 = vpack.c.b16 %v5185, %v5177
    %v5762 = vpack.c.b16 %v5194, %v5186
    %v5763 = vpack.c.b16 %v5195, %v5187
    %v5764 = vpack.c.b16 %v5196, %v5188
    %v5765 = vpack.c.b16 %v5197, %v5189
    %v5766 = vpack.c.b16 %v5198, %v5190
    %v5767 = vpack.c.b16 %v5199, %v5191
    %v5768 = vpack.c.b16 %v5200, %v5192
    %v5769 = vpack.c.b16 %v5201, %v5193
    %v5770 = vpack.c.b16 %v5210, %v5202
    %v5771 = vpack.c.b16 %v5211, %v5203
    %v5772 = vpack.c.b16 %v5212, %v5204
    %v5773 = vpack.c.b16 %v5213, %v5205
    %v5774 = vpack.c.b16 %v5214, %v5206
    %v5775 = vpack.c.b16 %v5215, %v5207
    %v5776 = vpack.c.b16 %v5216, %v5208
    %v5777 = vpack.c.b16 %v5217, %v5209
    %v5778 = vpack.c.b16 %v5226, %v5218
    %v5779 = vpack.c.b16 %v5227, %v5219
    %v5780 = vpack.c.b16 %v5228, %v5220
    %v5781 = vpack.c.b16 %v5229, %v5221
    %v5782 = vpack.c.b16 %v5230, %v5222
    %v5783 = vpack.c.b16 %v5231, %v5223
    %v5784 = vpack.c.b16 %v5232, %v5224
    %v5785 = vpack.c.b16 %v5233, %v5225
    %v5786 = vpack.c.b16 %v5242, %v5234
    %v5787 = vpack.c.b16 %v5243, %v5235
    %v5788 = vpack.c.b16 %v5244, %v5236
    %v5789 = vpack.c.b16 %v5245, %v5237
    %v5790 = vpack.c.b16 %v5246, %v5238
    %v5791 = vpack.c.b16 %v5247, %v5239
    %v5792 = vpack.c.b16 %v5248, %v5240
    %v5793 = vpack.c.b16 %v5249, %v5241
    %v5794 = vpack.c.b16 %v5258, %v5250
    %v5795 = vpack.c.b16 %v5259, %v5251
    %v5796 = vpack.c.b16 %v5260, %v5252
    %v5797 = vpack.c.b16 %v5261, %v5253
    %v5798 = vpack.c.b16 %v5262, %v5254
    %v5799 = vpack.c.b16 %v5263, %v5255
    %v5800 = vpack.c.b16 %v5264, %v5256
    %v5801 = vpack.c.b16 %v5265, %v5257
    %v5802 = vpack.c.b16 %v5274, %v5266
    %v5803 = vpack.c.b16 %v5275, %v5267
    %v5804 = vpack.c.b16 %v5276, %v5268
    %v5805 = vpack.c.b16 %v5277, %v5269
    %v5806 = vpack.c.b16 %v5278, %v5270
    %v5807 = vpack.c.b16 %v5279, %v5271
    %v5808 = vpack.c.b16 %v5280, %v5272
    %v5809 = vpack.c.b16 %v5281, %v5273
    %v5810 = vpack.c.b16 %v5290, %v5282
    %v5811 = vpack.c.b16 %v5291, %v5283
    %v5812 = vpack.c.b16 %v5292, %v5284
    %v5813 = vpack.c.b16 %v5293, %v5285
    %v5814 = vpack.c.b16 %v5294, %v5286
    %v5815 = vpack.c.b16 %v5295, %v5287
    %v5816 = vpack.c.b16 %v5296, %v5288
    %v5817 = vpack.c.b16 %v5297, %v5289
    %v5818 = vpack.c.b16 %v5306, %v5298
    %v5819 = vpack.c.b16 %v5307, %v5299
    %v5820 = vpack.c.b16 %v5308, %v5300
    %v5821 = vpack.c.b16 %v5309, %v5301
    %v5822 = vpack.c.b16 %v5310, %v5302
    %v5823 = vpack.c.b16 %v5311, %v5303
    %v5824 = vpack.c.b16 %v5312, %v5304
    %v5825 = vpack.c.b16 %v5313, %v5305
    %6338 = vmatpush.bf16.msra.mxu0 %v5370
    %6339 = vmatpush.bf16.msra.mxu0 %v5362
    %6340 = vmatpush.bf16.msra.mxu0 %v5354
    %6341 = vmatpush.bf16.msra.mxu0 %v5346
    %6342 = vmatpush.bf16.msra.mxu0 %v5338
    %6343 = vmatpush.bf16.msra.mxu0 %v5330
    %6344 = vmatpush.bf16.msra.mxu0 %v5322
    %6345 = vmatpush.bf16.msra.mxu0 %v5314
    %6346 = vmatmul.bf16.gmra.mxu0 %v3240
    %v6347 = vpop.f32.mrf.mxu0
    %v6348 = vadd.f32 %v3762, %v6347
    %v6349 = vpop.f32.mrf.mxu0
    %6350 = vdwg.mxu0
    %6351 = vmatpush.bf16.msra.mxu0 %v5434
    %6352 = vmatpush.bf16.msra.mxu0 %v5426
    %6353 = vmatpush.bf16.msra.mxu0 %v5418
    %6354 = vmatpush.bf16.msra.mxu0 %v5410
    %6355 = vmatpush.bf16.msra.mxu0 %v5402
    %6356 = vmatpush.bf16.msra.mxu0 %v5394
    %6357 = vmatpush.bf16.msra.mxu0 %v5386
    %6358 = vmatpush.bf16.msra.mxu0 %v5378
    %6359 = vmatmul.bf16.gmra.mxu0 %v3241
    %v6360 = vpop.f32.mrf.mxu0
    %v6361 = vadd.f32 %v6348, %v6360
    %v6362 = vpop.f32.mrf.mxu0
    %6363 = vdwg.mxu0
    %6364 = vmatpush.bf16.msra.mxu0 %v5498
    %6365 = vmatpush.bf16.msra.mxu0 %v5490
    %6366 = vmatpush.bf16.msra.mxu0 %v5482
    %6367 = vmatpush.bf16.msra.mxu0 %v5474
    %6368 = vmatpush.bf16.msra.mxu0 %v5466
    %6369 = vmatpush.bf16.msra.mxu0 %v5458
    %6370 = vmatpush.bf16.msra.mxu0 %v5450
    %6371 = vmatpush.bf16.msra.mxu0 %v5442
    %6372 = vmatmul.bf16.gmra.mxu0 %v3242
    %v6373 = vpop.f32.mrf.mxu0
    %v6374 = vadd.f32 %v6361, %v6373
    %v6375 = vpop.f32.mrf.mxu0
    %6376 = vdwg.mxu0
    %6377 = vmatpush.bf16.msra.mxu0 %v5562
    %6378 = vmatpush.bf16.msra.mxu0 %v5554
    %6379 = vmatpush.bf16.msra.mxu0 %v5546
    %6380 = vmatpush.bf16.msra.mxu0 %v5538
    %6381 = vmatpush.bf16.msra.mxu0 %v5530
    %6382 = vmatpush.bf16.msra.mxu0 %v5522
    %6383 = vmatpush.bf16.msra.mxu0 %v5514
    %6384 = vmatpush.bf16.msra.mxu0 %v5506
    %6385 = vmatmul.bf16.gmra.mxu0 %v3243
    %v6386 = vpop.f32.mrf.mxu0
    %v6387 = vadd.f32 %v6374, %v6386
    %v6388 = vpop.f32.mrf.mxu0
    %6389 = vdwg.mxu0
    %6390 = vmatpush.bf16.msra.mxu0 %v5626
    %6391 = vmatpush.bf16.msra.mxu0 %v5618
    %6392 = vmatpush.bf16.msra.mxu0 %v5610
    %6393 = vmatpush.bf16.msra.mxu0 %v5602
    %6394 = vmatpush.bf16.msra.mxu0 %v5594
    %6395 = vmatpush.bf16.msra.mxu0 %v5586
    %6396 = vmatpush.bf16.msra.mxu0 %v5578
    %6397 = vmatpush.bf16.msra.mxu0 %v5570
    %6398 = vmatmul.bf16.gmra.mxu0 %v3244
    %v6399 = vpop.f32.mrf.mxu0
    %v6400 = vadd.f32 %v6387, %v6399
    %v6401 = vpop.f32.mrf.mxu0
    %6402 = vdwg.mxu0
    %6403 = vmatpush.bf16.msra.mxu0 %v5690
    %6404 = vmatpush.bf16.msra.mxu0 %v5682
    %6405 = vmatpush.bf16.msra.mxu0 %v5674
    %6406 = vmatpush.bf16.msra.mxu0 %v5666
    %6407 = vmatpush.bf16.msra.mxu0 %v5658
    %6408 = vmatpush.bf16.msra.mxu0 %v5650
    %6409 = vmatpush.bf16.msra.mxu0 %v5642
    %6410 = vmatpush.bf16.msra.mxu0 %v5634
    %6411 = vmatmul.bf16.gmra.mxu0 %v3245
    %v6412 = vpop.f32.mrf.mxu0
    %v6413 = vadd.f32 %v6400, %v6412
    %v6414 = vpop.f32.mrf.mxu0
    %6415 = vdwg.mxu0
    %6416 = vmatpush.bf16.msra.mxu0 %v5754
    %6417 = vmatpush.bf16.msra.mxu0 %v5746
    %6418 = vmatpush.bf16.msra.mxu0 %v5738
    %6419 = vmatpush.bf16.msra.mxu0 %v5730
    %6420 = vmatpush.bf16.msra.mxu0 %v5722
    %6421 = vmatpush.bf16.msra.mxu0 %v5714
    %6422 = vmatpush.bf16.msra.mxu0 %v5706
    %6423 = vmatpush.bf16.msra.mxu0 %v5698
    %6424 = vmatmul.bf16.gmra.mxu0 %v3246
    %v6425 = vpop.f32.mrf.mxu0
    %v6426 = vadd.f32 %v6413, %v6425
    %v6427 = vpop.f32.mrf.mxu0
    %6428 = vdwg.mxu0
    %6429 = vmatpush.bf16.msra.mxu0 %v5818
    %6430 = vmatpush.bf16.msra.mxu0 %v5810
    %6431 = vmatpush.bf16.msra.mxu0 %v5802
    %6432 = vmatpush.bf16.msra.mxu0 %v5794
    %6433 = vmatpush.bf16.msra.mxu0 %v5786
    %6434 = vmatpush.bf16.msra.mxu0 %v5778
    %6435 = vmatpush.bf16.msra.mxu0 %v5770
    %6436 = vmatpush.bf16.msra.mxu0 %v5762
    %6437 = vmatmul.bf16.gmra.mxu0 %v3247
    %v6438 = vpop.f32.mrf.mxu0
    %v6439 = vadd.f32 %v6426, %v6438
    %v6440 = vpop.f32.mrf.mxu0
    %6441 = vdwg.mxu0
    %6442 = vmatpush.bf16.msra.mxu0 %v5371
    %6443 = vmatpush.bf16.msra.mxu0 %v5363
    %6444 = vmatpush.bf16.msra.mxu0 %v5355
    %6445 = vmatpush.bf16.msra.mxu0 %v5347
    %6446 = vmatpush.bf16.msra.mxu0 %v5339
    %6447 = vmatpush.bf16.msra.mxu0 %v5331
    %6448 = vmatpush.bf16.msra.mxu0 %v5323
    %6449 = vmatpush.bf16.msra.mxu0 %v5315
    %6450 = vmatmul.bf16.gmra.mxu0 %v3240
    %v6451 = vpop.f32.mrf.mxu0
    %v6452 = vadd.f32 %v3763, %v6451
    %v6453 = vpop.f32.mrf.mxu0
    %6454 = vdwg.mxu0
    %6455 = vmatpush.bf16.msra.mxu0 %v5435
    %6456 = vmatpush.bf16.msra.mxu0 %v5427
    %6457 = vmatpush.bf16.msra.mxu0 %v5419
    %6458 = vmatpush.bf16.msra.mxu0 %v5411
    %6459 = vmatpush.bf16.msra.mxu0 %v5403
    %6460 = vmatpush.bf16.msra.mxu0 %v5395
    %6461 = vmatpush.bf16.msra.mxu0 %v5387
    %6462 = vmatpush.bf16.msra.mxu0 %v5379
    %6463 = vmatmul.bf16.gmra.mxu0 %v3241
    %v6464 = vpop.f32.mrf.mxu0
    %v6465 = vadd.f32 %v6452, %v6464
    %v6466 = vpop.f32.mrf.mxu0
    %6467 = vdwg.mxu0
    %6468 = vmatpush.bf16.msra.mxu0 %v5499
    %6469 = vmatpush.bf16.msra.mxu0 %v5491
    %6470 = vmatpush.bf16.msra.mxu0 %v5483
    %6471 = vmatpush.bf16.msra.mxu0 %v5475
    %6472 = vmatpush.bf16.msra.mxu0 %v5467
    %6473 = vmatpush.bf16.msra.mxu0 %v5459
    %6474 = vmatpush.bf16.msra.mxu0 %v5451
    %6475 = vmatpush.bf16.msra.mxu0 %v5443
    %6476 = vmatmul.bf16.gmra.mxu0 %v3242
    %v6477 = vpop.f32.mrf.mxu0
    %v6478 = vadd.f32 %v6465, %v6477
    %v6479 = vpop.f32.mrf.mxu0
    %6480 = vdwg.mxu0
    %6481 = vmatpush.bf16.msra.mxu0 %v5563
    %6482 = vmatpush.bf16.msra.mxu0 %v5555
    %6483 = vmatpush.bf16.msra.mxu0 %v5547
    %6484 = vmatpush.bf16.msra.mxu0 %v5539
    %6485 = vmatpush.bf16.msra.mxu0 %v5531
    %6486 = vmatpush.bf16.msra.mxu0 %v5523
    %6487 = vmatpush.bf16.msra.mxu0 %v5515
    %6488 = vmatpush.bf16.msra.mxu0 %v5507
    %6489 = vmatmul.bf16.gmra.mxu0 %v3243
    %v6490 = vpop.f32.mrf.mxu0
    %v6491 = vadd.f32 %v6478, %v6490
    %v6492 = vpop.f32.mrf.mxu0
    %6493 = vdwg.mxu0
    %6494 = vmatpush.bf16.msra.mxu0 %v5627
    %6495 = vmatpush.bf16.msra.mxu0 %v5619
    %6496 = vmatpush.bf16.msra.mxu0 %v5611
    %6497 = vmatpush.bf16.msra.mxu0 %v5603
    %6498 = vmatpush.bf16.msra.mxu0 %v5595
    %6499 = vmatpush.bf16.msra.mxu0 %v5587
    %6500 = vmatpush.bf16.msra.mxu0 %v5579
    %6501 = vmatpush.bf16.msra.mxu0 %v5571
    %6502 = vmatmul.bf16.gmra.mxu0 %v3244
    %v6503 = vpop.f32.mrf.mxu0
    %v6504 = vadd.f32 %v6491, %v6503
    %v6505 = vpop.f32.mrf.mxu0
    %6506 = vdwg.mxu0
    %6507 = vmatpush.bf16.msra.mxu0 %v5691
    %6508 = vmatpush.bf16.msra.mxu0 %v5683
    %6509 = vmatpush.bf16.msra.mxu0 %v5675
    %6510 = vmatpush.bf16.msra.mxu0 %v5667
    %6511 = vmatpush.bf16.msra.mxu0 %v5659
    %6512 = vmatpush.bf16.msra.mxu0 %v5651
    %6513 = vmatpush.bf16.msra.mxu0 %v5643
    %6514 = vmatpush.bf16.msra.mxu0 %v5635
    %6515 = vmatmul.bf16.gmra.mxu0 %v3245
    %v6516 = vpop.f32.mrf.mxu0
    %v6517 = vadd.f32 %v6504, %v6516
    %v6518 = vpop.f32.mrf.mxu0
    %6519 = vdwg.mxu0
    %6520 = vmatpush.bf16.msra.mxu0 %v5755
    %6521 = vmatpush.bf16.msra.mxu0 %v5747
    %6522 = vmatpush.bf16.msra.mxu0 %v5739
    %6523 = vmatpush.bf16.msra.mxu0 %v5731
    %6524 = vmatpush.bf16.msra.mxu0 %v5723
    %6525 = vmatpush.bf16.msra.mxu0 %v5715
    %6526 = vmatpush.bf16.msra.mxu0 %v5707
    %6527 = vmatpush.bf16.msra.mxu0 %v5699
    %6528 = vmatmul.bf16.gmra.mxu0 %v3246
    %v6529 = vpop.f32.mrf.mxu0
    %v6530 = vadd.f32 %v6517, %v6529
    %v6531 = vpop.f32.mrf.mxu0
    %6532 = vdwg.mxu0
    %6533 = vmatpush.bf16.msra.mxu0 %v5819
    %6534 = vmatpush.bf16.msra.mxu0 %v5811
    %6535 = vmatpush.bf16.msra.mxu0 %v5803
    %6536 = vmatpush.bf16.msra.mxu0 %v5795
    %6537 = vmatpush.bf16.msra.mxu0 %v5787
    %6538 = vmatpush.bf16.msra.mxu0 %v5779
    %6539 = vmatpush.bf16.msra.mxu0 %v5771
    %6540 = vmatpush.bf16.msra.mxu0 %v5763
    %6541 = vmatmul.bf16.gmra.mxu0 %v3247
    %v6542 = vpop.f32.mrf.mxu0
    %v6543 = vadd.f32 %v6530, %v6542
    %v6544 = vpop.f32.mrf.mxu0
    %6545 = vdwg.mxu0
    %6546 = vmatpush.bf16.msra.mxu0 %v5372
    %6547 = vmatpush.bf16.msra.mxu0 %v5364
    %6548 = vmatpush.bf16.msra.mxu0 %v5356
    %6549 = vmatpush.bf16.msra.mxu0 %v5348
    %6550 = vmatpush.bf16.msra.mxu0 %v5340
    %6551 = vmatpush.bf16.msra.mxu0 %v5332
    %6552 = vmatpush.bf16.msra.mxu0 %v5324
    %6553 = vmatpush.bf16.msra.mxu0 %v5316
    %6554 = vmatmul.bf16.gmra.mxu0 %v3240
    %v6555 = vpop.f32.mrf.mxu0
    %v6556 = vadd.f32 %v3764, %v6555
    %v6557 = vpop.f32.mrf.mxu0
    %6558 = vdwg.mxu0
    %6559 = vmatpush.bf16.msra.mxu0 %v5436
    %6560 = vmatpush.bf16.msra.mxu0 %v5428
    %6561 = vmatpush.bf16.msra.mxu0 %v5420
    %6562 = vmatpush.bf16.msra.mxu0 %v5412
    %6563 = vmatpush.bf16.msra.mxu0 %v5404
    %6564 = vmatpush.bf16.msra.mxu0 %v5396
    %6565 = vmatpush.bf16.msra.mxu0 %v5388
    %6566 = vmatpush.bf16.msra.mxu0 %v5380
    %6567 = vmatmul.bf16.gmra.mxu0 %v3241
    %v6568 = vpop.f32.mrf.mxu0
    %v6569 = vadd.f32 %v6556, %v6568
    %v6570 = vpop.f32.mrf.mxu0
    %6571 = vdwg.mxu0
    %6572 = vmatpush.bf16.msra.mxu0 %v5500
    %6573 = vmatpush.bf16.msra.mxu0 %v5492
    %6574 = vmatpush.bf16.msra.mxu0 %v5484
    %6575 = vmatpush.bf16.msra.mxu0 %v5476
    %6576 = vmatpush.bf16.msra.mxu0 %v5468
    %6577 = vmatpush.bf16.msra.mxu0 %v5460
    %6578 = vmatpush.bf16.msra.mxu0 %v5452
    %6579 = vmatpush.bf16.msra.mxu0 %v5444
    %6580 = vmatmul.bf16.gmra.mxu0 %v3242
    %v6581 = vpop.f32.mrf.mxu0
    %v6582 = vadd.f32 %v6569, %v6581
    %v6583 = vpop.f32.mrf.mxu0
    %6584 = vdwg.mxu0
    %6585 = vmatpush.bf16.msra.mxu0 %v5564
    %6586 = vmatpush.bf16.msra.mxu0 %v5556
    %6587 = vmatpush.bf16.msra.mxu0 %v5548
    %6588 = vmatpush.bf16.msra.mxu0 %v5540
    %6589 = vmatpush.bf16.msra.mxu0 %v5532
    %6590 = vmatpush.bf16.msra.mxu0 %v5524
    %6591 = vmatpush.bf16.msra.mxu0 %v5516
    %6592 = vmatpush.bf16.msra.mxu0 %v5508
    %6593 = vmatmul.bf16.gmra.mxu0 %v3243
    %v6594 = vpop.f32.mrf.mxu0
    %v6595 = vadd.f32 %v6582, %v6594
    %v6596 = vpop.f32.mrf.mxu0
    %6597 = vdwg.mxu0
    %6598 = vmatpush.bf16.msra.mxu0 %v5628
    %6599 = vmatpush.bf16.msra.mxu0 %v5620
    %6600 = vmatpush.bf16.msra.mxu0 %v5612
    %6601 = vmatpush.bf16.msra.mxu0 %v5604
    %6602 = vmatpush.bf16.msra.mxu0 %v5596
    %6603 = vmatpush.bf16.msra.mxu0 %v5588
    %6604 = vmatpush.bf16.msra.mxu0 %v5580
    %6605 = vmatpush.bf16.msra.mxu0 %v5572
    %6606 = vmatmul.bf16.gmra.mxu0 %v3244
    %v6607 = vpop.f32.mrf.mxu0
    %v6608 = vadd.f32 %v6595, %v6607
    %v6609 = vpop.f32.mrf.mxu0
    %6610 = vdwg.mxu0
    %6611 = vmatpush.bf16.msra.mxu0 %v5692
    %6612 = vmatpush.bf16.msra.mxu0 %v5684
    %6613 = vmatpush.bf16.msra.mxu0 %v5676
    %6614 = vmatpush.bf16.msra.mxu0 %v5668
    %6615 = vmatpush.bf16.msra.mxu0 %v5660
    %6616 = vmatpush.bf16.msra.mxu0 %v5652
    %6617 = vmatpush.bf16.msra.mxu0 %v5644
    %6618 = vmatpush.bf16.msra.mxu0 %v5636
    %6619 = vmatmul.bf16.gmra.mxu0 %v3245
    %v6620 = vpop.f32.mrf.mxu0
    %v6621 = vadd.f32 %v6608, %v6620
    %v6622 = vpop.f32.mrf.mxu0
    %6623 = vdwg.mxu0
    %6624 = vmatpush.bf16.msra.mxu0 %v5756
    %6625 = vmatpush.bf16.msra.mxu0 %v5748
    %6626 = vmatpush.bf16.msra.mxu0 %v5740
    %6627 = vmatpush.bf16.msra.mxu0 %v5732
    %6628 = vmatpush.bf16.msra.mxu0 %v5724
    %6629 = vmatpush.bf16.msra.mxu0 %v5716
    %6630 = vmatpush.bf16.msra.mxu0 %v5708
    %6631 = vmatpush.bf16.msra.mxu0 %v5700
    %6632 = vmatmul.bf16.gmra.mxu0 %v3246
    %v6633 = vpop.f32.mrf.mxu0
    %v6634 = vadd.f32 %v6621, %v6633
    %v6635 = vpop.f32.mrf.mxu0
    %6636 = vdwg.mxu0
    %6637 = vmatpush.bf16.msra.mxu0 %v5820
    %6638 = vmatpush.bf16.msra.mxu0 %v5812
    %6639 = vmatpush.bf16.msra.mxu0 %v5804
    %6640 = vmatpush.bf16.msra.mxu0 %v5796
    %6641 = vmatpush.bf16.msra.mxu0 %v5788
    %6642 = vmatpush.bf16.msra.mxu0 %v5780
    %6643 = vmatpush.bf16.msra.mxu0 %v5772
    %6644 = vmatpush.bf16.msra.mxu0 %v5764
    %6645 = vmatmul.bf16.gmra.mxu0 %v3247
    %v6646 = vpop.f32.mrf.mxu0
    %v6647 = vadd.f32 %v6634, %v6646
    %v6648 = vpop.f32.mrf.mxu0
    %6649 = vdwg.mxu0
    %6650 = vmatpush.bf16.msra.mxu0 %v5373
    %6651 = vmatpush.bf16.msra.mxu0 %v5365
    %6652 = vmatpush.bf16.msra.mxu0 %v5357
    %6653 = vmatpush.bf16.msra.mxu0 %v5349
    %6654 = vmatpush.bf16.msra.mxu0 %v5341
    %6655 = vmatpush.bf16.msra.mxu0 %v5333
    %6656 = vmatpush.bf16.msra.mxu0 %v5325
    %6657 = vmatpush.bf16.msra.mxu0 %v5317
    %6658 = vmatmul.bf16.gmra.mxu0 %v3240
    %v6659 = vpop.f32.mrf.mxu0
    %v6660 = vadd.f32 %v3765, %v6659
    %v6661 = vpop.f32.mrf.mxu0
    %6662 = vdwg.mxu0
    %6663 = vmatpush.bf16.msra.mxu0 %v5437
    %6664 = vmatpush.bf16.msra.mxu0 %v5429
    %6665 = vmatpush.bf16.msra.mxu0 %v5421
    %6666 = vmatpush.bf16.msra.mxu0 %v5413
    %6667 = vmatpush.bf16.msra.mxu0 %v5405
    %6668 = vmatpush.bf16.msra.mxu0 %v5397
    %6669 = vmatpush.bf16.msra.mxu0 %v5389
    %6670 = vmatpush.bf16.msra.mxu0 %v5381
    %6671 = vmatmul.bf16.gmra.mxu0 %v3241
    %v6672 = vpop.f32.mrf.mxu0
    %v6673 = vadd.f32 %v6660, %v6672
    %v6674 = vpop.f32.mrf.mxu0
    %6675 = vdwg.mxu0
    %6676 = vmatpush.bf16.msra.mxu0 %v5501
    %6677 = vmatpush.bf16.msra.mxu0 %v5493
    %6678 = vmatpush.bf16.msra.mxu0 %v5485
    %6679 = vmatpush.bf16.msra.mxu0 %v5477
    %6680 = vmatpush.bf16.msra.mxu0 %v5469
    %6681 = vmatpush.bf16.msra.mxu0 %v5461
    %6682 = vmatpush.bf16.msra.mxu0 %v5453
    %6683 = vmatpush.bf16.msra.mxu0 %v5445
    %6684 = vmatmul.bf16.gmra.mxu0 %v3242
    %v6685 = vpop.f32.mrf.mxu0
    %v6686 = vadd.f32 %v6673, %v6685
    %v6687 = vpop.f32.mrf.mxu0
    %6688 = vdwg.mxu0
    %6689 = vmatpush.bf16.msra.mxu0 %v5565
    %6690 = vmatpush.bf16.msra.mxu0 %v5557
    %6691 = vmatpush.bf16.msra.mxu0 %v5549
    %6692 = vmatpush.bf16.msra.mxu0 %v5541
    %6693 = vmatpush.bf16.msra.mxu0 %v5533
    %6694 = vmatpush.bf16.msra.mxu0 %v5525
    %6695 = vmatpush.bf16.msra.mxu0 %v5517
    %6696 = vmatpush.bf16.msra.mxu0 %v5509
    %6697 = vmatmul.bf16.gmra.mxu0 %v3243
    %v6698 = vpop.f32.mrf.mxu0
    %v6699 = vadd.f32 %v6686, %v6698
    %v6700 = vpop.f32.mrf.mxu0
    %6701 = vdwg.mxu0
    %6702 = vmatpush.bf16.msra.mxu0 %v5629
    %6703 = vmatpush.bf16.msra.mxu0 %v5621
    %6704 = vmatpush.bf16.msra.mxu0 %v5613
    %6705 = vmatpush.bf16.msra.mxu0 %v5605
    %6706 = vmatpush.bf16.msra.mxu0 %v5597
    %6707 = vmatpush.bf16.msra.mxu0 %v5589
    %6708 = vmatpush.bf16.msra.mxu0 %v5581
    %6709 = vmatpush.bf16.msra.mxu0 %v5573
    %6710 = vmatmul.bf16.gmra.mxu0 %v3244
    %v6711 = vpop.f32.mrf.mxu0
    %v6712 = vadd.f32 %v6699, %v6711
    %v6713 = vpop.f32.mrf.mxu0
    %6714 = vdwg.mxu0
    %6715 = vmatpush.bf16.msra.mxu0 %v5693
    %6716 = vmatpush.bf16.msra.mxu0 %v5685
    %6717 = vmatpush.bf16.msra.mxu0 %v5677
    %6718 = vmatpush.bf16.msra.mxu0 %v5669
    %6719 = vmatpush.bf16.msra.mxu0 %v5661
    %6720 = vmatpush.bf16.msra.mxu0 %v5653
    %6721 = vmatpush.bf16.msra.mxu0 %v5645
    %6722 = vmatpush.bf16.msra.mxu0 %v5637
    %6723 = vmatmul.bf16.gmra.mxu0 %v3245
    %v6724 = vpop.f32.mrf.mxu0
    %v6725 = vadd.f32 %v6712, %v6724
    %v6726 = vpop.f32.mrf.mxu0
    %6727 = vdwg.mxu0
    %6728 = vmatpush.bf16.msra.mxu0 %v5757
    %6729 = vmatpush.bf16.msra.mxu0 %v5749
    %6730 = vmatpush.bf16.msra.mxu0 %v5741
    %6731 = vmatpush.bf16.msra.mxu0 %v5733
    %6732 = vmatpush.bf16.msra.mxu0 %v5725
    %6733 = vmatpush.bf16.msra.mxu0 %v5717
    %6734 = vmatpush.bf16.msra.mxu0 %v5709
    %6735 = vmatpush.bf16.msra.mxu0 %v5701
    %6736 = vmatmul.bf16.gmra.mxu0 %v3246
    %v6737 = vpop.f32.mrf.mxu0
    %v6738 = vadd.f32 %v6725, %v6737
    %v6739 = vpop.f32.mrf.mxu0
    %6740 = vdwg.mxu0
    %6741 = vmatpush.bf16.msra.mxu0 %v5821
    %6742 = vmatpush.bf16.msra.mxu0 %v5813
    %6743 = vmatpush.bf16.msra.mxu0 %v5805
    %6744 = vmatpush.bf16.msra.mxu0 %v5797
    %6745 = vmatpush.bf16.msra.mxu0 %v5789
    %6746 = vmatpush.bf16.msra.mxu0 %v5781
    %6747 = vmatpush.bf16.msra.mxu0 %v5773
    %6748 = vmatpush.bf16.msra.mxu0 %v5765
    %6749 = vmatmul.bf16.gmra.mxu0 %v3247
    %v6750 = vpop.f32.mrf.mxu0
    %v6751 = vadd.f32 %v6738, %v6750
    %v6752 = vpop.f32.mrf.mxu0
    %6753 = vdwg.mxu0
    %6754 = vmatpush.bf16.msra.mxu0 %v5374
    %6755 = vmatpush.bf16.msra.mxu0 %v5366
    %6756 = vmatpush.bf16.msra.mxu0 %v5358
    %6757 = vmatpush.bf16.msra.mxu0 %v5350
    %6758 = vmatpush.bf16.msra.mxu0 %v5342
    %6759 = vmatpush.bf16.msra.mxu0 %v5334
    %6760 = vmatpush.bf16.msra.mxu0 %v5326
    %6761 = vmatpush.bf16.msra.mxu0 %v5318
    %6762 = vmatmul.bf16.gmra.mxu0 %v3240
    %v6763 = vpop.f32.mrf.mxu0
    %v6764 = vadd.f32 %v3766, %v6763
    %v6765 = vpop.f32.mrf.mxu0
    %6766 = vdwg.mxu0
    %6767 = vmatpush.bf16.msra.mxu0 %v5438
    %6768 = vmatpush.bf16.msra.mxu0 %v5430
    %6769 = vmatpush.bf16.msra.mxu0 %v5422
    %6770 = vmatpush.bf16.msra.mxu0 %v5414
    %6771 = vmatpush.bf16.msra.mxu0 %v5406
    %6772 = vmatpush.bf16.msra.mxu0 %v5398
    %6773 = vmatpush.bf16.msra.mxu0 %v5390
    %6774 = vmatpush.bf16.msra.mxu0 %v5382
    %6775 = vmatmul.bf16.gmra.mxu0 %v3241
    %v6776 = vpop.f32.mrf.mxu0
    %v6777 = vadd.f32 %v6764, %v6776
    %v6778 = vpop.f32.mrf.mxu0
    %6779 = vdwg.mxu0
    %6780 = vmatpush.bf16.msra.mxu0 %v5502
    %6781 = vmatpush.bf16.msra.mxu0 %v5494
    %6782 = vmatpush.bf16.msra.mxu0 %v5486
    %6783 = vmatpush.bf16.msra.mxu0 %v5478
    %6784 = vmatpush.bf16.msra.mxu0 %v5470
    %6785 = vmatpush.bf16.msra.mxu0 %v5462
    %6786 = vmatpush.bf16.msra.mxu0 %v5454
    %6787 = vmatpush.bf16.msra.mxu0 %v5446
    %6788 = vmatmul.bf16.gmra.mxu0 %v3242
    %v6789 = vpop.f32.mrf.mxu0
    %v6790 = vadd.f32 %v6777, %v6789
    %v6791 = vpop.f32.mrf.mxu0
    %6792 = vdwg.mxu0
    %6793 = vmatpush.bf16.msra.mxu0 %v5566
    %6794 = vmatpush.bf16.msra.mxu0 %v5558
    %6795 = vmatpush.bf16.msra.mxu0 %v5550
    %6796 = vmatpush.bf16.msra.mxu0 %v5542
    %6797 = vmatpush.bf16.msra.mxu0 %v5534
    %6798 = vmatpush.bf16.msra.mxu0 %v5526
    %6799 = vmatpush.bf16.msra.mxu0 %v5518
    %6800 = vmatpush.bf16.msra.mxu0 %v5510
    %6801 = vmatmul.bf16.gmra.mxu0 %v3243
    %v6802 = vpop.f32.mrf.mxu0
    %v6803 = vadd.f32 %v6790, %v6802
    %v6804 = vpop.f32.mrf.mxu0
    %6805 = vdwg.mxu0
    %6806 = vmatpush.bf16.msra.mxu0 %v5630
    %6807 = vmatpush.bf16.msra.mxu0 %v5622
    %6808 = vmatpush.bf16.msra.mxu0 %v5614
    %6809 = vmatpush.bf16.msra.mxu0 %v5606
    %6810 = vmatpush.bf16.msra.mxu0 %v5598
    %6811 = vmatpush.bf16.msra.mxu0 %v5590
    %6812 = vmatpush.bf16.msra.mxu0 %v5582
    %6813 = vmatpush.bf16.msra.mxu0 %v5574
    %6814 = vmatmul.bf16.gmra.mxu0 %v3244
    %v6815 = vpop.f32.mrf.mxu0
    %v6816 = vadd.f32 %v6803, %v6815
    %v6817 = vpop.f32.mrf.mxu0
    %6818 = vdwg.mxu0
    %6819 = vmatpush.bf16.msra.mxu0 %v5694
    %6820 = vmatpush.bf16.msra.mxu0 %v5686
    %6821 = vmatpush.bf16.msra.mxu0 %v5678
    %6822 = vmatpush.bf16.msra.mxu0 %v5670
    %6823 = vmatpush.bf16.msra.mxu0 %v5662
    %6824 = vmatpush.bf16.msra.mxu0 %v5654
    %6825 = vmatpush.bf16.msra.mxu0 %v5646
    %6826 = vmatpush.bf16.msra.mxu0 %v5638
    %6827 = vmatmul.bf16.gmra.mxu0 %v3245
    %v6828 = vpop.f32.mrf.mxu0
    %v6829 = vadd.f32 %v6816, %v6828
    %v6830 = vpop.f32.mrf.mxu0
    %6831 = vdwg.mxu0
    %6832 = vmatpush.bf16.msra.mxu0 %v5758
    %6833 = vmatpush.bf16.msra.mxu0 %v5750
    %6834 = vmatpush.bf16.msra.mxu0 %v5742
    %6835 = vmatpush.bf16.msra.mxu0 %v5734
    %6836 = vmatpush.bf16.msra.mxu0 %v5726
    %6837 = vmatpush.bf16.msra.mxu0 %v5718
    %6838 = vmatpush.bf16.msra.mxu0 %v5710
    %6839 = vmatpush.bf16.msra.mxu0 %v5702
    %6840 = vmatmul.bf16.gmra.mxu0 %v3246
    %v6841 = vpop.f32.mrf.mxu0
    %v6842 = vadd.f32 %v6829, %v6841
    %v6843 = vpop.f32.mrf.mxu0
    %6844 = vdwg.mxu0
    %6845 = vmatpush.bf16.msra.mxu0 %v5822
    %6846 = vmatpush.bf16.msra.mxu0 %v5814
    %6847 = vmatpush.bf16.msra.mxu0 %v5806
    %6848 = vmatpush.bf16.msra.mxu0 %v5798
    %6849 = vmatpush.bf16.msra.mxu0 %v5790
    %6850 = vmatpush.bf16.msra.mxu0 %v5782
    %6851 = vmatpush.bf16.msra.mxu0 %v5774
    %6852 = vmatpush.bf16.msra.mxu0 %v5766
    %6853 = vmatmul.bf16.gmra.mxu0 %v3247
    %v6854 = vpop.f32.mrf.mxu0
    %v6855 = vadd.f32 %v6842, %v6854
    %v6856 = vpop.f32.mrf.mxu0
    %6857 = vdwg.mxu0
    %6858 = vmatpush.bf16.msra.mxu0 %v5375
    %6859 = vmatpush.bf16.msra.mxu0 %v5367
    %6860 = vmatpush.bf16.msra.mxu0 %v5359
    %6861 = vmatpush.bf16.msra.mxu0 %v5351
    %6862 = vmatpush.bf16.msra.mxu0 %v5343
    %6863 = vmatpush.bf16.msra.mxu0 %v5335
    %6864 = vmatpush.bf16.msra.mxu0 %v5327
    %6865 = vmatpush.bf16.msra.mxu0 %v5319
    %6866 = vmatmul.bf16.gmra.mxu0 %v3240
    %v6867 = vpop.f32.mrf.mxu0
    %v6868 = vadd.f32 %v3767, %v6867
    %v6869 = vpop.f32.mrf.mxu0
    %6870 = vdwg.mxu0
    %6871 = vmatpush.bf16.msra.mxu0 %v5439
    %6872 = vmatpush.bf16.msra.mxu0 %v5431
    %6873 = vmatpush.bf16.msra.mxu0 %v5423
    %6874 = vmatpush.bf16.msra.mxu0 %v5415
    %6875 = vmatpush.bf16.msra.mxu0 %v5407
    %6876 = vmatpush.bf16.msra.mxu0 %v5399
    %6877 = vmatpush.bf16.msra.mxu0 %v5391
    %6878 = vmatpush.bf16.msra.mxu0 %v5383
    %6879 = vmatmul.bf16.gmra.mxu0 %v3241
    %v6880 = vpop.f32.mrf.mxu0
    %v6881 = vadd.f32 %v6868, %v6880
    %v6882 = vpop.f32.mrf.mxu0
    %6883 = vdwg.mxu0
    %6884 = vmatpush.bf16.msra.mxu0 %v5503
    %6885 = vmatpush.bf16.msra.mxu0 %v5495
    %6886 = vmatpush.bf16.msra.mxu0 %v5487
    %6887 = vmatpush.bf16.msra.mxu0 %v5479
    %6888 = vmatpush.bf16.msra.mxu0 %v5471
    %6889 = vmatpush.bf16.msra.mxu0 %v5463
    %6890 = vmatpush.bf16.msra.mxu0 %v5455
    %6891 = vmatpush.bf16.msra.mxu0 %v5447
    %6892 = vmatmul.bf16.gmra.mxu0 %v3242
    %v6893 = vpop.f32.mrf.mxu0
    %v6894 = vadd.f32 %v6881, %v6893
    %v6895 = vpop.f32.mrf.mxu0
    %6896 = vdwg.mxu0
    %6897 = vmatpush.bf16.msra.mxu0 %v5567
    %6898 = vmatpush.bf16.msra.mxu0 %v5559
    %6899 = vmatpush.bf16.msra.mxu0 %v5551
    %6900 = vmatpush.bf16.msra.mxu0 %v5543
    %6901 = vmatpush.bf16.msra.mxu0 %v5535
    %6902 = vmatpush.bf16.msra.mxu0 %v5527
    %6903 = vmatpush.bf16.msra.mxu0 %v5519
    %6904 = vmatpush.bf16.msra.mxu0 %v5511
    %6905 = vmatmul.bf16.gmra.mxu0 %v3243
    %v6906 = vpop.f32.mrf.mxu0
    %v6907 = vadd.f32 %v6894, %v6906
    %v6908 = vpop.f32.mrf.mxu0
    %6909 = vdwg.mxu0
    %6910 = vmatpush.bf16.msra.mxu0 %v5631
    %6911 = vmatpush.bf16.msra.mxu0 %v5623
    %6912 = vmatpush.bf16.msra.mxu0 %v5615
    %6913 = vmatpush.bf16.msra.mxu0 %v5607
    %6914 = vmatpush.bf16.msra.mxu0 %v5599
    %6915 = vmatpush.bf16.msra.mxu0 %v5591
    %6916 = vmatpush.bf16.msra.mxu0 %v5583
    %6917 = vmatpush.bf16.msra.mxu0 %v5575
    %6918 = vmatmul.bf16.gmra.mxu0 %v3244
    %v6919 = vpop.f32.mrf.mxu0
    %v6920 = vadd.f32 %v6907, %v6919
    %v6921 = vpop.f32.mrf.mxu0
    %6922 = vdwg.mxu0
    %6923 = vmatpush.bf16.msra.mxu0 %v5695
    %6924 = vmatpush.bf16.msra.mxu0 %v5687
    %6925 = vmatpush.bf16.msra.mxu0 %v5679
    %6926 = vmatpush.bf16.msra.mxu0 %v5671
    %6927 = vmatpush.bf16.msra.mxu0 %v5663
    %6928 = vmatpush.bf16.msra.mxu0 %v5655
    %6929 = vmatpush.bf16.msra.mxu0 %v5647
    %6930 = vmatpush.bf16.msra.mxu0 %v5639
    %6931 = vmatmul.bf16.gmra.mxu0 %v3245
    %v6932 = vpop.f32.mrf.mxu0
    %v6933 = vadd.f32 %v6920, %v6932
    %v6934 = vpop.f32.mrf.mxu0
    %6935 = vdwg.mxu0
    %6936 = vmatpush.bf16.msra.mxu0 %v5759
    %6937 = vmatpush.bf16.msra.mxu0 %v5751
    %6938 = vmatpush.bf16.msra.mxu0 %v5743
    %6939 = vmatpush.bf16.msra.mxu0 %v5735
    %6940 = vmatpush.bf16.msra.mxu0 %v5727
    %6941 = vmatpush.bf16.msra.mxu0 %v5719
    %6942 = vmatpush.bf16.msra.mxu0 %v5711
    %6943 = vmatpush.bf16.msra.mxu0 %v5703
    %6944 = vmatmul.bf16.gmra.mxu0 %v3246
    %v6945 = vpop.f32.mrf.mxu0
    %v6946 = vadd.f32 %v6933, %v6945
    %v6947 = vpop.f32.mrf.mxu0
    %6948 = vdwg.mxu0
    %6949 = vmatpush.bf16.msra.mxu0 %v5823
    %6950 = vmatpush.bf16.msra.mxu0 %v5815
    %6951 = vmatpush.bf16.msra.mxu0 %v5807
    %6952 = vmatpush.bf16.msra.mxu0 %v5799
    %6953 = vmatpush.bf16.msra.mxu0 %v5791
    %6954 = vmatpush.bf16.msra.mxu0 %v5783
    %6955 = vmatpush.bf16.msra.mxu0 %v5775
    %6956 = vmatpush.bf16.msra.mxu0 %v5767
    %6957 = vmatmul.bf16.gmra.mxu0 %v3247
    %v6958 = vpop.f32.mrf.mxu0
    %v6959 = vadd.f32 %v6946, %v6958
    %v6960 = vpop.f32.mrf.mxu0
    %6961 = vdwg.mxu0
    %6962 = vmatpush.bf16.msra.mxu0 %v5376
    %6963 = vmatpush.bf16.msra.mxu0 %v5368
    %6964 = vmatpush.bf16.msra.mxu0 %v5360
    %6965 = vmatpush.bf16.msra.mxu0 %v5352
    %6966 = vmatpush.bf16.msra.mxu0 %v5344
    %6967 = vmatpush.bf16.msra.mxu0 %v5336
    %6968 = vmatpush.bf16.msra.mxu0 %v5328
    %6969 = vmatpush.bf16.msra.mxu0 %v5320
    %6970 = vmatmul.bf16.gmra.mxu0 %v3240
    %v6971 = vpop.f32.mrf.mxu0
    %v6972 = vadd.f32 %v3768, %v6971
    %v6973 = vpop.f32.mrf.mxu0
    %6974 = vdwg.mxu0
    %6975 = vmatpush.bf16.msra.mxu0 %v5440
    %6976 = vmatpush.bf16.msra.mxu0 %v5432
    %6977 = vmatpush.bf16.msra.mxu0 %v5424
    %6978 = vmatpush.bf16.msra.mxu0 %v5416
    %6979 = vmatpush.bf16.msra.mxu0 %v5408
    %6980 = vmatpush.bf16.msra.mxu0 %v5400
    %6981 = vmatpush.bf16.msra.mxu0 %v5392
    %6982 = vmatpush.bf16.msra.mxu0 %v5384
    %6983 = vmatmul.bf16.gmra.mxu0 %v3241
    %v6984 = vpop.f32.mrf.mxu0
    %v6985 = vadd.f32 %v6972, %v6984
    %v6986 = vpop.f32.mrf.mxu0
    %6987 = vdwg.mxu0
    %6988 = vmatpush.bf16.msra.mxu0 %v5504
    %6989 = vmatpush.bf16.msra.mxu0 %v5496
    %6990 = vmatpush.bf16.msra.mxu0 %v5488
    %6991 = vmatpush.bf16.msra.mxu0 %v5480
    %6992 = vmatpush.bf16.msra.mxu0 %v5472
    %6993 = vmatpush.bf16.msra.mxu0 %v5464
    %6994 = vmatpush.bf16.msra.mxu0 %v5456
    %6995 = vmatpush.bf16.msra.mxu0 %v5448
    %6996 = vmatmul.bf16.gmra.mxu0 %v3242
    %v6997 = vpop.f32.mrf.mxu0
    %v6998 = vadd.f32 %v6985, %v6997
    %v6999 = vpop.f32.mrf.mxu0
    %7000 = vdwg.mxu0
    %7001 = vmatpush.bf16.msra.mxu0 %v5568
    %7002 = vmatpush.bf16.msra.mxu0 %v5560
    %7003 = vmatpush.bf16.msra.mxu0 %v5552
    %7004 = vmatpush.bf16.msra.mxu0 %v5544
    %7005 = vmatpush.bf16.msra.mxu0 %v5536
    %7006 = vmatpush.bf16.msra.mxu0 %v5528
    %7007 = vmatpush.bf16.msra.mxu0 %v5520
    %7008 = vmatpush.bf16.msra.mxu0 %v5512
    %7009 = vmatmul.bf16.gmra.mxu0 %v3243
    %v7010 = vpop.f32.mrf.mxu0
    %v7011 = vadd.f32 %v6998, %v7010
    %v7012 = vpop.f32.mrf.mxu0
    %7013 = vdwg.mxu0
    %7014 = vmatpush.bf16.msra.mxu0 %v5632
    %7015 = vmatpush.bf16.msra.mxu0 %v5624
    %7016 = vmatpush.bf16.msra.mxu0 %v5616
    %7017 = vmatpush.bf16.msra.mxu0 %v5608
    %7018 = vmatpush.bf16.msra.mxu0 %v5600
    %7019 = vmatpush.bf16.msra.mxu0 %v5592
    %7020 = vmatpush.bf16.msra.mxu0 %v5584
    %7021 = vmatpush.bf16.msra.mxu0 %v5576
    %7022 = vmatmul.bf16.gmra.mxu0 %v3244
    %v7023 = vpop.f32.mrf.mxu0
    %v7024 = vadd.f32 %v7011, %v7023
    %v7025 = vpop.f32.mrf.mxu0
    %7026 = vdwg.mxu0
    %7027 = vmatpush.bf16.msra.mxu0 %v5696
    %7028 = vmatpush.bf16.msra.mxu0 %v5688
    %7029 = vmatpush.bf16.msra.mxu0 %v5680
    %7030 = vmatpush.bf16.msra.mxu0 %v5672
    %7031 = vmatpush.bf16.msra.mxu0 %v5664
    %7032 = vmatpush.bf16.msra.mxu0 %v5656
    %7033 = vmatpush.bf16.msra.mxu0 %v5648
    %7034 = vmatpush.bf16.msra.mxu0 %v5640
    %7035 = vmatmul.bf16.gmra.mxu0 %v3245
    %v7036 = vpop.f32.mrf.mxu0
    %v7037 = vadd.f32 %v7024, %v7036
    %v7038 = vpop.f32.mrf.mxu0
    %7039 = vdwg.mxu0
    %7040 = vmatpush.bf16.msra.mxu0 %v5760
    %7041 = vmatpush.bf16.msra.mxu0 %v5752
    %7042 = vmatpush.bf16.msra.mxu0 %v5744
    %7043 = vmatpush.bf16.msra.mxu0 %v5736
    %7044 = vmatpush.bf16.msra.mxu0 %v5728
    %7045 = vmatpush.bf16.msra.mxu0 %v5720
    %7046 = vmatpush.bf16.msra.mxu0 %v5712
    %7047 = vmatpush.bf16.msra.mxu0 %v5704
    %7048 = vmatmul.bf16.gmra.mxu0 %v3246
    %v7049 = vpop.f32.mrf.mxu0
    %v7050 = vadd.f32 %v7037, %v7049
    %v7051 = vpop.f32.mrf.mxu0
    %7052 = vdwg.mxu0
    %7053 = vmatpush.bf16.msra.mxu0 %v5824
    %7054 = vmatpush.bf16.msra.mxu0 %v5816
    %7055 = vmatpush.bf16.msra.mxu0 %v5808
    %7056 = vmatpush.bf16.msra.mxu0 %v5800
    %7057 = vmatpush.bf16.msra.mxu0 %v5792
    %7058 = vmatpush.bf16.msra.mxu0 %v5784
    %7059 = vmatpush.bf16.msra.mxu0 %v5776
    %7060 = vmatpush.bf16.msra.mxu0 %v5768
    %7061 = vmatmul.bf16.gmra.mxu0 %v3247
    %v7062 = vpop.f32.mrf.mxu0
    %v7063 = vadd.f32 %v7050, %v7062
    %v7064 = vpop.f32.mrf.mxu0
    %7065 = vdwg.mxu0
    %7066 = vmatpush.bf16.msra.mxu0 %v5377
    %7067 = vmatpush.bf16.msra.mxu0 %v5369
    %7068 = vmatpush.bf16.msra.mxu0 %v5361
    %7069 = vmatpush.bf16.msra.mxu0 %v5353
    %7070 = vmatpush.bf16.msra.mxu0 %v5345
    %7071 = vmatpush.bf16.msra.mxu0 %v5337
    %7072 = vmatpush.bf16.msra.mxu0 %v5329
    %7073 = vmatpush.bf16.msra.mxu0 %v5321
    %7074 = vmatmul.bf16.gmra.mxu0 %v3240
    %v7075 = vpop.f32.mrf.mxu0
    %v7076 = vadd.f32 %v3769, %v7075
    %v7077 = vpop.f32.mrf.mxu0
    %7078 = vdwg.mxu0
    %7079 = vmatpush.bf16.msra.mxu0 %v5441
    %7080 = vmatpush.bf16.msra.mxu0 %v5433
    %7081 = vmatpush.bf16.msra.mxu0 %v5425
    %7082 = vmatpush.bf16.msra.mxu0 %v5417
    %7083 = vmatpush.bf16.msra.mxu0 %v5409
    %7084 = vmatpush.bf16.msra.mxu0 %v5401
    %7085 = vmatpush.bf16.msra.mxu0 %v5393
    %7086 = vmatpush.bf16.msra.mxu0 %v5385
    %7087 = vmatmul.bf16.gmra.mxu0 %v3241
    %v7088 = vpop.f32.mrf.mxu0
    %v7089 = vadd.f32 %v7076, %v7088
    %v7090 = vpop.f32.mrf.mxu0
    %7091 = vdwg.mxu0
    %7092 = vmatpush.bf16.msra.mxu0 %v5505
    %7093 = vmatpush.bf16.msra.mxu0 %v5497
    %7094 = vmatpush.bf16.msra.mxu0 %v5489
    %7095 = vmatpush.bf16.msra.mxu0 %v5481
    %7096 = vmatpush.bf16.msra.mxu0 %v5473
    %7097 = vmatpush.bf16.msra.mxu0 %v5465
    %7098 = vmatpush.bf16.msra.mxu0 %v5457
    %7099 = vmatpush.bf16.msra.mxu0 %v5449
    %7100 = vmatmul.bf16.gmra.mxu0 %v3242
    %v7101 = vpop.f32.mrf.mxu0
    %v7102 = vadd.f32 %v7089, %v7101
    %v7103 = vpop.f32.mrf.mxu0
    %7104 = vdwg.mxu0
    %7105 = vmatpush.bf16.msra.mxu0 %v5569
    %7106 = vmatpush.bf16.msra.mxu0 %v5561
    %7107 = vmatpush.bf16.msra.mxu0 %v5553
    %7108 = vmatpush.bf16.msra.mxu0 %v5545
    %7109 = vmatpush.bf16.msra.mxu0 %v5537
    %7110 = vmatpush.bf16.msra.mxu0 %v5529
    %7111 = vmatpush.bf16.msra.mxu0 %v5521
    %7112 = vmatpush.bf16.msra.mxu0 %v5513
    %7113 = vmatmul.bf16.gmra.mxu0 %v3243
    %v7114 = vpop.f32.mrf.mxu0
    %v7115 = vadd.f32 %v7102, %v7114
    %v7116 = vpop.f32.mrf.mxu0
    %7117 = vdwg.mxu0
    %7118 = vmatpush.bf16.msra.mxu0 %v5633
    %7119 = vmatpush.bf16.msra.mxu0 %v5625
    %7120 = vmatpush.bf16.msra.mxu0 %v5617
    %7121 = vmatpush.bf16.msra.mxu0 %v5609
    %7122 = vmatpush.bf16.msra.mxu0 %v5601
    %7123 = vmatpush.bf16.msra.mxu0 %v5593
    %7124 = vmatpush.bf16.msra.mxu0 %v5585
    %7125 = vmatpush.bf16.msra.mxu0 %v5577
    %7126 = vmatmul.bf16.gmra.mxu0 %v3244
    %v7127 = vpop.f32.mrf.mxu0
    %v7128 = vadd.f32 %v7115, %v7127
    %v7129 = vpop.f32.mrf.mxu0
    %7130 = vdwg.mxu0
    %7131 = vmatpush.bf16.msra.mxu0 %v5697
    %7132 = vmatpush.bf16.msra.mxu0 %v5689
    %7133 = vmatpush.bf16.msra.mxu0 %v5681
    %7134 = vmatpush.bf16.msra.mxu0 %v5673
    %7135 = vmatpush.bf16.msra.mxu0 %v5665
    %7136 = vmatpush.bf16.msra.mxu0 %v5657
    %7137 = vmatpush.bf16.msra.mxu0 %v5649
    %7138 = vmatpush.bf16.msra.mxu0 %v5641
    %7139 = vmatmul.bf16.gmra.mxu0 %v3245
    %v7140 = vpop.f32.mrf.mxu0
    %v7141 = vadd.f32 %v7128, %v7140
    %v7142 = vpop.f32.mrf.mxu0
    %7143 = vdwg.mxu0
    %7144 = vmatpush.bf16.msra.mxu0 %v5761
    %7145 = vmatpush.bf16.msra.mxu0 %v5753
    %7146 = vmatpush.bf16.msra.mxu0 %v5745
    %7147 = vmatpush.bf16.msra.mxu0 %v5737
    %7148 = vmatpush.bf16.msra.mxu0 %v5729
    %7149 = vmatpush.bf16.msra.mxu0 %v5721
    %7150 = vmatpush.bf16.msra.mxu0 %v5713
    %7151 = vmatpush.bf16.msra.mxu0 %v5705
    %7152 = vmatmul.bf16.gmra.mxu0 %v3246
    %v7153 = vpop.f32.mrf.mxu0
    %v7154 = vadd.f32 %v7141, %v7153
    %v7155 = vpop.f32.mrf.mxu0
    %7156 = vdwg.mxu0
    %7157 = vmatpush.bf16.msra.mxu0 %v5825
    %7158 = vmatpush.bf16.msra.mxu0 %v5817
    %7159 = vmatpush.bf16.msra.mxu0 %v5809
    %7160 = vmatpush.bf16.msra.mxu0 %v5801
    %7161 = vmatpush.bf16.msra.mxu0 %v5793
    %7162 = vmatpush.bf16.msra.mxu0 %v5785
    %7163 = vmatpush.bf16.msra.mxu0 %v5777
    %7164 = vmatpush.bf16.msra.mxu0 %v5769
    %7165 = vmatmul.bf16.gmra.mxu0 %v3247
    %v7166 = vpop.f32.mrf.mxu0
    %v7167 = vadd.f32 %v7154, %v7166
    %v7168 = vpop.f32.mrf.mxu0
    %7169 = vdwg.mxu0
    %v7170 = vmax.f32 %v6439, 0.0
    %v7171 = vmax.f32 %v6543, 0.0
    %v7172 = vmax.f32 %v6647, 0.0
    %v7173 = vmax.f32 %v6751, 0.0
    %v7174 = vmax.f32 %v6855, 0.0
    %v7175 = vmax.f32 %v6959, 0.0
    %v7176 = vmax.f32 %v7063, 0.0
    %v7177 = vmax.f32 %v7167, 0.0
    %v7178 = vpack.c.bf16 %v7170, %v7170
    %v7179 = vpack.c.bf16 %v7171, %v7171
    %v7180 = vpack.c.bf16 %v7172, %v7172
    %v7181 = vpack.c.bf16 %v7173, %v7173
    %v7182 = vpack.c.bf16 %v7174, %v7174
    %v7183 = vpack.c.bf16 %v7175, %v7175
    %v7184 = vpack.c.bf16 %v7176, %v7176
    %v7185 = vpack.c.bf16 %v7177, %v7177
    %v7186 = vld [vmem:[#allocation10] sm:$0xf]
    %v7187 = vld [vmem:[#allocation10 + $0x4] sm:$0xf]
    %v7188 = vld [vmem:[#allocation10 + $0x8] sm:$0xf]
    %v7189 = vld [vmem:[#allocation10 + $0xc] sm:$0xf]
    %v7190 = vld [vmem:[#allocation10 + $0x10] sm:$0xf]
    %v7191 = vld [vmem:[#allocation10 + $0x14] sm:$0xf]
    %v7192 = vld [vmem:[#allocation10 + $0x18] sm:$0xf]
    %v7193 = vld [vmem:[#allocation10 + $0x1c] sm:$0xf]
    %v7194 = vld [vmem:[#allocation10 + $0x20] sm:$0xf]
    %v7195 = vld [vmem:[#allocation10 + $0x24] sm:$0xf]
    %v7196 = vld [vmem:[#allocation10 + $0x28] sm:$0xf]
    %v7197 = vld [vmem:[#allocation10 + $0x2c] sm:$0xf]
    %v7198 = vld [vmem:[#allocation10 + $0x30] sm:$0xf]
    %v7199 = vld [vmem:[#allocation10 + $0x34] sm:$0xf]
    %v7200 = vld [vmem:[#allocation10 + $0x38] sm:$0xf]
    %v7201 = vld [vmem:[#allocation10 + $0x3c] sm:$0xf]
    %v7202 = vld [vmem:[#allocation10 + $0x40] sm:$0xf]
    %v7203 = vld [vmem:[#allocation10 + $0x44] sm:$0xf]
    %v7204 = vld [vmem:[#allocation10 + $0x48] sm:$0xf]
    %v7205 = vld [vmem:[#allocation10 + $0x4c] sm:$0xf]
    %v7206 = vld [vmem:[#allocation10 + $0x50] sm:$0xf]
    %v7207 = vld [vmem:[#allocation10 + $0x54] sm:$0xf]
    %v7208 = vld [vmem:[#allocation10 + $0x58] sm:$0xf]
    %v7209 = vld [vmem:[#allocation10 + $0x5c] sm:$0xf]
    %v7210 = vld [vmem:[#allocation10 + $0x60] sm:$0xf]
    %v7211 = vld [vmem:[#allocation10 + $0x64] sm:$0xf]
    %v7212 = vld [vmem:[#allocation10 + $0x68] sm:$0xf]
    %v7213 = vld [vmem:[#allocation10 + $0x6c] sm:$0xf]
    %v7214 = vld [vmem:[#allocation10 + $0x70] sm:$0xf]
    %v7215 = vld [vmem:[#allocation10 + $0x74] sm:$0xf]
    %v7216 = vld [vmem:[#allocation10 + $0x78] sm:$0xf]
    %v7217 = vld [vmem:[#allocation10 + $0x7c] sm:$0xf]
    %v7218 = vld [vmem:[#allocation10 + $0x80] sm:$0xf]
    %v7219 = vld [vmem:[#allocation10 + $0x84] sm:$0xf]
    %v7220 = vld [vmem:[#allocation10 + $0x88] sm:$0xf]
    %v7221 = vld [vmem:[#allocation10 + $0x8c] sm:$0xf]
    %v7222 = vld [vmem:[#allocation10 + $0x90] sm:$0xf]
    %v7223 = vld [vmem:[#allocation10 + $0x94] sm:$0xf]
    %v7224 = vld [vmem:[#allocation10 + $0x98] sm:$0xf]
    %v7225 = vld [vmem:[#allocation10 + $0x9c] sm:$0xf]
    %v7226 = vld [vmem:[#allocation10 + $0xa0] sm:$0xf]
    %v7227 = vld [vmem:[#allocation10 + $0xa4] sm:$0xf]
    %v7228 = vld [vmem:[#allocation10 + $0xa8] sm:$0xf]
    %v7229 = vld [vmem:[#allocation10 + $0xac] sm:$0xf]
    %v7230 = vld [vmem:[#allocation10 + $0xb0] sm:$0xf]
    %v7231 = vld [vmem:[#allocation10 + $0xb4] sm:$0xf]
    %v7232 = vld [vmem:[#allocation10 + $0xb8] sm:$0xf]
    %v7233 = vld [vmem:[#allocation10 + $0xbc] sm:$0xf]
    %v7234 = vld [vmem:[#allocation10 + $0xc0] sm:$0xf]
    %v7235 = vld [vmem:[#allocation10 + $0xc4] sm:$0xf]
    %v7236 = vld [vmem:[#allocation10 + $0xc8] sm:$0xf]
    %v7237 = vld [vmem:[#allocation10 + $0xcc] sm:$0xf]
    %v7238 = vld [vmem:[#allocation10 + $0xd0] sm:$0xf]
    %v7239 = vld [vmem:[#allocation10 + $0xd4] sm:$0xf]
    %v7240 = vld [vmem:[#allocation10 + $0xd8] sm:$0xf]
    %v7241 = vld [vmem:[#allocation10 + $0xdc] sm:$0xf]
    %v7242 = vld [vmem:[#allocation10 + $0xe0] sm:$0xf]
    %v7243 = vld [vmem:[#allocation10 + $0xe4] sm:$0xf]
    %v7244 = vld [vmem:[#allocation10 + $0xe8] sm:$0xf]
    %v7245 = vld [vmem:[#allocation10 + $0xec] sm:$0xf]
    %v7246 = vld [vmem:[#allocation10 + $0xf0] sm:$0xf]
    %v7247 = vld [vmem:[#allocation10 + $0xf4] sm:$0xf]
    %v7248 = vld [vmem:[#allocation10 + $0xf8] sm:$0xf]
    %v7249 = vld [vmem:[#allocation10 + $0xfc] sm:$0xf]
    %v7250 = vld [vmem:[#allocation10 + $0x100] sm:$0xf]
    %v7251 = vld [vmem:[#allocation10 + $0x104] sm:$0xf]
    %v7252 = vld [vmem:[#allocation10 + $0x108] sm:$0xf]
    %v7253 = vld [vmem:[#allocation10 + $0x10c] sm:$0xf]
    %v7254 = vld [vmem:[#allocation10 + $0x110] sm:$0xf]
    %v7255 = vld [vmem:[#allocation10 + $0x114] sm:$0xf]
    %v7256 = vld [vmem:[#allocation10 + $0x118] sm:$0xf]
    %v7257 = vld [vmem:[#allocation10 + $0x11c] sm:$0xf]
    %v7258 = vld [vmem:[#allocation10 + $0x120] sm:$0xf]
    %v7259 = vld [vmem:[#allocation10 + $0x124] sm:$0xf]
    %v7260 = vld [vmem:[#allocation10 + $0x128] sm:$0xf]
    %v7261 = vld [vmem:[#allocation10 + $0x12c] sm:$0xf]
    %v7262 = vld [vmem:[#allocation10 + $0x130] sm:$0xf]
    %v7263 = vld [vmem:[#allocation10 + $0x134] sm:$0xf]
    %v7264 = vld [vmem:[#allocation10 + $0x138] sm:$0xf]
    %v7265 = vld [vmem:[#allocation10 + $0x13c] sm:$0xf]
    %v7266 = vld [vmem:[#allocation10 + $0x140] sm:$0xf]
    %v7267 = vld [vmem:[#allocation10 + $0x144] sm:$0xf]
    %v7268 = vld [vmem:[#allocation10 + $0x148] sm:$0xf]
    %v7269 = vld [vmem:[#allocation10 + $0x14c] sm:$0xf]
    %v7270 = vld [vmem:[#allocation10 + $0x150] sm:$0xf]
    %v7271 = vld [vmem:[#allocation10 + $0x154] sm:$0xf]
    %v7272 = vld [vmem:[#allocation10 + $0x158] sm:$0xf]
    %v7273 = vld [vmem:[#allocation10 + $0x15c] sm:$0xf]
    %v7274 = vld [vmem:[#allocation10 + $0x160] sm:$0xf]
    %v7275 = vld [vmem:[#allocation10 + $0x164] sm:$0xf]
    %v7276 = vld [vmem:[#allocation10 + $0x168] sm:$0xf]
    %v7277 = vld [vmem:[#allocation10 + $0x16c] sm:$0xf]
    %v7278 = vld [vmem:[#allocation10 + $0x170] sm:$0xf]
    %v7279 = vld [vmem:[#allocation10 + $0x174] sm:$0xf]
    %v7280 = vld [vmem:[#allocation10 + $0x178] sm:$0xf]
    %v7281 = vld [vmem:[#allocation10 + $0x17c] sm:$0xf]
    %v7282 = vld [vmem:[#allocation10 + $0x180] sm:$0xf]
    %v7283 = vld [vmem:[#allocation10 + $0x184] sm:$0xf]
    %v7284 = vld [vmem:[#allocation10 + $0x188] sm:$0xf]
    %v7285 = vld [vmem:[#allocation10 + $0x18c] sm:$0xf]
    %v7286 = vld [vmem:[#allocation10 + $0x190] sm:$0xf]
    %v7287 = vld [vmem:[#allocation10 + $0x194] sm:$0xf]
    %v7288 = vld [vmem:[#allocation10 + $0x198] sm:$0xf]
    %v7289 = vld [vmem:[#allocation10 + $0x19c] sm:$0xf]
    %v7290 = vld [vmem:[#allocation10 + $0x1a0] sm:$0xf]
    %v7291 = vld [vmem:[#allocation10 + $0x1a4] sm:$0xf]
    %v7292 = vld [vmem:[#allocation10 + $0x1a8] sm:$0xf]
    %v7293 = vld [vmem:[#allocation10 + $0x1ac] sm:$0xf]
    %v7294 = vld [vmem:[#allocation10 + $0x1b0] sm:$0xf]
    %v7295 = vld [vmem:[#allocation10 + $0x1b4] sm:$0xf]
    %v7296 = vld [vmem:[#allocation10 + $0x1b8] sm:$0xf]
    %v7297 = vld [vmem:[#allocation10 + $0x1bc] sm:$0xf]
    %v7298 = vld [vmem:[#allocation10 + $0x1c0] sm:$0xf]
    %v7299 = vld [vmem:[#allocation10 + $0x1c4] sm:$0xf]
    %v7300 = vld [vmem:[#allocation10 + $0x1c8] sm:$0xf]
    %v7301 = vld [vmem:[#allocation10 + $0x1cc] sm:$0xf]
    %v7302 = vld [vmem:[#allocation10 + $0x1d0] sm:$0xf]
    %v7303 = vld [vmem:[#allocation10 + $0x1d4] sm:$0xf]
    %v7304 = vld [vmem:[#allocation10 + $0x1d8] sm:$0xf]
    %v7305 = vld [vmem:[#allocation10 + $0x1dc] sm:$0xf]
    %v7306 = vld [vmem:[#allocation10 + $0x1e0] sm:$0xf]
    %v7307 = vld [vmem:[#allocation10 + $0x1e4] sm:$0xf]
    %v7308 = vld [vmem:[#allocation10 + $0x1e8] sm:$0xf]
    %v7309 = vld [vmem:[#allocation10 + $0x1ec] sm:$0xf]
    %v7310 = vld [vmem:[#allocation10 + $0x1f0] sm:$0xf]
    %v7311 = vld [vmem:[#allocation10 + $0x1f4] sm:$0xf]
    %v7312 = vld [vmem:[#allocation10 + $0x1f8] sm:$0xf]
    %v7313 = vld [vmem:[#allocation10 + $0x1fc] sm:$0xf]
    %v7314 = vld [vmem:[#allocation11] sm:$0x1]
    %v7316 = vperm.slane %v7314, 0
    %v7446 = vunpack.c.l.b16 %v7186
    %v7447 = vunpack.c.l.b16 %v7187
    %v7448 = vunpack.c.l.b16 %v7188
    %v7449 = vunpack.c.l.b16 %v7189
    %v7450 = vunpack.c.l.b16 %v7190
    %v7451 = vunpack.c.l.b16 %v7191
    %v7452 = vunpack.c.l.b16 %v7192
    %v7453 = vunpack.c.l.b16 %v7193
    %v7454 = vunpack.c.l.b16 %v7194
    %v7455 = vunpack.c.l.b16 %v7195
    %v7456 = vunpack.c.l.b16 %v7196
    %v7457 = vunpack.c.l.b16 %v7197
    %v7458 = vunpack.c.l.b16 %v7198
    %v7459 = vunpack.c.l.b16 %v7199
    %v7460 = vunpack.c.l.b16 %v7200
    %v7461 = vunpack.c.l.b16 %v7201
    %v7462 = vunpack.c.l.b16 %v7202
    %v7463 = vunpack.c.l.b16 %v7203
    %v7464 = vunpack.c.l.b16 %v7204
    %v7465 = vunpack.c.l.b16 %v7205
    %v7466 = vunpack.c.l.b16 %v7206
    %v7467 = vunpack.c.l.b16 %v7207
    %v7468 = vunpack.c.l.b16 %v7208
    %v7469 = vunpack.c.l.b16 %v7209
    %v7470 = vunpack.c.l.b16 %v7210
    %v7471 = vunpack.c.l.b16 %v7211
    %v7472 = vunpack.c.l.b16 %v7212
    %v7473 = vunpack.c.l.b16 %v7213
    %v7474 = vunpack.c.l.b16 %v7214
    %v7475 = vunpack.c.l.b16 %v7215
    %v7476 = vunpack.c.l.b16 %v7216
    %v7477 = vunpack.c.l.b16 %v7217
    %v7478 = vunpack.c.l.b16 %v7218
    %v7479 = vunpack.c.l.b16 %v7219
    %v7480 = vunpack.c.l.b16 %v7220
    %v7481 = vunpack.c.l.b16 %v7221
    %v7482 = vunpack.c.l.b16 %v7222
    %v7483 = vunpack.c.l.b16 %v7223
    %v7484 = vunpack.c.l.b16 %v7224
    %v7485 = vunpack.c.l.b16 %v7225
    %v7486 = vunpack.c.l.b16 %v7226
    %v7487 = vunpack.c.l.b16 %v7227
    %v7488 = vunpack.c.l.b16 %v7228
    %v7489 = vunpack.c.l.b16 %v7229
    %v7490 = vunpack.c.l.b16 %v7230
    %v7491 = vunpack.c.l.b16 %v7231
    %v7492 = vunpack.c.l.b16 %v7232
    %v7493 = vunpack.c.l.b16 %v7233
    %v7494 = vunpack.c.l.b16 %v7234
    %v7495 = vunpack.c.l.b16 %v7235
    %v7496 = vunpack.c.l.b16 %v7236
    %v7497 = vunpack.c.l.b16 %v7237
    %v7498 = vunpack.c.l.b16 %v7238
    %v7499 = vunpack.c.l.b16 %v7239
    %v7500 = vunpack.c.l.b16 %v7240
    %v7501 = vunpack.c.l.b16 %v7241
    %v7502 = vunpack.c.l.b16 %v7242
    %v7503 = vunpack.c.l.b16 %v7243
    %v7504 = vunpack.c.l.b16 %v7244
    %v7505 = vunpack.c.l.b16 %v7245
    %v7506 = vunpack.c.l.b16 %v7246
    %v7507 = vunpack.c.l.b16 %v7247
    %v7508 = vunpack.c.l.b16 %v7248
    %v7509 = vunpack.c.l.b16 %v7249
    %v7510 = vunpack.c.l.b16 %v7250
    %v7511 = vunpack.c.l.b16 %v7251
    %v7512 = vunpack.c.l.b16 %v7252
    %v7513 = vunpack.c.l.b16 %v7253
    %v7514 = vunpack.c.l.b16 %v7254
    %v7515 = vunpack.c.l.b16 %v7255
    %v7516 = vunpack.c.l.b16 %v7256
    %v7517 = vunpack.c.l.b16 %v7257
    %v7518 = vunpack.c.l.b16 %v7258
    %v7519 = vunpack.c.l.b16 %v7259
    %v7520 = vunpack.c.l.b16 %v7260
    %v7521 = vunpack.c.l.b16 %v7261
    %v7522 = vunpack.c.l.b16 %v7262
    %v7523 = vunpack.c.l.b16 %v7263
    %v7524 = vunpack.c.l.b16 %v7264
    %v7525 = vunpack.c.l.b16 %v7265
    %v7526 = vunpack.c.l.b16 %v7266
    %v7527 = vunpack.c.l.b16 %v7267
    %v7528 = vunpack.c.l.b16 %v7268
    %v7529 = vunpack.c.l.b16 %v7269
    %v7530 = vunpack.c.l.b16 %v7270
    %v7531 = vunpack.c.l.b16 %v7271
    %v7532 = vunpack.c.l.b16 %v7272
    %v7533 = vunpack.c.l.b16 %v7273
    %v7534 = vunpack.c.l.b16 %v7274
    %v7535 = vunpack.c.l.b16 %v7275
    %v7536 = vunpack.c.l.b16 %v7276
    %v7537 = vunpack.c.l.b16 %v7277
    %v7538 = vunpack.c.l.b16 %v7278
    %v7539 = vunpack.c.l.b16 %v7279
    %v7540 = vunpack.c.l.b16 %v7280
    %v7541 = vunpack.c.l.b16 %v7281
    %v7542 = vunpack.c.l.b16 %v7282
    %v7543 = vunpack.c.l.b16 %v7283
    %v7544 = vunpack.c.l.b16 %v7284
    %v7545 = vunpack.c.l.b16 %v7285
    %v7546 = vunpack.c.l.b16 %v7286
    %v7547 = vunpack.c.l.b16 %v7287
    %v7548 = vunpack.c.l.b16 %v7288
    %v7549 = vunpack.c.l.b16 %v7289
    %v7550 = vunpack.c.l.b16 %v7290
    %v7551 = vunpack.c.l.b16 %v7291
    %v7552 = vunpack.c.l.b16 %v7292
    %v7553 = vunpack.c.l.b16 %v7293
    %v7554 = vunpack.c.l.b16 %v7294
    %v7555 = vunpack.c.l.b16 %v7295
    %v7556 = vunpack.c.l.b16 %v7296
    %v7557 = vunpack.c.l.b16 %v7297
    %v7558 = vunpack.c.l.b16 %v7298
    %v7559 = vunpack.c.l.b16 %v7299
    %v7560 = vunpack.c.l.b16 %v7300
    %v7561 = vunpack.c.l.b16 %v7301
    %v7562 = vunpack.c.l.b16 %v7302
    %v7563 = vunpack.c.l.b16 %v7303
    %v7564 = vunpack.c.l.b16 %v7304
    %v7565 = vunpack.c.l.b16 %v7305
    %v7566 = vunpack.c.l.b16 %v7306
    %v7567 = vunpack.c.l.b16 %v7307
    %v7568 = vunpack.c.l.b16 %v7308
    %v7569 = vunpack.c.l.b16 %v7309
    %v7570 = vunpack.c.l.b16 %v7310
    %v7571 = vunpack.c.l.b16 %v7311
    %v7572 = vunpack.c.l.b16 %v7312
    %v7573 = vunpack.c.l.b16 %v7313
    %v7574 = vpack.c.b16 %v7447, %v7446
    %v7575 = vpack.c.b16 %v7449, %v7448
    %v7576 = vpack.c.b16 %v7451, %v7450
    %v7577 = vpack.c.b16 %v7453, %v7452
    %v7578 = vpack.c.b16 %v7455, %v7454
    %v7579 = vpack.c.b16 %v7457, %v7456
    %v7580 = vpack.c.b16 %v7459, %v7458
    %v7581 = vpack.c.b16 %v7461, %v7460
    %v7582 = vpack.c.b16 %v7463, %v7462
    %v7583 = vpack.c.b16 %v7465, %v7464
    %v7584 = vpack.c.b16 %v7467, %v7466
    %v7585 = vpack.c.b16 %v7469, %v7468
    %v7586 = vpack.c.b16 %v7471, %v7470
    %v7587 = vpack.c.b16 %v7473, %v7472
    %v7588 = vpack.c.b16 %v7475, %v7474
    %v7589 = vpack.c.b16 %v7477, %v7476
    %v7590 = vpack.c.b16 %v7479, %v7478
    %v7591 = vpack.c.b16 %v7481, %v7480
    %v7592 = vpack.c.b16 %v7483, %v7482
    %v7593 = vpack.c.b16 %v7485, %v7484
    %v7594 = vpack.c.b16 %v7487, %v7486
    %v7595 = vpack.c.b16 %v7489, %v7488
    %v7596 = vpack.c.b16 %v7491, %v7490
    %v7597 = vpack.c.b16 %v7493, %v7492
    %v7598 = vpack.c.b16 %v7495, %v7494
    %v7599 = vpack.c.b16 %v7497, %v7496
    %v7600 = vpack.c.b16 %v7499, %v7498
    %v7601 = vpack.c.b16 %v7501, %v7500
    %v7602 = vpack.c.b16 %v7503, %v7502
    %v7603 = vpack.c.b16 %v7505, %v7504
    %v7604 = vpack.c.b16 %v7507, %v7506
    %v7605 = vpack.c.b16 %v7509, %v7508
    %v7606 = vpack.c.b16 %v7511, %v7510
    %v7607 = vpack.c.b16 %v7513, %v7512
    %v7608 = vpack.c.b16 %v7515, %v7514
    %v7609 = vpack.c.b16 %v7517, %v7516
    %v7610 = vpack.c.b16 %v7519, %v7518
    %v7611 = vpack.c.b16 %v7521, %v7520
    %v7612 = vpack.c.b16 %v7523, %v7522
    %v7613 = vpack.c.b16 %v7525, %v7524
    %v7614 = vpack.c.b16 %v7527, %v7526
    %v7615 = vpack.c.b16 %v7529, %v7528
    %v7616 = vpack.c.b16 %v7531, %v7530
    %v7617 = vpack.c.b16 %v7533, %v7532
    %v7618 = vpack.c.b16 %v7535, %v7534
    %v7619 = vpack.c.b16 %v7537, %v7536
    %v7620 = vpack.c.b16 %v7539, %v7538
    %v7621 = vpack.c.b16 %v7541, %v7540
    %v7622 = vpack.c.b16 %v7543, %v7542
    %v7623 = vpack.c.b16 %v7545, %v7544
    %v7624 = vpack.c.b16 %v7547, %v7546
    %v7625 = vpack.c.b16 %v7549, %v7548
    %v7626 = vpack.c.b16 %v7551, %v7550
    %v7627 = vpack.c.b16 %v7553, %v7552
    %v7628 = vpack.c.b16 %v7555, %v7554
    %v7629 = vpack.c.b16 %v7557, %v7556
    %v7630 = vpack.c.b16 %v7559, %v7558
    %v7631 = vpack.c.b16 %v7561, %v7560
    %v7632 = vpack.c.b16 %v7563, %v7562
    %v7633 = vpack.c.b16 %v7565, %v7564
    %v7634 = vpack.c.b16 %v7567, %v7566
    %v7635 = vpack.c.b16 %v7569, %v7568
    %v7636 = vpack.c.b16 %v7571, %v7570
    %v7637 = vpack.c.b16 %v7573, %v7572
    %7702 = vmatpush.bf16.msra.mxu0 %v7581
    %7703 = vmatpush.bf16.msra.mxu0 %v7580
    %7704 = vmatpush.bf16.msra.mxu0 %v7579
    %7705 = vmatpush.bf16.msra.mxu0 %v7578
    %7706 = vmatpush.bf16.msra.mxu0 %v7577
    %7707 = vmatpush.bf16.msra.mxu0 %v7576
    %7708 = vmatpush.bf16.msra.mxu0 %v7575
    %7709 = vmatpush.bf16.msra.mxu0 %v7574
    %7710 = vmatmul.bf16.gmra.mxu0 %v7178
    %v7711 = vpop.f32.mrf.mxu0
    %v7712 = vadd.f32 %v7316, %v7711
    %v7713 = vpop.f32.mrf.mxu0
    %7714 = vdwg.mxu0
    %7715 = vmatpush.bf16.msra.mxu0 %v7589
    %7716 = vmatpush.bf16.msra.mxu0 %v7588
    %7717 = vmatpush.bf16.msra.mxu0 %v7587
    %7718 = vmatpush.bf16.msra.mxu0 %v7586
    %7719 = vmatpush.bf16.msra.mxu0 %v7585
    %7720 = vmatpush.bf16.msra.mxu0 %v7584
    %7721 = vmatpush.bf16.msra.mxu0 %v7583
    %7722 = vmatpush.bf16.msra.mxu0 %v7582
    %7723 = vmatmul.bf16.gmra.mxu0 %v7179
    %v7724 = vpop.f32.mrf.mxu0
    %v7725 = vadd.f32 %v7712, %v7724
    %v7726 = vpop.f32.mrf.mxu0
    %7727 = vdwg.mxu0
    %7728 = vmatpush.bf16.msra.mxu0 %v7597
    %7729 = vmatpush.bf16.msra.mxu0 %v7596
    %7730 = vmatpush.bf16.msra.mxu0 %v7595
    %7731 = vmatpush.bf16.msra.mxu0 %v7594
    %7732 = vmatpush.bf16.msra.mxu0 %v7593
    %7733 = vmatpush.bf16.msra.mxu0 %v7592
    %7734 = vmatpush.bf16.msra.mxu0 %v7591
    %7735 = vmatpush.bf16.msra.mxu0 %v7590
    %7736 = vmatmul.bf16.gmra.mxu0 %v7180
    %v7737 = vpop.f32.mrf.mxu0
    %v7738 = vadd.f32 %v7725, %v7737
    %v7739 = vpop.f32.mrf.mxu0
    %7740 = vdwg.mxu0
    %7741 = vmatpush.bf16.msra.mxu0 %v7605
    %7742 = vmatpush.bf16.msra.mxu0 %v7604
    %7743 = vmatpush.bf16.msra.mxu0 %v7603
    %7744 = vmatpush.bf16.msra.mxu0 %v7602
    %7745 = vmatpush.bf16.msra.mxu0 %v7601
    %7746 = vmatpush.bf16.msra.mxu0 %v7600
    %7747 = vmatpush.bf16.msra.mxu0 %v7599
    %7748 = vmatpush.bf16.msra.mxu0 %v7598
    %7749 = vmatmul.bf16.gmra.mxu0 %v7181
    %v7750 = vpop.f32.mrf.mxu0
    %v7751 = vadd.f32 %v7738, %v7750
    %v7752 = vpop.f32.mrf.mxu0
    %7753 = vdwg.mxu0
    %7754 = vmatpush.bf16.msra.mxu0 %v7613
    %7755 = vmatpush.bf16.msra.mxu0 %v7612
    %7756 = vmatpush.bf16.msra.mxu0 %v7611
    %7757 = vmatpush.bf16.msra.mxu0 %v7610
    %7758 = vmatpush.bf16.msra.mxu0 %v7609
    %7759 = vmatpush.bf16.msra.mxu0 %v7608
    %7760 = vmatpush.bf16.msra.mxu0 %v7607
    %7761 = vmatpush.bf16.msra.mxu0 %v7606
    %7762 = vmatmul.bf16.gmra.mxu0 %v7182
    %v7763 = vpop.f32.mrf.mxu0
    %v7764 = vadd.f32 %v7751, %v7763
    %v7765 = vpop.f32.mrf.mxu0
    %7766 = vdwg.mxu0
    %7767 = vmatpush.bf16.msra.mxu0 %v7621
    %7768 = vmatpush.bf16.msra.mxu0 %v7620
    %7769 = vmatpush.bf16.msra.mxu0 %v7619
    %7770 = vmatpush.bf16.msra.mxu0 %v7618
    %7771 = vmatpush.bf16.msra.mxu0 %v7617
    %7772 = vmatpush.bf16.msra.mxu0 %v7616
    %7773 = vmatpush.bf16.msra.mxu0 %v7615
    %7774 = vmatpush.bf16.msra.mxu0 %v7614
    %7775 = vmatmul.bf16.gmra.mxu0 %v7183
    %v7776 = vpop.f32.mrf.mxu0
    %v7777 = vadd.f32 %v7764, %v7776
    %v7778 = vpop.f32.mrf.mxu0
    %7779 = vdwg.mxu0
    %7780 = vmatpush.bf16.msra.mxu0 %v7629
    %7781 = vmatpush.bf16.msra.mxu0 %v7628
    %7782 = vmatpush.bf16.msra.mxu0 %v7627
    %7783 = vmatpush.bf16.msra.mxu0 %v7626
    %7784 = vmatpush.bf16.msra.mxu0 %v7625
    %7785 = vmatpush.bf16.msra.mxu0 %v7624
    %7786 = vmatpush.bf16.msra.mxu0 %v7623
    %7787 = vmatpush.bf16.msra.mxu0 %v7622
    %7788 = vmatmul.bf16.gmra.mxu0 %v7184
    %v7789 = vpop.f32.mrf.mxu0
    %v7790 = vadd.f32 %v7777, %v7789
    %v7791 = vpop.f32.mrf.mxu0
    %7792 = vdwg.mxu0
    %7793 = vmatpush.bf16.msra.mxu0 %v7637
    %7794 = vmatpush.bf16.msra.mxu0 %v7636
    %7795 = vmatpush.bf16.msra.mxu0 %v7635
    %7796 = vmatpush.bf16.msra.mxu0 %v7634
    %7797 = vmatpush.bf16.msra.mxu0 %v7633
    %7798 = vmatpush.bf16.msra.mxu0 %v7632
    %7799 = vmatpush.bf16.msra.mxu0 %v7631
    %7800 = vmatpush.bf16.msra.mxu0 %v7630
    %7801 = vmatmul.bf16.gmra.mxu0 %v7185
    %v7802 = vpop.f32.mrf.mxu0
    %v7803 = vadd.f32 %v7790, %v7802
    %v7804 = vpop.f32.mrf.mxu0
    %7805 = vdwg.mxu0
    %7806 = vst [vmem:[#allocation13] sm:$0xff] %v7803
    // Predicated region
    $region54: #{simple_fcn_forward.1} parent=1 // pred_check
      _
    $region55: #{simple_fcn_forward.1} parent=1 // pred_check_branch
      %7808 = sbr.rel (0) target = $region57
    $region56: #{simple_fcn_forward.1} parent=1 // pred_region
      %7810 = vsyncadd [#allocation4], 0
      %s7812 = sshll.u32 [#allocation13], 4
      %s7813 = int_to_ptr.vmem [resolvable:$true] %s7812
      %s7814 = sshll.u32 %s7, 4
      %s7815 = int_to_ptr.hbm [resolvable:$true] %s7814
      %7817 = dma.vmem_to_hbm [thread:$0]  %s7813, 128, %s7815, [#allocation4]
    $region57: #{simple_fcn_forward.1} parent=1 // pred_fallthru
      _
    // Predicated region
    $region58: #{simple_fcn_forward.1} parent=1 // pred_check
      _
    $region59: #{simple_fcn_forward.1} parent=1 // pred_check_branch
      %7819 = sbr.rel (0) target = $region61
    $region60: #{simple_fcn_forward.1} parent=1 // pred_region
      %7821 = dma.done [#allocation4], 128
    $region61: #{simple_fcn_forward.1} parent=1 // pred_fallthru
      _
    %7822 = vsyncpa [#allocation3], 1
    %7823 = vsyncpa [#allocation6], 1
    %7824 = vsyncpa [#allocation9], 1
    %7825 = vsyncpa [#allocation12], 1
    %7826 = vsyncpa [#allocation4], 1

</llo_original>
